<compile_context>
chip_gen: v7x
topology: tpu7x:2x2x1
jax: 0.10.0
libtpu: 0.0.40
codegen_flags: <defaults>
</compile_context>

<pallas_src>
import functools
from typing import NamedTuple

import numpy as np

import jax
import jax.numpy as jnp
from jax import lax
from jax.experimental import pallas as pl
from jax.experimental.pallas import tpu as pltpu

BN_MOMENTUM = 0.02   # irrelevant for eval-mode forward, kept for fidelity
BN_EPS = 1e-5

# bfloat16 operands / f32 accumulation (per perf review).  Flip back to
# jnp.float32 to recover the 1e-3 match vs the f32 XLA reference.
COMPUTE_DTYPE = jnp.bfloat16


def _round_up(x, m):
    return ((x + m - 1) // m) * m


# ----------------------------------------------------------------------------
# Pallas kernel: the entire PolicyNet for one image of the batch grid axis.
# Activations never leave VMEM/vregs; only dense MXU matmuls + VPU add/max.
# ----------------------------------------------------------------------------
def _policynet_kernel(n_layers, compute_dtype, x_ref, *refs):
    out_ref = refs[-1]
    lrefs = refs[:-1]
    x = x_ref[0]                                       # [Hs, in_lane_pad] bf16
    for l in range(n_layers):
        g_ref = lrefs[3 * l]                           # [k*Ho, Hs]
        wg_ref = lrefs[3 * l + 1]                      # [k, in_pad, out_pad]
        b_ref = lrefs[3 * l + 2]                       # [1, out_pad] f32
        k = wg_ref.shape[0]
        ho = g_ref.shape[0] // k
        # One stacked row-select matmul (stride / zero-pad / nearest-upsample
        # in H for all k kernel rows at once): [k*Ho, Hs] @ [Hs, C] -> f32.
        rstack = jnp.dot(g_ref[...], x, preferred_element_type=jnp.float32)
        rstack = rstack.astype(compute_dtype)
        acc = None
        for ky in range(k):
            rows = rstack[ky * ho:(ky + 1) * ho, :]    # static sublane slice
            # Conv weights for kernel-row ky scattered along lanes (stride /
            # zero-pad / upsample in W + folded eval-mode BN scale).
            term = jnp.dot(rows, wg_ref[ky], preferred_element_type=jnp.float32)
            acc = term if acc is None else acc + term
        acc = acc + b_ref[...]                         # folded BN shift / bias
        if l < n_layers - 1:
            x = jnp.maximum(acc, 0.0).astype(compute_dtype)   # ReLU
        else:
            out_ref[0] = acc.astype(out_ref.dtype)


class PolicyPlanMeta(NamedTuple):
    n_layers: int
    h_out: int
    w_out: int
    c_out: int
    in_lane_pad: int      # padded lane width of the network input
    out_lane_pad: int     # padded lane width of the network output
    flops: int
    bytes_accessed: int
    vmem_limit: int


def _const_index_map(ndim):
    zeros = (0,) * ndim

    def imap(b):
        return zeros
    return imap


def policynet_forward(x_nchw, mats, meta: PolicyPlanMeta):
    """x_nchw: [N, 3, H, W] float32 -> [N, 1, Ho, Wo] float32."""
    # NCHW -> NHWC -> [N, H, W*C] with lanes zero-padded to a multiple of 128;
    # this is the only run-time wrapper work (pure layout).
    x_nhwc = jnp.transpose(x_nchw, (0, 2, 3, 1))
    nb, h, w, c = x_nhwc.shape
    x3d = x_nhwc.reshape(nb, h, w * c)
    lane_pad = meta.in_lane_pad - w * c
    if lane_pad > 0:
        x3d = jnp.pad(x3d, ((0, 0), (0, 0), (0, lane_pad)))
    x3d = x3d.astype(COMPUTE_DTYPE)

    in_specs = [pl.BlockSpec((1, h, meta.in_lane_pad), lambda b: (b, 0, 0))]
    for m in mats:
        in_specs.append(pl.BlockSpec(tuple(int(s) for s in m.shape),
                                     _const_index_map(m.ndim)))
    out_specs = pl.BlockSpec((1, meta.h_out, meta.out_lane_pad),
                             lambda b: (b, 0, 0))

    out3d = pl.pallas_call(
        functools.partial(_policynet_kernel, meta.n_layers, COMPUTE_DTYPE),
        out_shape=jax.ShapeDtypeStruct((nb, meta.h_out, meta.out_lane_pad),
                                       jnp.float32),
        grid=(nb,),
        in_specs=in_specs,
        out_specs=out_specs,
        compiler_params=pltpu.CompilerParams(
            dimension_semantics=("parallel",),
            vmem_limit_bytes=meta.vmem_limit),
        cost_estimate=pl.CostEstimate(
            flops=meta.flops, transcendentals=0,
            bytes_accessed=meta.bytes_accessed),
    )(x3d, *mats)

    out = out3d[:, :, : meta.w_out * meta.c_out]
    out = out.reshape(nb, meta.h_out, meta.w_out, meta.c_out)
    return jnp.transpose(out, (0, 3, 1, 2)).astype(jnp.float32)   # NHWC->NCHW


# ----------------------------------------------------------------------------
# Plan building: fold interpolate + im2col + stride/pad + BN into static mats.
# ----------------------------------------------------------------------------
def _build_layer_mats(hs, ws, hc, wc, cin, cout, k, s, pd,
                      hmap, wmap, w_oihw, gamma, beta, in_lane_pad):
    """Structured matrices for one conv layer (per-image, lane-padded).

    hs/ws: stored input spatial dims (activation is [hs, in_lane_pad]);
    hc/wc: spatial dims the conv "sees" (nearest-upsampled image for layer 1);
    hmap/wmap: conv coordinate -> stored coordinate (nearest-neighbour map).
    """
    ho = (hc + 2 * pd - k) // s + 1
    wo = (wc + 2 * pd - k) // s + 1
    out_lane_pad = _round_up(wo * cout, 128)
    assert ws * cin <= in_lane_pad

    wnp = np.asarray(w_oihw, np.float32)          # [cout, cin, k, k]
    gnp = np.asarray(gamma, np.float32)           # [cout] folded BN scale
    bnp = np.asarray(beta, np.float32)            # [cout] folded BN shift/bias

    # Stacked row-select matrix: all k kernel rows in one [k*Ho, Hs] matmul.
    gst = np.zeros((k * ho, hs), np.float32)
    for ky in range(k):
        for oh in range(ho):
            hcc = s * oh + ky - pd
            if 0 <= hcc < hc:
                gst[ky * ho + oh, int(hmap[hcc])] = 1.0

    wg = np.zeros((k, in_lane_pad, out_lane_pad), np.float32)
    for ky in range(k):
        for ow in range(wo):
            for kx in range(k):
                wcc = s * ow + kx - pd
                if 0 <= wcc < wc:
                    wsrc = int(wmap[wcc])
                    blk = wnp[:, :, ky, kx].T * gnp[None, :]      # [cin, cout]
                    wg[ky, wsrc * cin:(wsrc + 1) * cin,
                       ow * cout:(ow + 1) * cout] += blk

    brow = np.zeros((1, out_lane_pad), np.float32)
    brow[0, :wo * cout] = np.tile(bnp, wo)
    return gst, wg, brow, ho, wo, out_lane_pad


def build_policy_plan(params, n, h_in, w_in, block_size, ds_factor):
    """Precompute (once) all kernel operands for a fixed input geometry."""
    scale = ds_factor / block_size
    h_up, w_up = int(h_in * scale), int(w_in * scale)
    # Nearest-neighbour source maps (same floor formula as the reference).
    hmap = np.clip(np.floor(np.arange(h_up) / scale).astype(np.int64), 0, h_in - 1)
    wmap = np.clip(np.floor(np.arange(w_up) / scale).astype(np.int64), 0, w_in - 1)

    hs, ws, cin = h_in, w_in, params[0]["cin"]
    hc, wc = h_up, w_up
    in_lane_pad0 = _round_up(ws * cin, 128)
    in_pad = in_lane_pad0

    mats = []
    flops = 0
    out_pad = in_pad
    for p in params:
        gst, wg, brow, ho, wo, out_pad = _build_layer_mats(
            hs, ws, hc, wc, p["cin"], p["cout"], p["k"], p["stride"],
            p["pad"], hmap, wmap, p["w"], p["scale"], p["bias"], in_pad)
        mats += [jnp.asarray(gst, dtype=COMPUTE_DTYPE),
                 jnp.asarray(wg, dtype=COMPUTE_DTYPE),
                 jnp.asarray(brow, dtype=jnp.float32)]
        flops += n * (2 * (p["k"] * ho) * hs * in_pad
                      + p["k"] * 2 * ho * in_pad * out_pad)
        # Next layer consumes this output directly (identity coordinate map).
        hs, ws, cin = ho, wo, p["cout"]
        hc, wc = ho, wo
        hmap, wmap = np.arange(ho), np.arange(wo)
        in_pad = out_pad

    itemsize = np.dtype(COMPUTE_DTYPE).itemsize
    mat_bytes = sum(int(m.size) * m.dtype.itemsize for m in mats)
    in_bytes = n * h_in * in_lane_pad0 * itemsize
    out_bytes = n * hs * out_pad * 4
    bytes_accessed = mat_bytes + in_bytes + out_bytes

    # VMEM: operands (x block + weights + out block) x2 for double-buffering,
    # plus headroom for in-kernel intermediates.
    x_block_bytes = h_in * in_lane_pad0 * itemsize
    o_block_bytes = hs * out_pad * 4
    vmem_limit = int(min(100 << 20,
                         max(16 << 20,
                             2 * (mat_bytes + x_block_bytes + o_block_bytes)
                             + (6 << 20))))

    meta = PolicyPlanMeta(n_layers=len(params), h_out=hs, w_out=ws, c_out=cin,
                          in_lane_pad=in_lane_pad0, out_lane_pad=out_pad,
                          flops=int(flops), bytes_accessed=int(bytes_accessed),
                          vmem_limit=vmem_limit)
    return tuple(mats), meta


# ----------------------------------------------------------------------------
# PolicyNet parameters (faithful to the PyTorch module, eval-mode BN folded)
# ----------------------------------------------------------------------------
def init_policynet_params(key, block_size=16, width_factor=0.5):
    features = int(64 * width_factor)
    cfg = [
        dict(cin=3, cout=features, k=7, stride=4, pad=3, has_bias=False, bn=True),
        dict(cin=features, cout=features, k=5, stride=2, pad=2, has_bias=False, bn=True),
        dict(cin=features, cout=features, k=5, stride=2, pad=2, has_bias=False, bn=True),
        dict(cin=features, cout=1, k=5, stride=2, pad=2, has_bias=True, bn=False),
    ]
    params = []
    for layer in cfg:
        key, kw, kg, kb, km, kv, kcb = jax.random.split(key, 7)
        w = 0.05 * jax.random.normal(
            kw, (layer["cout"], layer["cin"], layer["k"], layer["k"]), jnp.float32)
        p = dict(layer, w=w)
        if layer["bn"]:
            gamma = 1.0 + 0.1 * jax.random.normal(kg, (layer["cout"],), jnp.float32)
            beta = 0.05 * jax.random.normal(kb, (layer["cout"],), jnp.float32)
            rmean = 0.1 * jax.random.normal(km, (layer["cout"],), jnp.float32)
            rvar = 1.0 + 0.1 * jnp.abs(jax.random.normal(kv, (layer["cout"],), jnp.float32))
            scale = gamma / jnp.sqrt(rvar + BN_EPS)      # eval-mode BN fold
            bias = beta - rmean * scale
        else:
            scale = jnp.ones((layer["cout"],), jnp.float32)
            bias = (0.05 * jax.random.normal(kcb, (layer["cout"],), jnp.float32)
                    if layer["has_bias"] else jnp.zeros((layer["cout"],), jnp.float32))
        p["scale"] = scale
        p["bias"] = bias
        params.append(p)
    ds_factor = 4 * 2 * 2 * 2
    return params, ds_factor


# ----------------------------------------------------------------------------
# Pure-JAX reference (gather-interpolate + lax.conv) for correctness check
# ----------------------------------------------------------------------------
def nearest_interpolate_nchw(x, scale):
    N, C, H, W = x.shape
    Ho, Wo = int(H * scale), int(W * scale)
    hi = jnp.clip((jnp.arange(Ho) / scale).astype(jnp.int32), 0, H - 1)
    wi = jnp.clip((jnp.arange(Wo) / scale).astype(jnp.int32), 0, W - 1)
    return x[:, :, hi, :][:, :, :, wi]


def policynet_ref(x_nchw, params, block_size, ds_factor):
    scale = ds_factor / block_size
    x = nearest_interpolate_nchw(x_nchw, scale)
    x = jnp.transpose(x, (0, 2, 3, 1))                    # NHWC
    n_layers = len(params)
    for i, p in enumerate(params):
        w_hwio = jnp.transpose(p["w"], (2, 3, 1, 0))
        y = lax.conv_general_dilated(
            x, w_hwio, window_strides=(p["stride"], p["stride"]),
            padding=[(p["pad"], p["pad"]), (p["pad"], p["pad"])],
            dimension_numbers=("NHWC", "HWIO", "NHWC"))
        y = y * p["scale"] + p["bias"]
        if i < n_layers - 1:
            y = jnp.maximum(y, 0.0)
        x = y
    return jnp.transpose(x, (0, 3, 1, 2))


if __name__ == "__main__":
    key = jax.random.PRNGKey(0)
    kx, kp = jax.random.split(key)

    block_size = 16          # scale = 32/16 = 2.0 -> nearest upsample x2
    width_factor = 0.5       # features = 32
    x = jax.random.normal(kx, (2, 3, 32, 32), jnp.float32)   # NCHW input

    params, ds_factor = init_policynet_params(
        kp, block_size=block_size, width_factor=width_factor)

    mats, meta = build_policy_plan(
        params, n=x.shape[0], h_in=x.shape[2], w_in=x.shape[3],
        block_size=block_size, ds_factor=ds_factor)

    fwd = jax.jit(policynet_forward, static_argnums=2)
    out = jax.block_until_ready(fwd(x, mats, meta))

    ref = jax.block_until_ready(policynet_ref(x, params, block_size, ds_factor))

    assert out.shape == (2, 1, 2, 2), out.shape
    max_err = float(jnp.max(jnp.abs(out - ref)))
    # bf16 operands / f32 accumulation: validate at ~3e-2 vs the f32 reference.
    assert jnp.allclose(out, ref, atol=3e-2, rtol=3e-2), max_err

    print("KERNEL_OK")
</pallas_src>

<mosaic_0001>
module attributes {stable_mosaic.version = 11 : i64} {
  func.func @_policynet_kernel(%arg0: i32, %arg1: memref<1x32x128xbf16, #tpu.memory_space<vmem>>, %arg2: memref<112x32xbf16, #tpu.memory_space<vmem>>, %arg3: memref<7x128x512xbf16, #tpu.memory_space<vmem>>, %arg4: memref<1x512xf32, #tpu.memory_space<vmem>>, %arg5: memref<40x16xbf16, #tpu.memory_space<vmem>>, %arg6: memref<5x512x256xbf16, #tpu.memory_space<vmem>>, %arg7: memref<1x256xf32, #tpu.memory_space<vmem>>, %arg8: memref<20x8xbf16, #tpu.memory_space<vmem>>, %arg9: memref<5x256x128xbf16, #tpu.memory_space<vmem>>, %arg10: memref<1x128xf32, #tpu.memory_space<vmem>>, %arg11: memref<10x4xbf16, #tpu.memory_space<vmem>>, %arg12: memref<5x128x128xbf16, #tpu.memory_space<vmem>>, %arg13: memref<1x128xf32, #tpu.memory_space<vmem>>, %arg14: memref<1x2x128xf32, #tpu.memory_space<vmem>>) attributes {dimension_semantics = [#tpu.dimension_semantics<parallel>], iteration_bounds = array<i64: 2>, scalar_prefetch = 0 : i64, scratch_operands = 0 : i64, tpu.core_type = #tpu.core_type<tc>, window_params = [{transform_indices = @transform_0, window_bounds = array<i64: 1, 32, 128>}, {pipeline_mode = #tpu.pipeline_mode<synchronous>, transform_indices = @transform_1, window_bounds = array<i64: 112, 32>}, {pipeline_mode = #tpu.pipeline_mode<synchronous>, transform_indices = @transform_2, window_bounds = array<i64: 7, 128, 512>}, {pipeline_mode = #tpu.pipeline_mode<synchronous>, transform_indices = @transform_3, window_bounds = array<i64: 1, 512>}, {pipeline_mode = #tpu.pipeline_mode<synchronous>, transform_indices = @transform_4, window_bounds = array<i64: 40, 16>}, {pipeline_mode = #tpu.pipeline_mode<synchronous>, transform_indices = @transform_5, window_bounds = array<i64: 5, 512, 256>}, {pipeline_mode = #tpu.pipeline_mode<synchronous>, transform_indices = @transform_6, window_bounds = array<i64: 1, 256>}, {pipeline_mode = #tpu.pipeline_mode<synchronous>, transform_indices = @transform_7, window_bounds = array<i64: 20, 8>}, {pipeline_mode = #tpu.pipeline_mode<synchronous>, transform_indices = @transform_8, window_bounds = array<i64: 5, 256, 128>}, {pipeline_mode = #tpu.pipeline_mode<synchronous>, transform_indices = @transform_9, window_bounds = array<i64: 1, 128>}, {pipeline_mode = #tpu.pipeline_mode<synchronous>, transform_indices = @transform_10, window_bounds = array<i64: 10, 4>}, {pipeline_mode = #tpu.pipeline_mode<synchronous>, transform_indices = @transform_11, window_bounds = array<i64: 5, 128, 128>}, {pipeline_mode = #tpu.pipeline_mode<synchronous>, transform_indices = @transform_12, window_bounds = array<i64: 1, 128>}, {transform_indices = @transform_13, window_bounds = array<i64: 1, 2, 128>}]} {
    %c0 = arith.constant 0 : index
    %c0_0 = arith.constant 0 : index
    %c0_1 = arith.constant 0 : index
    %0 = vector.load %arg1[%c0, %c0_0, %c0_1] : memref<1x32x128xbf16, #tpu.memory_space<vmem>>, vector<1x32x128xbf16>
    %1 = vector.shape_cast %0 : vector<1x32x128xbf16> to vector<32x128xbf16>
    %c0_2 = arith.constant 0 : index
    %c0_3 = arith.constant 0 : index
    %2 = vector.load %arg2[%c0_2, %c0_3] : memref<112x32xbf16, #tpu.memory_space<vmem>>, vector<112x32xbf16>
    %cst = arith.constant dense<0.000000e+00> : vector<112x128xf32>
    %3 = tpu.matmul %2, %1, %cst {dimension_numbers = #tpu.dot_dimension_numbers<[1], [0], [0], [1], [0, 0, 1, 1], [], []>} : vector<112x32xbf16>, vector<32x128xbf16>, vector<112x128xf32> -> vector<112x128xf32>
    %4 = arith.truncf %3 : vector<112x128xf32> to vector<112x128xbf16>
    %5 = vector.extract_strided_slice %4 {offsets = [0, 0], sizes = [16, 128], strides = [1, 1]} : vector<112x128xbf16> to vector<16x128xbf16>
    %c0_4 = arith.constant 0 : index
    %c0_5 = arith.constant 0 : index
    %c0_6 = arith.constant 0 : index
    %6 = vector.load %arg3[%c0_4, %c0_5, %c0_6] : memref<7x128x512xbf16, #tpu.memory_space<vmem>>, vector<1x128x512xbf16>
    %7 = vector.shape_cast %6 : vector<1x128x512xbf16> to vector<128x512xbf16>
    %cst_7 = arith.constant dense<0.000000e+00> : vector<16x512xf32>
    %8 = tpu.matmul %5, %7, %cst_7 {dimension_numbers = #tpu.dot_dimension_numbers<[1], [0], [0], [1], [0, 0, 1, 1], [], []>} : vector<16x128xbf16>, vector<128x512xbf16>, vector<16x512xf32> -> vector<16x512xf32>
    %9 = vector.extract_strided_slice %4 {offsets = [16, 0], sizes = [16, 128], strides = [1, 1]} : vector<112x128xbf16> to vector<16x128xbf16>
    %c1 = arith.constant 1 : index
    %c0_8 = arith.constant 0 : index
    %c0_9 = arith.constant 0 : index
    %10 = vector.load %arg3[%c1, %c0_8, %c0_9] : memref<7x128x512xbf16, #tpu.memory_space<vmem>>, vector<1x128x512xbf16>
    %11 = vector.shape_cast %10 : vector<1x128x512xbf16> to vector<128x512xbf16>
    %cst_10 = arith.constant dense<0.000000e+00> : vector<16x512xf32>
    %12 = tpu.matmul %9, %11, %cst_10 {dimension_numbers = #tpu.dot_dimension_numbers<[1], [0], [0], [1], [0, 0, 1, 1], [], []>} : vector<16x128xbf16>, vector<128x512xbf16>, vector<16x512xf32> -> vector<16x512xf32>
    %13 = arith.addf %8, %12 : vector<16x512xf32>
    %14 = vector.extract_strided_slice %4 {offsets = [32, 0], sizes = [16, 128], strides = [1, 1]} : vector<112x128xbf16> to vector<16x128xbf16>
    %c2 = arith.constant 2 : index
    %c0_11 = arith.constant 0 : index
    %c0_12 = arith.constant 0 : index
    %15 = vector.load %arg3[%c2, %c0_11, %c0_12] : memref<7x128x512xbf16, #tpu.memory_space<vmem>>, vector<1x128x512xbf16>
    %16 = vector.shape_cast %15 : vector<1x128x512xbf16> to vector<128x512xbf16>
    %cst_13 = arith.constant dense<0.000000e+00> : vector<16x512xf32>
    %17 = tpu.matmul %14, %16, %cst_13 {dimension_numbers = #tpu.dot_dimension_numbers<[1], [0], [0], [1], [0, 0, 1, 1], [], []>} : vector<16x128xbf16>, vector<128x512xbf16>, vector<16x512xf32> -> vector<16x512xf32>
    %18 = arith.addf %13, %17 : vector<16x512xf32>
    %19 = vector.extract_strided_slice %4 {offsets = [48, 0], sizes = [16, 128], strides = [1, 1]} : vector<112x128xbf16> to vector<16x128xbf16>
    %c3 = arith.constant 3 : index
    %c0_14 = arith.constant 0 : index
    %c0_15 = arith.constant 0 : index
    %20 = vector.load %arg3[%c3, %c0_14, %c0_15] : memref<7x128x512xbf16, #tpu.memory_space<vmem>>, vector<1x128x512xbf16>
    %21 = vector.shape_cast %20 : vector<1x128x512xbf16> to vector<128x512xbf16>
    %cst_16 = arith.constant dense<0.000000e+00> : vector<16x512xf32>
    %22 = tpu.matmul %19, %21, %cst_16 {dimension_numbers = #tpu.dot_dimension_numbers<[1], [0], [0], [1], [0, 0, 1, 1], [], []>} : vector<16x128xbf16>, vector<128x512xbf16>, vector<16x512xf32> -> vector<16x512xf32>
    %23 = arith.addf %18, %22 : vector<16x512xf32>
    %24 = vector.extract_strided_slice %4 {offsets = [64, 0], sizes = [16, 128], strides = [1, 1]} : vector<112x128xbf16> to vector<16x128xbf16>
    %c4 = arith.constant 4 : index
    %c0_17 = arith.constant 0 : index
    %c0_18 = arith.constant 0 : index
    %25 = vector.load %arg3[%c4, %c0_17, %c0_18] : memref<7x128x512xbf16, #tpu.memory_space<vmem>>, vector<1x128x512xbf16>
    %26 = vector.shape_cast %25 : vector<1x128x512xbf16> to vector<128x512xbf16>
    %cst_19 = arith.constant dense<0.000000e+00> : vector<16x512xf32>
    %27 = tpu.matmul %24, %26, %cst_19 {dimension_numbers = #tpu.dot_dimension_numbers<[1], [0], [0], [1], [0, 0, 1, 1], [], []>} : vector<16x128xbf16>, vector<128x512xbf16>, vector<16x512xf32> -> vector<16x512xf32>
    %28 = arith.addf %23, %27 : vector<16x512xf32>
    %29 = vector.extract_strided_slice %4 {offsets = [80, 0], sizes = [16, 128], strides = [1, 1]} : vector<112x128xbf16> to vector<16x128xbf16>
    %c5 = arith.constant 5 : index
    %c0_20 = arith.constant 0 : index
    %c0_21 = arith.constant 0 : index
    %30 = vector.load %arg3[%c5, %c0_20, %c0_21] : memref<7x128x512xbf16, #tpu.memory_space<vmem>>, vector<1x128x512xbf16>
    %31 = vector.shape_cast %30 : vector<1x128x512xbf16> to vector<128x512xbf16>
    %cst_22 = arith.constant dense<0.000000e+00> : vector<16x512xf32>
    %32 = tpu.matmul %29, %31, %cst_22 {dimension_numbers = #tpu.dot_dimension_numbers<[1], [0], [0], [1], [0, 0, 1, 1], [], []>} : vector<16x128xbf16>, vector<128x512xbf16>, vector<16x512xf32> -> vector<16x512xf32>
    %33 = arith.addf %28, %32 : vector<16x512xf32>
    %34 = vector.extract_strided_slice %4 {offsets = [96, 0], sizes = [16, 128], strides = [1, 1]} : vector<112x128xbf16> to vector<16x128xbf16>
    %c6 = arith.constant 6 : index
    %c0_23 = arith.constant 0 : index
    %c0_24 = arith.constant 0 : index
    %35 = vector.load %arg3[%c6, %c0_23, %c0_24] : memref<7x128x512xbf16, #tpu.memory_space<vmem>>, vector<1x128x512xbf16>
    %36 = vector.shape_cast %35 : vector<1x128x512xbf16> to vector<128x512xbf16>
    %cst_25 = arith.constant dense<0.000000e+00> : vector<16x512xf32>
    %37 = tpu.matmul %34, %36, %cst_25 {dimension_numbers = #tpu.dot_dimension_numbers<[1], [0], [0], [1], [0, 0, 1, 1], [], []>} : vector<16x128xbf16>, vector<128x512xbf16>, vector<16x512xf32> -> vector<16x512xf32>
    %38 = arith.addf %33, %37 : vector<16x512xf32>
    %c0_26 = arith.constant 0 : index
    %c0_27 = arith.constant 0 : index
    %39 = vector.load %arg4[%c0_26, %c0_27] : memref<1x512xf32, #tpu.memory_space<vmem>>, vector<1x512xf32>
    %40 = vector.broadcast %39 : vector<1x512xf32> to vector<16x512xf32>
    %41 = arith.addf %38, %40 : vector<16x512xf32>
    %cst_28 = arith.constant 0.000000e+00 : f32
    %42 = vector.broadcast %cst_28 : f32 to vector<16x512xf32>
    %43 = arith.maximumf %41, %42 : vector<16x512xf32>
    %44 = arith.truncf %43 : vector<16x512xf32> to vector<16x512xbf16>
    %c0_29 = arith.constant 0 : index
    %c0_30 = arith.constant 0 : index
    %45 = vector.load %arg5[%c0_29, %c0_30] : memref<40x16xbf16, #tpu.memory_space<vmem>>, vector<40x16xbf16>
    %cst_31 = arith.constant dense<0.000000e+00> : vector<40x512xf32>
    %46 = tpu.matmul %45, %44, %cst_31 {dimension_numbers = #tpu.dot_dimension_numbers<[1], [0], [0], [1], [0, 0, 1, 1], [], []>} : vector<40x16xbf16>, vector<16x512xbf16>, vector<40x512xf32> -> vector<40x512xf32>
    %47 = arith.truncf %46 : vector<40x512xf32> to vector<40x512xbf16>
    %48 = vector.extract_strided_slice %47 {offsets = [0, 0], sizes = [8, 512], strides = [1, 1]} : vector<40x512xbf16> to vector<8x512xbf16>
    %c0_32 = arith.constant 0 : index
    %c0_33 = arith.constant 0 : index
    %c0_34 = arith.constant 0 : index
    %49 = vector.load %arg6[%c0_32, %c0_33, %c0_34] : memref<5x512x256xbf16, #tpu.memory_space<vmem>>, vector<1x512x256xbf16>
    %50 = vector.shape_cast %49 : vector<1x512x256xbf16> to vector<512x256xbf16>
    %cst_35 = arith.constant dense<0.000000e+00> : vector<8x256xf32>
    %51 = tpu.matmul %48, %50, %cst_35 {dimension_numbers = #tpu.dot_dimension_numbers<[1], [0], [0], [1], [0, 0, 1, 1], [], []>} : vector<8x512xbf16>, vector<512x256xbf16>, vector<8x256xf32> -> vector<8x256xf32>
    %52 = vector.extract_strided_slice %47 {offsets = [8, 0], sizes = [8, 512], strides = [1, 1]} : vector<40x512xbf16> to vector<8x512xbf16>
    %c1_36 = arith.constant 1 : index
    %c0_37 = arith.constant 0 : index
    %c0_38 = arith.constant 0 : index
    %53 = vector.load %arg6[%c1_36, %c0_37, %c0_38] : memref<5x512x256xbf16, #tpu.memory_space<vmem>>, vector<1x512x256xbf16>
    %54 = vector.shape_cast %53 : vector<1x512x256xbf16> to vector<512x256xbf16>
    %cst_39 = arith.constant dense<0.000000e+00> : vector<8x256xf32>
    %55 = tpu.matmul %52, %54, %cst_39 {dimension_numbers = #tpu.dot_dimension_numbers<[1], [0], [0], [1], [0, 0, 1, 1], [], []>} : vector<8x512xbf16>, vector<512x256xbf16>, vector<8x256xf32> -> vector<8x256xf32>
    %56 = arith.addf %51, %55 : vector<8x256xf32>
    %57 = vector.extract_strided_slice %47 {offsets = [16, 0], sizes = [8, 512], strides = [1, 1]} : vector<40x512xbf16> to vector<8x512xbf16>
    %c2_40 = arith.constant 2 : index
    %c0_41 = arith.constant 0 : index
    %c0_42 = arith.constant 0 : index
    %58 = vector.load %arg6[%c2_40, %c0_41, %c0_42] : memref<5x512x256xbf16, #tpu.memory_space<vmem>>, vector<1x512x256xbf16>
    %59 = vector.shape_cast %58 : vector<1x512x256xbf16> to vector<512x256xbf16>
    %cst_43 = arith.constant dense<0.000000e+00> : vector<8x256xf32>
    %60 = tpu.matmul %57, %59, %cst_43 {dimension_numbers = #tpu.dot_dimension_numbers<[1], [0], [0], [1], [0, 0, 1, 1], [], []>} : vector<8x512xbf16>, vector<512x256xbf16>, vector<8x256xf32> -> vector<8x256xf32>
    %61 = arith.addf %56, %60 : vector<8x256xf32>
    %62 = vector.extract_strided_slice %47 {offsets = [24, 0], sizes = [8, 512], strides = [1, 1]} : vector<40x512xbf16> to vector<8x512xbf16>
    %c3_44 = arith.constant 3 : index
    %c0_45 = arith.constant 0 : index
    %c0_46 = arith.constant 0 : index
    %63 = vector.load %arg6[%c3_44, %c0_45, %c0_46] : memref<5x512x256xbf16, #tpu.memory_space<vmem>>, vector<1x512x256xbf16>
    %64 = vector.shape_cast %63 : vector<1x512x256xbf16> to vector<512x256xbf16>
    %cst_47 = arith.constant dense<0.000000e+00> : vector<8x256xf32>
    %65 = tpu.matmul %62, %64, %cst_47 {dimension_numbers = #tpu.dot_dimension_numbers<[1], [0], [0], [1], [0, 0, 1, 1], [], []>} : vector<8x512xbf16>, vector<512x256xbf16>, vector<8x256xf32> -> vector<8x256xf32>
    %66 = arith.addf %61, %65 : vector<8x256xf32>
    %67 = vector.extract_strided_slice %47 {offsets = [32, 0], sizes = [8, 512], strides = [1, 1]} : vector<40x512xbf16> to vector<8x512xbf16>
    %c4_48 = arith.constant 4 : index
    %c0_49 = arith.constant 0 : index
    %c0_50 = arith.constant 0 : index
    %68 = vector.load %arg6[%c4_48, %c0_49, %c0_50] : memref<5x512x256xbf16, #tpu.memory_space<vmem>>, vector<1x512x256xbf16>
    %69 = vector.shape_cast %68 : vector<1x512x256xbf16> to vector<512x256xbf16>
    %cst_51 = arith.constant dense<0.000000e+00> : vector<8x256xf32>
    %70 = tpu.matmul %67, %69, %cst_51 {dimension_numbers = #tpu.dot_dimension_numbers<[1], [0], [0], [1], [0, 0, 1, 1], [], []>} : vector<8x512xbf16>, vector<512x256xbf16>, vector<8x256xf32> -> vector<8x256xf32>
    %71 = arith.addf %66, %70 : vector<8x256xf32>
    %c0_52 = arith.constant 0 : index
    %c0_53 = arith.constant 0 : index
    %72 = vector.load %arg7[%c0_52, %c0_53] : memref<1x256xf32, #tpu.memory_space<vmem>>, vector<1x256xf32>
    %73 = vector.broadcast %72 : vector<1x256xf32> to vector<8x256xf32>
    %74 = arith.addf %71, %73 : vector<8x256xf32>
    %cst_54 = arith.constant 0.000000e+00 : f32
    %75 = vector.broadcast %cst_54 : f32 to vector<8x256xf32>
    %76 = arith.maximumf %74, %75 : vector<8x256xf32>
    %77 = arith.truncf %76 : vector<8x256xf32> to vector<8x256xbf16>
    %c0_55 = arith.constant 0 : index
    %c0_56 = arith.constant 0 : index
    %78 = vector.load %arg8[%c0_55, %c0_56] : memref<20x8xbf16, #tpu.memory_space<vmem>>, vector<20x8xbf16>
    %cst_57 = arith.constant dense<0.000000e+00> : vector<20x256xf32>
    %79 = tpu.matmul %78, %77, %cst_57 {dimension_numbers = #tpu.dot_dimension_numbers<[1], [0], [0], [1], [0, 0, 1, 1], [], []>} : vector<20x8xbf16>, vector<8x256xbf16>, vector<20x256xf32> -> vector<20x256xf32>
    %80 = arith.truncf %79 : vector<20x256xf32> to vector<20x256xbf16>
    %81 = vector.extract_strided_slice %80 {offsets = [0, 0], sizes = [4, 256], strides = [1, 1]} : vector<20x256xbf16> to vector<4x256xbf16>
    %c0_58 = arith.constant 0 : index
    %c0_59 = arith.constant 0 : index
    %c0_60 = arith.constant 0 : index
    %82 = vector.load %arg9[%c0_58, %c0_59, %c0_60] : memref<5x256x128xbf16, #tpu.memory_space<vmem>>, vector<1x256x128xbf16>
    %83 = vector.shape_cast %82 : vector<1x256x128xbf16> to vector<256x128xbf16>
    %cst_61 = arith.constant dense<0.000000e+00> : vector<4x128xf32>
    %84 = tpu.matmul %81, %83, %cst_61 {dimension_numbers = #tpu.dot_dimension_numbers<[1], [0], [0], [1], [0, 0, 1, 1], [], []>} : vector<4x256xbf16>, vector<256x128xbf16>, vector<4x128xf32> -> vector<4x128xf32>
    %85 = vector.extract_strided_slice %80 {offsets = [4, 0], sizes = [4, 256], strides = [1, 1]} : vector<20x256xbf16> to vector<4x256xbf16>
    %c1_62 = arith.constant 1 : index
    %c0_63 = arith.constant 0 : index
    %c0_64 = arith.constant 0 : index
    %86 = vector.load %arg9[%c1_62, %c0_63, %c0_64] : memref<5x256x128xbf16, #tpu.memory_space<vmem>>, vector<1x256x128xbf16>
    %87 = vector.shape_cast %86 : vector<1x256x128xbf16> to vector<256x128xbf16>
    %cst_65 = arith.constant dense<0.000000e+00> : vector<4x128xf32>
    %88 = tpu.matmul %85, %87, %cst_65 {dimension_numbers = #tpu.dot_dimension_numbers<[1], [0], [0], [1], [0, 0, 1, 1], [], []>} : vector<4x256xbf16>, vector<256x128xbf16>, vector<4x128xf32> -> vector<4x128xf32>
    %89 = arith.addf %84, %88 : vector<4x128xf32>
    %90 = vector.extract_strided_slice %80 {offsets = [8, 0], sizes = [4, 256], strides = [1, 1]} : vector<20x256xbf16> to vector<4x256xbf16>
    %c2_66 = arith.constant 2 : index
    %c0_67 = arith.constant 0 : index
    %c0_68 = arith.constant 0 : index
    %91 = vector.load %arg9[%c2_66, %c0_67, %c0_68] : memref<5x256x128xbf16, #tpu.memory_space<vmem>>, vector<1x256x128xbf16>
    %92 = vector.shape_cast %91 : vector<1x256x128xbf16> to vector<256x128xbf16>
    %cst_69 = arith.constant dense<0.000000e+00> : vector<4x128xf32>
    %93 = tpu.matmul %90, %92, %cst_69 {dimension_numbers = #tpu.dot_dimension_numbers<[1], [0], [0], [1], [0, 0, 1, 1], [], []>} : vector<4x256xbf16>, vector<256x128xbf16>, vector<4x128xf32> -> vector<4x128xf32>
    %94 = arith.addf %89, %93 : vector<4x128xf32>
    %95 = vector.extract_strided_slice %80 {offsets = [12, 0], sizes = [4, 256], strides = [1, 1]} : vector<20x256xbf16> to vector<4x256xbf16>
    %c3_70 = arith.constant 3 : index
    %c0_71 = arith.constant 0 : index
    %c0_72 = arith.constant 0 : index
    %96 = vector.load %arg9[%c3_70, %c0_71, %c0_72] : memref<5x256x128xbf16, #tpu.memory_space<vmem>>, vector<1x256x128xbf16>
    %97 = vector.shape_cast %96 : vector<1x256x128xbf16> to vector<256x128xbf16>
    %cst_73 = arith.constant dense<0.000000e+00> : vector<4x128xf32>
    %98 = tpu.matmul %95, %97, %cst_73 {dimension_numbers = #tpu.dot_dimension_numbers<[1], [0], [0], [1], [0, 0, 1, 1], [], []>} : vector<4x256xbf16>, vector<256x128xbf16>, vector<4x128xf32> -> vector<4x128xf32>
    %99 = arith.addf %94, %98 : vector<4x128xf32>
    %100 = vector.extract_strided_slice %80 {offsets = [16, 0], sizes = [4, 256], strides = [1, 1]} : vector<20x256xbf16> to vector<4x256xbf16>
    %c4_74 = arith.constant 4 : index
    %c0_75 = arith.constant 0 : index
    %c0_76 = arith.constant 0 : index
    %101 = vector.load %arg9[%c4_74, %c0_75, %c0_76] : memref<5x256x128xbf16, #tpu.memory_space<vmem>>, vector<1x256x128xbf16>
    %102 = vector.shape_cast %101 : vector<1x256x128xbf16> to vector<256x128xbf16>
    %cst_77 = arith.constant dense<0.000000e+00> : vector<4x128xf32>
    %103 = tpu.matmul %100, %102, %cst_77 {dimension_numbers = #tpu.dot_dimension_numbers<[1], [0], [0], [1], [0, 0, 1, 1], [], []>} : vector<4x256xbf16>, vector<256x128xbf16>, vector<4x128xf32> -> vector<4x128xf32>
    %104 = arith.addf %99, %103 : vector<4x128xf32>
    %c0_78 = arith.constant 0 : index
    %c0_79 = arith.constant 0 : index
    %105 = vector.load %arg10[%c0_78, %c0_79] : memref<1x128xf32, #tpu.memory_space<vmem>>, vector<1x128xf32>
    %106 = vector.broadcast %105 : vector<1x128xf32> to vector<4x128xf32>
    %107 = arith.addf %104, %106 : vector<4x128xf32>
    %cst_80 = arith.constant 0.000000e+00 : f32
    %108 = vector.broadcast %cst_80 : f32 to vector<4x128xf32>
    %109 = arith.maximumf %107, %108 : vector<4x128xf32>
    %110 = arith.truncf %109 : vector<4x128xf32> to vector<4x128xbf16>
    %c0_81 = arith.constant 0 : index
    %c0_82 = arith.constant 0 : index
    %111 = vector.load %arg11[%c0_81, %c0_82] : memref<10x4xbf16, #tpu.memory_space<vmem>>, vector<10x4xbf16>
    %cst_83 = arith.constant dense<0.000000e+00> : vector<10x128xf32>
    %112 = tpu.matmul %111, %110, %cst_83 {dimension_numbers = #tpu.dot_dimension_numbers<[1], [0], [0], [1], [0, 0, 1, 1], [], []>} : vector<10x4xbf16>, vector<4x128xbf16>, vector<10x128xf32> -> vector<10x128xf32>
    %113 = arith.truncf %112 : vector<10x128xf32> to vector<10x128xbf16>
    %114 = vector.extract_strided_slice %113 {offsets = [0, 0], sizes = [2, 128], strides = [1, 1]} : vector<10x128xbf16> to vector<2x128xbf16>
    %c0_84 = arith.constant 0 : index
    %c0_85 = arith.constant 0 : index
    %c0_86 = arith.constant 0 : index
    %115 = vector.load %arg12[%c0_84, %c0_85, %c0_86] : memref<5x128x128xbf16, #tpu.memory_space<vmem>>, vector<1x128x128xbf16>
    %116 = vector.shape_cast %115 : vector<1x128x128xbf16> to vector<128x128xbf16>
    %cst_87 = arith.constant dense<0.000000e+00> : vector<2x128xf32>
    %117 = tpu.matmul %114, %116, %cst_87 {dimension_numbers = #tpu.dot_dimension_numbers<[1], [0], [0], [1], [0, 0, 1, 1], [], []>} : vector<2x128xbf16>, vector<128x128xbf16>, vector<2x128xf32> -> vector<2x128xf32>
    %118 = vector.extract_strided_slice %113 {offsets = [2, 0], sizes = [2, 128], strides = [1, 1]} : vector<10x128xbf16> to vector<2x128xbf16>
    %c1_88 = arith.constant 1 : index
    %c0_89 = arith.constant 0 : index
    %c0_90 = arith.constant 0 : index
    %119 = vector.load %arg12[%c1_88, %c0_89, %c0_90] : memref<5x128x128xbf16, #tpu.memory_space<vmem>>, vector<1x128x128xbf16>
    %120 = vector.shape_cast %119 : vector<1x128x128xbf16> to vector<128x128xbf16>
    %cst_91 = arith.constant dense<0.000000e+00> : vector<2x128xf32>
    %121 = tpu.matmul %118, %120, %cst_91 {dimension_numbers = #tpu.dot_dimension_numbers<[1], [0], [0], [1], [0, 0, 1, 1], [], []>} : vector<2x128xbf16>, vector<128x128xbf16>, vector<2x128xf32> -> vector<2x128xf32>
    %122 = arith.addf %117, %121 : vector<2x128xf32>
    %123 = vector.extract_strided_slice %113 {offsets = [4, 0], sizes = [2, 128], strides = [1, 1]} : vector<10x128xbf16> to vector<2x128xbf16>
    %c2_92 = arith.constant 2 : index
    %c0_93 = arith.constant 0 : index
    %c0_94 = arith.constant 0 : index
    %124 = vector.load %arg12[%c2_92, %c0_93, %c0_94] : memref<5x128x128xbf16, #tpu.memory_space<vmem>>, vector<1x128x128xbf16>
    %125 = vector.shape_cast %124 : vector<1x128x128xbf16> to vector<128x128xbf16>
    %cst_95 = arith.constant dense<0.000000e+00> : vector<2x128xf32>
    %126 = tpu.matmul %123, %125, %cst_95 {dimension_numbers = #tpu.dot_dimension_numbers<[1], [0], [0], [1], [0, 0, 1, 1], [], []>} : vector<2x128xbf16>, vector<128x128xbf16>, vector<2x128xf32> -> vector<2x128xf32>
    %127 = arith.addf %122, %126 : vector<2x128xf32>
    %128 = vector.extract_strided_slice %113 {offsets = [6, 0], sizes = [2, 128], strides = [1, 1]} : vector<10x128xbf16> to vector<2x128xbf16>
    %c3_96 = arith.constant 3 : index
    %c0_97 = arith.constant 0 : index
    %c0_98 = arith.constant 0 : index
    %129 = vector.load %arg12[%c3_96, %c0_97, %c0_98] : memref<5x128x128xbf16, #tpu.memory_space<vmem>>, vector<1x128x128xbf16>
    %130 = vector.shape_cast %129 : vector<1x128x128xbf16> to vector<128x128xbf16>
    %cst_99 = arith.constant dense<0.000000e+00> : vector<2x128xf32>
    %131 = tpu.matmul %128, %130, %cst_99 {dimension_numbers = #tpu.dot_dimension_numbers<[1], [0], [0], [1], [0, 0, 1, 1], [], []>} : vector<2x128xbf16>, vector<128x128xbf16>, vector<2x128xf32> -> vector<2x128xf32>
    %132 = arith.addf %127, %131 : vector<2x128xf32>
    %133 = vector.extract_strided_slice %113 {offsets = [8, 0], sizes = [2, 128], strides = [1, 1]} : vector<10x128xbf16> to vector<2x128xbf16>
    %c4_100 = arith.constant 4 : index
    %c0_101 = arith.constant 0 : index
    %c0_102 = arith.constant 0 : index
    %134 = vector.load %arg12[%c4_100, %c0_101, %c0_102] : memref<5x128x128xbf16, #tpu.memory_space<vmem>>, vector<1x128x128xbf16>
    %135 = vector.shape_cast %134 : vector<1x128x128xbf16> to vector<128x128xbf16>
    %cst_103 = arith.constant dense<0.000000e+00> : vector<2x128xf32>
    %136 = tpu.matmul %133, %135, %cst_103 {dimension_numbers = #tpu.dot_dimension_numbers<[1], [0], [0], [1], [0, 0, 1, 1], [], []>} : vector<2x128xbf16>, vector<128x128xbf16>, vector<2x128xf32> -> vector<2x128xf32>
    %137 = arith.addf %132, %136 : vector<2x128xf32>
    %c0_104 = arith.constant 0 : index
    %c0_105 = arith.constant 0 : index
    %138 = vector.load %arg13[%c0_104, %c0_105] : memref<1x128xf32, #tpu.memory_space<vmem>>, vector<1x128xf32>
    %139 = vector.broadcast %138 : vector<1x128xf32> to vector<2x128xf32>
    %140 = arith.addf %137, %139 : vector<2x128xf32>
    %c0_106 = arith.constant 0 : index
    %c0_107 = arith.constant 0 : index
    %c0_108 = arith.constant 0 : index
    %141 = vector.load %arg14[%c0_106, %c0_107, %c0_108] : memref<1x2x128xf32, #tpu.memory_space<vmem>>, vector<1x2x128xf32>
    %142 = vector.shape_cast %141 : vector<1x2x128xf32> to vector<2x128xf32>
    %143 = vector.shape_cast %140 : vector<2x128xf32> to vector<1x2x128xf32>
    tpu.vector_store %arg14[%c0_106, %c0_107, %c0_108], %143 {strides = array<i32>} : memref<1x2x128xf32, #tpu.memory_space<vmem>>, vector<1x2x128xf32>,
    return
  }
  func.func @transform_0(%arg0: i32) -> (i32, i32, i32) {
    %c0_i32 = arith.constant 0 : i32
    %c0_i32_0 = arith.constant 0 : i32
    %c0_i32_1 = arith.constant 0 : i32
    return %arg0, %c0_i32, %c0_i32_0 : i32, i32, i32
  }
  func.func @transform_1(%arg0: i32) -> (i32, i32) {
    %c0_i32 = arith.constant 0 : i32
    %c0_i32_0 = arith.constant 0 : i32
    %c0_i32_1 = arith.constant 0 : i32
    return %c0_i32, %c0_i32_0 : i32, i32
  }
  func.func @transform_2(%arg0: i32) -> (i32, i32, i32) {
    %c0_i32 = arith.constant 0 : i32
    %c0_i32_0 = arith.constant 0 : i32
    %c0_i32_1 = arith.constant 0 : i32
    %c0_i32_2 = arith.constant 0 : i32
    return %c0_i32, %c0_i32_0, %c0_i32_1 : i32, i32, i32
  }
  func.func @transform_3(%arg0: i32) -> (i32, i32) {
    %c0_i32 = arith.constant 0 : i32
    %c0_i32_0 = arith.constant 0 : i32
    %c0_i32_1 = arith.constant 0 : i32
    return %c0_i32, %c0_i32_0 : i32, i32
  }
  func.func @transform_4(%arg0: i32) -> (i32, i32) {
    %c0_i32 = arith.constant 0 : i32
    %c0_i32_0 = arith.constant 0 : i32
    %c0_i32_1 = arith.constant 0 : i32
    return %c0_i32, %c0_i32_0 : i32, i32
  }
  func.func @transform_5(%arg0: i32) -> (i32, i32, i32) {
    %c0_i32 = arith.constant 0 : i32
    %c0_i32_0 = arith.constant 0 : i32
    %c0_i32_1 = arith.constant 0 : i32
    %c0_i32_2 = arith.constant 0 : i32
    return %c0_i32, %c0_i32_0, %c0_i32_1 : i32, i32, i32
  }
  func.func @transform_6(%arg0: i32) -> (i32, i32) {
    %c0_i32 = arith.constant 0 : i32
    %c0_i32_0 = arith.constant 0 : i32
    %c0_i32_1 = arith.constant 0 : i32
    return %c0_i32, %c0_i32_0 : i32, i32
  }
  func.func @transform_7(%arg0: i32) -> (i32, i32) {
    %c0_i32 = arith.constant 0 : i32
    %c0_i32_0 = arith.constant 0 : i32
    %c0_i32_1 = arith.constant 0 : i32
    return %c0_i32, %c0_i32_0 : i32, i32
  }
  func.func @transform_8(%arg0: i32) -> (i32, i32, i32) {
    %c0_i32 = arith.constant 0 : i32
    %c0_i32_0 = arith.constant 0 : i32
    %c0_i32_1 = arith.constant 0 : i32
    %c0_i32_2 = arith.constant 0 : i32
    return %c0_i32, %c0_i32_0, %c0_i32_1 : i32, i32, i32
  }
  func.func @transform_9(%arg0: i32) -> (i32, i32) {
    %c0_i32 = arith.constant 0 : i32
    %c0_i32_0 = arith.constant 0 : i32
    %c0_i32_1 = arith.constant 0 : i32
    return %c0_i32, %c0_i32_0 : i32, i32
  }
  func.func @transform_10(%arg0: i32) -> (i32, i32) {
    %c0_i32 = arith.constant 0 : i32
    %c0_i32_0 = arith.constant 0 : i32
    %c0_i32_1 = arith.constant 0 : i32
    return %c0_i32, %c0_i32_0 : i32, i32
  }
  func.func @transform_11(%arg0: i32) -> (i32, i32, i32) {
    %c0_i32 = arith.constant 0 : i32
    %c0_i32_0 = arith.constant 0 : i32
    %c0_i32_1 = arith.constant 0 : i32
    %c0_i32_2 = arith.constant 0 : i32
    return %c0_i32, %c0_i32_0, %c0_i32_1 : i32, i32, i32
  }
  func.func @transform_12(%arg0: i32) -> (i32, i32) {
    %c0_i32 = arith.constant 0 : i32
    %c0_i32_0 = arith.constant 0 : i32
    %c0_i32_1 = arith.constant 0 : i32
    return %c0_i32, %c0_i32_0 : i32, i32
  }
  func.func @transform_13(%arg0: i32) -> (i32, i32, i32) {
    %c0_i32 = arith.constant 0 : i32
    %c0_i32_0 = arith.constant 0 : i32
    %c0_i32_1 = arith.constant 0 : i32
    return %arg0, %c0_i32, %c0_i32_0 : i32, i32, i32
  }
}

</mosaic_0001>

<llo_original>
// kernel: policynet_forward.1
$region0: #{policynet_forward.1}
  #allocation0 [shape = 'u32[]', space=smem, size = 0x4, offset = 0x4, fixed_abs, tag = 'smem constant byte address 0x4 - core index']
  #allocation1 [shape = 'u32[144,128]{1,0:T(1,128)}', space=vmem, size = 0x12000, scoped, tag = 'internal scratch']
  %s0 = inlined_call_operand.vmem [shape: bf16[2,32,128], index: 0, kind: input, shape index: {}]
  %s1 = inlined_call_operand.vmem [shape: bf16[112,32], index: 1, kind: input, shape index: {}]
  %s2 = inlined_call_operand.hbm [shape: bf16[7,128,512], index: 2, kind: input, shape index: {}]
  %s3 = inlined_call_operand.hbm [shape: f32[1,512], index: 3, kind: input, shape index: {}]
  %s4 = inlined_call_operand.vmem [shape: bf16[40,16], index: 4, kind: input, shape index: {}]
  %s5 = inlined_call_operand.hbm [shape: bf16[5,512,256], index: 5, kind: input, shape index: {}]
  %s6 = inlined_call_operand.hbm [shape: f32[1,256], index: 6, kind: input, shape index: {}]
  %s7 = inlined_call_operand.vmem [shape: bf16[20,8], index: 7, kind: input, shape index: {}]
  %s8 = inlined_call_operand.hbm [shape: bf16[5,256,128], index: 8, kind: input, shape index: {}]
  %s9 = inlined_call_operand.hbm [shape: f32[1,128], index: 9, kind: input, shape index: {}]
  %s10 = inlined_call_operand.vmem [shape: bf16[10,4], index: 10, kind: input, shape index: {}]
  %s11 = inlined_call_operand.hbm [shape: bf16[5,128,128], index: 11, kind: input, shape index: {}]
  %s12 = inlined_call_operand.hbm [shape: f32[1,128], index: 12, kind: input, shape index: {}]
  %s13 = inlined_call_operand.vmem [shape: f32[2,2,128], index: 13, kind: output, shape index: {}]
  %s14 = sld [smem:[#allocation0]]
  $region117: #{policynet_forward.1} parent=0
    _
  %s16 = ssub.s32 1, %s14
  %s17 = scalar_select 0, %s16, %s14
  $region1: #{policynet_forward.1} parent=0
    #allocation2 [shape = 'u8[917504]{0}', space=vmem, size = 0xe0000, scoped, tag = 'input window, operand 2, single buffered']
    #allocation3 [shape = 's32[2]{0}', space=sflag, size = 0x8, scoped, tag = 'scoped memory for policynet_forward.1']
    #allocation4 [shape = 'u8[2048]{0}', space=vmem, size = 0x800, scoped, tag = 'input window, operand 3, single buffered']
    #allocation5 [shape = 's32[1]{0}', space=sflag, size = 0x4, scoped, tag = 'scoped memory for policynet_forward.1']
    #allocation6 [shape = 'u8[1310720]{0}', space=vmem, size = 0x140000, scoped, tag = 'input window, operand 5, single buffered']
    #allocation7 [shape = 'u8[1024]{0}', space=vmem, size = 0x400, scoped, tag = 'input window, operand 6, single buffered']
    #allocation8 [shape = 's32[1]{0}', space=sflag, size = 0x4, scoped, tag = 'scoped memory for policynet_forward.1']
    #allocation9 [shape = 'u8[327680]{0}', space=vmem, size = 0x50000, scoped, tag = 'input window, operand 8, single buffered']
    #allocation10 [shape = 'u8[512]{0}', space=vmem, size = 0x400, scoped, tag = 'input window, operand 9, single buffered']
    #allocation11 [shape = 's32[1]{0}', space=sflag, size = 0x4, scoped, tag = 'scoped memory for policynet_forward.1']
    #allocation12 [shape = 'u8[163840]{0}', space=vmem, size = 0x28000, scoped, tag = 'input window, operand 11, single buffered']
    #allocation13 [shape = 'u8[512]{0}', space=vmem, size = 0x400, scoped, tag = 'input window, operand 12, single buffered']
    #allocation14 [shape = 's32[1]{0}', space=sflag, size = 0x4, scoped, tag = 'scoped memory for policynet_forward.1']
    %18 = vsyncpa [#allocation3], 0
    %19 = vsyncpa [#allocation5], 0
    %20 = vsyncpa [#allocation8], 0
    %21 = vsyncpa [#allocation11], 0
    %22 = vsyncpa [#allocation14], 0
    loop: start=0, step=1, limit=4
    $region2: #{policynet_forward.1} parent=1 // loop_pre_header
      _
    $region3: #{policynet_forward.1} parent=1 // loop_header
      %s24 = sphi 0, %s28
      %p25 = scmp.ge.s32.totalorder %s24, 4
      %s34 = sphi 0, %s36
      %s37 = sphi 0, %s34
      %s38 = sphi 0, %s37
      %s54 = sphi 0, %s38
      %s58 = sphi 0, %s58
      %s60 = sphi 0, %s58
      %s61 = sphi 0, %s60
      %s75 = sphi 0, %s61
      %s79 = sphi 0, %s79
      %s81 = sphi 0, %s79
      %s82 = sphi 0, %s81
      %s96 = sphi 0, %s82
      %s100 = sphi 0, %s100
      %s102 = sphi 0, %s100
      %s103 = sphi 0, %s102
      %s117 = sphi 0, %s103
      %s121 = sphi 0, %s121
      %s123 = sphi 0, %s121
      %s124 = sphi 0, %s123
      %s138 = sphi 0, %s124
      %s142 = sphi 0, %s142
      %s144 = sphi 0, %s142
      %s145 = sphi 0, %s144
      %s159 = sphi 0, %s145
      %s163 = sphi 0, %s163
      %s165 = sphi 0, %s163
      %s166 = sphi 0, %s165
      %s180 = sphi 0, %s166
      %s184 = sphi 0, %s184
      %s186 = sphi 0, %s184
      %s187 = sphi 0, %s186
      %s201 = sphi 0, %s187
      %s205 = sphi 0, %s205
      %s207 = sphi 0, %s205
      %s208 = sphi 0, %s207
      %s222 = sphi 0, %s208
      %s226 = sphi 0, %s226
      %s228 = sphi 0, %s226
      %s229 = sphi 0, %s228
      %s243 = sphi 0, %s229
      %s247 = sphi 0, %s247
      %s249 = sphi 0, %s247
      %s250 = sphi 0, %s249
      %s264 = sphi 0, %s250
      %s268 = sphi 0, %s268
      %s270 = sphi 0, %s268
      %s271 = sphi 0, %s270
      %s285 = sphi 0, %s271
      %s289 = sphi 0, %s289
      %s291 = sphi 0, %s289
      %s292 = sphi 0, %s291
      %s306 = sphi 0, %s292
      %s312 = sphi 0, %s314
      %s315 = sphi 0, %s312
      %s316 = sphi 0, %s315
      %s332 = sphi 0, %s316
    $region4: #{policynet_forward.1} parent=1 // loop_header_branch
      %27 = sbr.rel (%p25) target = $region8
    $region5: #{policynet_forward.1} parent=1 // loop_body
      %s29 = ssub.s32 %s24, 1
      %s30 = ssub.s32 %s24, 2
      %s31 = sadd.s32 %s24, 1
      %s32 = ssub.s32 %s24, %s31
      %p33 = scmp.eq.s32.totalorder %s32, 0
      %s35 = sadd.s32 %s34, 1
      %s36 = scalar_select %p33, %s34, %s35
      %p39 = pneg %p33
      %p40 = scmp.eq.s32.totalorder %s24, 1
      %p41 = por %p39, %p40
      %p42 = scmp.ne.s32.totalorder %s34, %s37
      %p43 = scmp.eq.s32.totalorder %s24, 0
      %p44 = por %p42, %p43
      %p45 = scmp.ne.s32.totalorder %s34, %s37
      %p46 = scmp.eq.s32.totalorder %s29, 1
      %p47 = por %p45, %p46
      %p48 = scmp.ne.s32.totalorder %s37, %s38
      %p49 = scmp.eq.s32.totalorder %s29, 0
      %p50 = por %p48, %p49
      %p51 = scmp.ne.s32.totalorder %s37, %s38
      %p52 = scmp.eq.s32.totalorder %s30, 1
      %p53 = por %p51, %p52
      %p55 = scmp.ne.s32.totalorder %s38, %s54
      %p56 = scmp.eq.s32.totalorder %s30, 0
      %p57 = por %p55, %p56
      %s59 = sadd.s32 %s58, 1
      %p62 = scmp.eq.s32.totalorder %s24, 1
      %p63 = scmp.ne.s32.totalorder %s58, %s60
      %p64 = scmp.eq.s32.totalorder %s24, 0
      %p65 = por %p63, %p64
      %p66 = scmp.ne.s32.totalorder %s58, %s60
      %p67 = scmp.eq.s32.totalorder %s29, 1
      %p68 = por %p66, %p67
      %p69 = scmp.ne.s32.totalorder %s60, %s61
      %p70 = scmp.eq.s32.totalorder %s29, 0
      %p71 = por %p69, %p70
      %p72 = scmp.ne.s32.totalorder %s60, %s61
      %p73 = scmp.eq.s32.totalorder %s30, 1
      %p74 = por %p72, %p73
      %p76 = scmp.ne.s32.totalorder %s61, %s75
      %p77 = scmp.eq.s32.totalorder %s30, 0
      %p78 = por %p76, %p77
      %s80 = sadd.s32 %s79, 1
      %p83 = scmp.eq.s32.totalorder %s24, 1
      %p84 = scmp.ne.s32.totalorder %s79, %s81
      %p85 = scmp.eq.s32.totalorder %s24, 0
      %p86 = por %p84, %p85
      %p87 = scmp.ne.s32.totalorder %s79, %s81
      %p88 = scmp.eq.s32.totalorder %s29, 1
      %p89 = por %p87, %p88
      %p90 = scmp.ne.s32.totalorder %s81, %s82
      %p91 = scmp.eq.s32.totalorder %s29, 0
      %p92 = por %p90, %p91
      %p93 = scmp.ne.s32.totalorder %s81, %s82
      %p94 = scmp.eq.s32.totalorder %s30, 1
      %p95 = por %p93, %p94
      %p97 = scmp.ne.s32.totalorder %s82, %s96
      %p98 = scmp.eq.s32.totalorder %s30, 0
      %p99 = por %p97, %p98
      %s101 = sadd.s32 %s100, 1
      %p104 = scmp.eq.s32.totalorder %s24, 1
      %p105 = scmp.ne.s32.totalorder %s100, %s102
      %p106 = scmp.eq.s32.totalorder %s24, 0
      %p107 = por %p105, %p106
      %p108 = scmp.ne.s32.totalorder %s100, %s102
      %p109 = scmp.eq.s32.totalorder %s29, 1
      %p110 = por %p108, %p109
      %p111 = scmp.ne.s32.totalorder %s102, %s103
      %p112 = scmp.eq.s32.totalorder %s29, 0
      %p113 = por %p111, %p112
      %p114 = scmp.ne.s32.totalorder %s102, %s103
      %p115 = scmp.eq.s32.totalorder %s30, 1
      %p116 = por %p114, %p115
      %p118 = scmp.ne.s32.totalorder %s103, %s117
      %p119 = scmp.eq.s32.totalorder %s30, 0
      %p120 = por %p118, %p119
      %s122 = sadd.s32 %s121, 1
      %p125 = scmp.eq.s32.totalorder %s24, 1
      %p126 = scmp.ne.s32.totalorder %s121, %s123
      %p127 = scmp.eq.s32.totalorder %s24, 0
      %p128 = por %p126, %p127
      %p129 = scmp.ne.s32.totalorder %s121, %s123
      %p130 = scmp.eq.s32.totalorder %s29, 1
      %p131 = por %p129, %p130
      %p132 = scmp.ne.s32.totalorder %s123, %s124
      %p133 = scmp.eq.s32.totalorder %s29, 0
      %p134 = por %p132, %p133
      %p135 = scmp.ne.s32.totalorder %s123, %s124
      %p136 = scmp.eq.s32.totalorder %s30, 1
      %p137 = por %p135, %p136
      %p139 = scmp.ne.s32.totalorder %s124, %s138
      %p140 = scmp.eq.s32.totalorder %s30, 0
      %p141 = por %p139, %p140
      %s143 = sadd.s32 %s142, 1
      %p146 = scmp.eq.s32.totalorder %s24, 1
      %p147 = scmp.ne.s32.totalorder %s142, %s144
      %p148 = scmp.eq.s32.totalorder %s24, 0
      %p149 = por %p147, %p148
      %p150 = scmp.ne.s32.totalorder %s142, %s144
      %p151 = scmp.eq.s32.totalorder %s29, 1
      %p152 = por %p150, %p151
      %p153 = scmp.ne.s32.totalorder %s144, %s145
      %p154 = scmp.eq.s32.totalorder %s29, 0
      %p155 = por %p153, %p154
      %p156 = scmp.ne.s32.totalorder %s144, %s145
      %p157 = scmp.eq.s32.totalorder %s30, 1
      %p158 = por %p156, %p157
      %p160 = scmp.ne.s32.totalorder %s145, %s159
      %p161 = scmp.eq.s32.totalorder %s30, 0
      %p162 = por %p160, %p161
      %s164 = sadd.s32 %s163, 1
      %p167 = scmp.eq.s32.totalorder %s24, 1
      %p168 = scmp.ne.s32.totalorder %s163, %s165
      %p169 = scmp.eq.s32.totalorder %s24, 0
      %p170 = por %p168, %p169
      %p171 = scmp.ne.s32.totalorder %s163, %s165
      %p172 = scmp.eq.s32.totalorder %s29, 1
      %p173 = por %p171, %p172
      %p174 = scmp.ne.s32.totalorder %s165, %s166
      %p175 = scmp.eq.s32.totalorder %s29, 0
      %p176 = por %p174, %p175
      %p177 = scmp.ne.s32.totalorder %s165, %s166
      %p178 = scmp.eq.s32.totalorder %s30, 1
      %p179 = por %p177, %p178
      %p181 = scmp.ne.s32.totalorder %s166, %s180
      %p182 = scmp.eq.s32.totalorder %s30, 0
      %p183 = por %p181, %p182
      %s185 = sadd.s32 %s184, 1
      %p188 = scmp.eq.s32.totalorder %s24, 1
      %p189 = scmp.ne.s32.totalorder %s184, %s186
      %p190 = scmp.eq.s32.totalorder %s24, 0
      %p191 = por %p189, %p190
      %p192 = scmp.ne.s32.totalorder %s184, %s186
      %p193 = scmp.eq.s32.totalorder %s29, 1
      %p194 = por %p192, %p193
      %p195 = scmp.ne.s32.totalorder %s186, %s187
      %p196 = scmp.eq.s32.totalorder %s29, 0
      %p197 = por %p195, %p196
      %p198 = scmp.ne.s32.totalorder %s186, %s187
      %p199 = scmp.eq.s32.totalorder %s30, 1
      %p200 = por %p198, %p199
      %p202 = scmp.ne.s32.totalorder %s187, %s201
      %p203 = scmp.eq.s32.totalorder %s30, 0
      %p204 = por %p202, %p203
      %s206 = sadd.s32 %s205, 1
      %p209 = scmp.eq.s32.totalorder %s24, 1
      %p210 = scmp.ne.s32.totalorder %s205, %s207
      %p211 = scmp.eq.s32.totalorder %s24, 0
      %p212 = por %p210, %p211
      %p213 = scmp.ne.s32.totalorder %s205, %s207
      %p214 = scmp.eq.s32.totalorder %s29, 1
      %p215 = por %p213, %p214
      %p216 = scmp.ne.s32.totalorder %s207, %s208
      %p217 = scmp.eq.s32.totalorder %s29, 0
      %p218 = por %p216, %p217
      %p219 = scmp.ne.s32.totalorder %s207, %s208
      %p220 = scmp.eq.s32.totalorder %s30, 1
      %p221 = por %p219, %p220
      %p223 = scmp.ne.s32.totalorder %s208, %s222
      %p224 = scmp.eq.s32.totalorder %s30, 0
      %p225 = por %p223, %p224
      %s227 = sadd.s32 %s226, 1
      %p230 = scmp.eq.s32.totalorder %s24, 1
      %p231 = scmp.ne.s32.totalorder %s226, %s228
      %p232 = scmp.eq.s32.totalorder %s24, 0
      %p233 = por %p231, %p232
      %p234 = scmp.ne.s32.totalorder %s226, %s228
      %p235 = scmp.eq.s32.totalorder %s29, 1
      %p236 = por %p234, %p235
      %p237 = scmp.ne.s32.totalorder %s228, %s229
      %p238 = scmp.eq.s32.totalorder %s29, 0
      %p239 = por %p237, %p238
      %p240 = scmp.ne.s32.totalorder %s228, %s229
      %p241 = scmp.eq.s32.totalorder %s30, 1
      %p242 = por %p240, %p241
      %p244 = scmp.ne.s32.totalorder %s229, %s243
      %p245 = scmp.eq.s32.totalorder %s30, 0
      %p246 = por %p244, %p245
      %s248 = sadd.s32 %s247, 1
      %p251 = scmp.eq.s32.totalorder %s24, 1
      %p252 = scmp.ne.s32.totalorder %s247, %s249
      %p253 = scmp.eq.s32.totalorder %s24, 0
      %p254 = por %p252, %p253
      %p255 = scmp.ne.s32.totalorder %s247, %s249
      %p256 = scmp.eq.s32.totalorder %s29, 1
      %p257 = por %p255, %p256
      %p258 = scmp.ne.s32.totalorder %s249, %s250
      %p259 = scmp.eq.s32.totalorder %s29, 0
      %p260 = por %p258, %p259
      %p261 = scmp.ne.s32.totalorder %s249, %s250
      %p262 = scmp.eq.s32.totalorder %s30, 1
      %p263 = por %p261, %p262
      %p265 = scmp.ne.s32.totalorder %s250, %s264
      %p266 = scmp.eq.s32.totalorder %s30, 0
      %p267 = por %p265, %p266
      %s269 = sadd.s32 %s268, 1
      %p272 = scmp.eq.s32.totalorder %s24, 1
      %p273 = scmp.ne.s32.totalorder %s268, %s270
      %p274 = scmp.eq.s32.totalorder %s24, 0
      %p275 = por %p273, %p274
      %p276 = scmp.ne.s32.totalorder %s268, %s270
      %p277 = scmp.eq.s32.totalorder %s29, 1
      %p278 = por %p276, %p277
      %p279 = scmp.ne.s32.totalorder %s270, %s271
      %p280 = scmp.eq.s32.totalorder %s29, 0
      %p281 = por %p279, %p280
      %p282 = scmp.ne.s32.totalorder %s270, %s271
      %p283 = scmp.eq.s32.totalorder %s30, 1
      %p284 = por %p282, %p283
      %p286 = scmp.ne.s32.totalorder %s271, %s285
      %p287 = scmp.eq.s32.totalorder %s30, 0
      %p288 = por %p286, %p287
      %s290 = sadd.s32 %s289, 1
      %p293 = scmp.eq.s32.totalorder %s24, 1
      %p294 = scmp.ne.s32.totalorder %s289, %s291
      %p295 = scmp.eq.s32.totalorder %s24, 0
      %p296 = por %p294, %p295
      %p297 = scmp.ne.s32.totalorder %s289, %s291
      %p298 = scmp.eq.s32.totalorder %s29, 1
      %p299 = por %p297, %p298
      %p300 = scmp.ne.s32.totalorder %s291, %s292
      %p301 = scmp.eq.s32.totalorder %s29, 0
      %p302 = por %p300, %p301
      %p303 = scmp.ne.s32.totalorder %s291, %s292
      %p304 = scmp.eq.s32.totalorder %s30, 1
      %p305 = por %p303, %p304
      %p307 = scmp.ne.s32.totalorder %s292, %s306
      %p308 = scmp.eq.s32.totalorder %s30, 0
      %p309 = por %p307, %p308
      %s310 = ssub.s32 %s24, %s31
      %p311 = scmp.eq.s32.totalorder %s310, 0
      %s313 = sadd.s32 %s312, 1
      %s314 = scalar_select %p311, %s312, %s313
      %p317 = pneg %p311
      %p318 = scmp.eq.s32.totalorder %s24, 1
      %p319 = por %p317, %p318
      %p320 = scmp.ne.s32.totalorder %s312, %s315
      %p321 = scmp.eq.s32.totalorder %s24, 0
      %p322 = por %p320, %p321
      %p323 = scmp.ne.s32.totalorder %s312, %s315
      %p324 = scmp.eq.s32.totalorder %s29, 1
      %p325 = por %p323, %p324
      %p326 = scmp.ne.s32.totalorder %s315, %s316
      %p327 = scmp.eq.s32.totalorder %s29, 0
      %p328 = por %p326, %p327
      %p329 = scmp.ne.s32.totalorder %s315, %s316
      %p330 = scmp.eq.s32.totalorder %s30, 1
      %p331 = por %p329, %p330
      %p333 = scmp.ne.s32.totalorder %s316, %s332
      %p334 = scmp.eq.s32.totalorder %s30, 0
      %p335 = por %p333, %p334
      %p336 = scmp.le.s32.totalorder 1, %s24
      %p337 = scmp.lt.s32.totalorder %s24, 3
      %p338 = pnand %p336, %p337
      %p339 = pneg %p338
      // Predicated region
      $region9: #{policynet_forward.1} parent=5 // pred_check
        _
      $region10: #{policynet_forward.1} parent=5 // pred_check_branch
        %341 = sbr.rel (%p338) target = $region12
      $region11: #{policynet_forward.1} parent=5 // pred_region
        %s342 = ssub.s32 %s24, 1
        // Predicated region
        $region13: #{policynet_forward.1} parent=11 // pred_check
          %p343 = pneg %p71
        $region14: #{policynet_forward.1} parent=11 // pred_check_branch
          %345 = sbr.rel (%p343) target = $region16
        $region15: #{policynet_forward.1} parent=11 // pred_region
          _
        $region16: #{policynet_forward.1} parent=11 // pred_fallthru
          _
        // Predicated region
        $region17: #{policynet_forward.1} parent=11 // pred_check
          %p346 = pneg %p92
        $region18: #{policynet_forward.1} parent=11 // pred_check_branch
          %348 = sbr.rel (%p346) target = $region20
        $region19: #{policynet_forward.1} parent=11 // pred_region
          %s350 = ssub.s32 28672, 28672
          %351 = vsyncadd [#allocation3], %s350
          %s352 = sshll.u32 [#allocation2], 4
          %s353 = int_to_ptr.vmem [resolvable:$true] %s352
          %358 = dma.hbm_to_vmem [thread:$0]  %s2, 28672, %s353, [#allocation3], 256, 256, 16
        $region20: #{policynet_forward.1} parent=11 // pred_fallthru
          _
        // Predicated region
        $region21: #{policynet_forward.1} parent=11 // pred_check
          %p359 = pneg %p113
        $region22: #{policynet_forward.1} parent=11 // pred_check_branch
          %361 = sbr.rel (%p359) target = $region24
        $region23: #{policynet_forward.1} parent=11 // pred_region
          %s363 = ssub.s32 64, 64
          %364 = vsyncadd [#allocation5], %s363
          %s366 = sshll.u32 [#allocation4], 4
          %s367 = int_to_ptr.vmem [resolvable:$true] %s366
          %369 = dma.hbm_to_vmem [thread:$0]  %s3, 64, %s367, [#allocation5]
        $region24: #{policynet_forward.1} parent=11 // pred_fallthru
          _
        // Predicated region
        $region25: #{policynet_forward.1} parent=11 // pred_check
          %p370 = pneg %p134
        $region26: #{policynet_forward.1} parent=11 // pred_check_branch
          %372 = sbr.rel (%p370) target = $region28
        $region27: #{policynet_forward.1} parent=11 // pred_region
          _
        $region28: #{policynet_forward.1} parent=11 // pred_fallthru
          _
        // Predicated region
        $region29: #{policynet_forward.1} parent=11 // pred_check
          %p373 = pneg %p155
        $region30: #{policynet_forward.1} parent=11 // pred_check_branch
          %375 = sbr.rel (%p373) target = $region32
        $region31: #{policynet_forward.1} parent=11 // pred_region
          %s377 = ssub.s32 40960, 40960
          %378 = vsyncadd [#allocation5], %s377
          %s379 = sshll.u32 [#allocation6], 4
          %s380 = int_to_ptr.vmem [resolvable:$true] %s379
          %385 = dma.hbm_to_vmem [thread:$0]  %s5, 40960, %s380, [#allocation5], 128, 128, 8
        $region32: #{policynet_forward.1} parent=11 // pred_fallthru
          _
        // Predicated region
        $region33: #{policynet_forward.1} parent=11 // pred_check
          %p386 = pneg %p176
        $region34: #{policynet_forward.1} parent=11 // pred_check_branch
          %388 = sbr.rel (%p386) target = $region36
        $region35: #{policynet_forward.1} parent=11 // pred_region
          %s390 = ssub.s32 32, 32
          %391 = vsyncadd [#allocation8], %s390
          %s393 = sshll.u32 [#allocation7], 4
          %s394 = int_to_ptr.vmem [resolvable:$true] %s393
          %396 = dma.hbm_to_vmem [thread:$0]  %s6, 32, %s394, [#allocation8]
        $region36: #{policynet_forward.1} parent=11 // pred_fallthru
          _
        // Predicated region
        $region37: #{policynet_forward.1} parent=11 // pred_check
          %p397 = pneg %p197
        $region38: #{policynet_forward.1} parent=11 // pred_check_branch
          %399 = sbr.rel (%p397) target = $region40
        $region39: #{policynet_forward.1} parent=11 // pred_region
          _
        $region40: #{policynet_forward.1} parent=11 // pred_fallthru
          _
        // Predicated region
        $region41: #{policynet_forward.1} parent=11 // pred_check
          %p400 = pneg %p218
        $region42: #{policynet_forward.1} parent=11 // pred_check_branch
          %402 = sbr.rel (%p400) target = $region44
        $region43: #{policynet_forward.1} parent=11 // pred_region
          %s404 = ssub.s32 10240, 10240
          %405 = vsyncadd [#allocation8], %s404
          %s406 = sshll.u32 [#allocation9], 4
          %s407 = int_to_ptr.vmem [resolvable:$true] %s406
          %412 = dma.hbm_to_vmem [thread:$0]  %s8, 10240, %s407, [#allocation8], 64, 64, 4
        $region44: #{policynet_forward.1} parent=11 // pred_fallthru
          _
        // Predicated region
        $region45: #{policynet_forward.1} parent=11 // pred_check
          %p413 = pneg %p239
        $region46: #{policynet_forward.1} parent=11 // pred_check_branch
          %415 = sbr.rel (%p413) target = $region48
        $region47: #{policynet_forward.1} parent=11 // pred_region
          %s417 = ssub.s32 16, 16
          %418 = vsyncadd [#allocation11], %s417
          %s420 = sshll.u32 [#allocation10], 4
          %s421 = int_to_ptr.vmem [resolvable:$true] %s420
          %423 = dma.hbm_to_vmem [thread:$0]  %s9, 16, %s421, [#allocation11]
        $region48: #{policynet_forward.1} parent=11 // pred_fallthru
          _
        // Predicated region
        $region49: #{policynet_forward.1} parent=11 // pred_check
          %p424 = pneg %p260
        $region50: #{policynet_forward.1} parent=11 // pred_check_branch
          %426 = sbr.rel (%p424) target = $region52
        $region51: #{policynet_forward.1} parent=11 // pred_region
          _
        $region52: #{policynet_forward.1} parent=11 // pred_fallthru
          _
        // Predicated region
        $region53: #{policynet_forward.1} parent=11 // pred_check
          %p427 = pneg %p281
        $region54: #{policynet_forward.1} parent=11 // pred_check_branch
          %429 = sbr.rel (%p427) target = $region56
        $region55: #{policynet_forward.1} parent=11 // pred_region
          %s431 = ssub.s32 5120, 5120
          %432 = vsyncadd [#allocation11], %s431
          %s433 = sshll.u32 [#allocation12], 4
          %s434 = int_to_ptr.vmem [resolvable:$true] %s433
          %439 = dma.hbm_to_vmem [thread:$0]  %s11, 5120, %s434, [#allocation11], 64, 64, 4
        $region56: #{policynet_forward.1} parent=11 // pred_fallthru
          _
        // Predicated region
        $region57: #{policynet_forward.1} parent=11 // pred_check
          %p440 = pneg %p302
        $region58: #{policynet_forward.1} parent=11 // pred_check_branch
          %442 = sbr.rel (%p440) target = $region60
        $region59: #{policynet_forward.1} parent=11 // pred_region
          %s444 = ssub.s32 16, 16
          %445 = vsyncadd [#allocation14], %s444
          %s447 = sshll.u32 [#allocation13], 4
          %s448 = int_to_ptr.vmem [resolvable:$true] %s447
          %450 = dma.hbm_to_vmem [thread:$0]  %s12, 16, %s448, [#allocation14]
        $region60: #{policynet_forward.1} parent=11 // pred_fallthru
          _
      $region12: #{policynet_forward.1} parent=5 // pred_fallthru
        _
      %p451 = scmp.lt.s32.totalorder %s24, 2
      // Predicated region
      $region61: #{policynet_forward.1} parent=5 // pred_check
        %p452 = pneg %p451
      $region62: #{policynet_forward.1} parent=5 // pred_check_branch
        %454 = sbr.rel (%p452) target = $region64
      $region63: #{policynet_forward.1} parent=5 // pred_region
        // Predicated region
        $region65: #{policynet_forward.1} parent=63 // pred_check
          %p455 = pneg %p44
        $region66: #{policynet_forward.1} parent=63 // pred_check_branch
          %457 = sbr.rel (%p455) target = $region68
        $region67: #{policynet_forward.1} parent=63 // pred_region
          %p458 = scmp.lt.s32.totalorder %s24, 1
          %s459 = scalar_select %p458, %s24, 1
          %s460 = smul.addr %s459, 4
          %s461 = smul.addr %s460, 4
          %s462 = scalar_lea.vmem %s0, %s461
        $region68: #{policynet_forward.1} parent=63 // pred_fallthru
          _
      $region64: #{policynet_forward.1} parent=5 // pred_fallthru
        _
      %p463 = scmp.le.s32.totalorder 1, %s24
      %p464 = scmp.lt.s32.totalorder %s24, 3
      %p465 = pnand %p463, %p464
      %p466 = pneg %p465
      // Predicated region
      $region69: #{policynet_forward.1} parent=5 // pred_check
        _
      $region70: #{policynet_forward.1} parent=5 // pred_check_branch
        %468 = sbr.rel (%p465) target = $region72
      $region71: #{policynet_forward.1} parent=5 // pred_region
        %s469 = ssub.s32 %s24, 1
        // Predicated region
        $region73: #{policynet_forward.1} parent=71 // pred_check
          %p470 = pneg %p92
        $region74: #{policynet_forward.1} parent=71 // pred_check_branch
          %472 = sbr.rel (%p470) target = $region76
        $region75: #{policynet_forward.1} parent=71 // pred_region
          %473 = dma.done [#allocation3], 28672
        $region76: #{policynet_forward.1} parent=71 // pred_fallthru
          _
        // Predicated region
        $region77: #{policynet_forward.1} parent=71 // pred_check
          %p474 = pneg %p113
        $region78: #{policynet_forward.1} parent=71 // pred_check_branch
          %476 = sbr.rel (%p474) target = $region80
        $region79: #{policynet_forward.1} parent=71 // pred_region
          %477 = dma.done [#allocation5], 64
        $region80: #{policynet_forward.1} parent=71 // pred_fallthru
          _
        // Predicated region
        $region81: #{policynet_forward.1} parent=71 // pred_check
          %p478 = pneg %p155
        $region82: #{policynet_forward.1} parent=71 // pred_check_branch
          %480 = sbr.rel (%p478) target = $region84
        $region83: #{policynet_forward.1} parent=71 // pred_region
          %481 = dma.done [#allocation5], 40960
        $region84: #{policynet_forward.1} parent=71 // pred_fallthru
          _
        // Predicated region
        $region85: #{policynet_forward.1} parent=71 // pred_check
          %p482 = pneg %p176
        $region86: #{policynet_forward.1} parent=71 // pred_check_branch
          %484 = sbr.rel (%p482) target = $region88
        $region87: #{policynet_forward.1} parent=71 // pred_region
          %485 = dma.done [#allocation8], 32
        $region88: #{policynet_forward.1} parent=71 // pred_fallthru
          _
        // Predicated region
        $region89: #{policynet_forward.1} parent=71 // pred_check
          %p486 = pneg %p218
        $region90: #{policynet_forward.1} parent=71 // pred_check_branch
          %488 = sbr.rel (%p486) target = $region92
        $region91: #{policynet_forward.1} parent=71 // pred_region
          %489 = dma.done [#allocation8], 10240
        $region92: #{policynet_forward.1} parent=71 // pred_fallthru
          _
        // Predicated region
        $region93: #{policynet_forward.1} parent=71 // pred_check
          %p490 = pneg %p239
        $region94: #{policynet_forward.1} parent=71 // pred_check_branch
          %492 = sbr.rel (%p490) target = $region96
        $region95: #{policynet_forward.1} parent=71 // pred_region
          %493 = dma.done [#allocation11], 16
        $region96: #{policynet_forward.1} parent=71 // pred_fallthru
          _
        // Predicated region
        $region97: #{policynet_forward.1} parent=71 // pred_check
          %p494 = pneg %p281
        $region98: #{policynet_forward.1} parent=71 // pred_check_branch
          %496 = sbr.rel (%p494) target = $region100
        $region99: #{policynet_forward.1} parent=71 // pred_region
          %497 = dma.done [#allocation11], 5120
        $region100: #{policynet_forward.1} parent=71 // pred_fallthru
          _
        // Predicated region
        $region101: #{policynet_forward.1} parent=71 // pred_check
          %p498 = pneg %p302
        $region102: #{policynet_forward.1} parent=71 // pred_check_branch
          %500 = sbr.rel (%p498) target = $region104
        $region103: #{policynet_forward.1} parent=71 // pred_region
          %501 = dma.done [#allocation14], 16
        $region104: #{policynet_forward.1} parent=71 // pred_fallthru
          _
        %p502 = scmp.lt.s32.totalorder %s29, 1
        %s503 = scalar_select %p502, %s29, 1
        %s504 = smul.addr %s503, 4
        %s505 = smul.addr %s504, 4
        %s506 = scalar_lea.vmem %s0, %s505
        %p507 = pneg %p50
        %p508 = pneg %p47
        %p509 = pneg %p71
        %p510 = pneg %p68
        %p511 = pneg %p92
        %p512 = pneg %p89
        %p513 = pneg %p113
        %p514 = pneg %p110
        %p515 = pneg %p134
        %p516 = pneg %p131
        %p517 = pneg %p155
        %p518 = pneg %p152
        %p519 = pneg %p176
        %p520 = pneg %p173
        %p521 = pneg %p197
        %p522 = pneg %p194
        %p523 = pneg %p218
        %p524 = pneg %p215
        %p525 = pneg %p239
        %p526 = pneg %p236
        %p527 = pneg %p260
        %p528 = pneg %p257
        %p529 = pneg %p281
        %p530 = pneg %p278
        %p531 = pneg %p302
        %p532 = pneg %p299
        %p533 = pneg %p328
        %p534 = pneg %p325
        %p535 = scmp.lt.s32.totalorder %s29, 1
        %s536 = scalar_select %p535, %s29, 1
        %s537 = smul.addr %s536, 2
        %s538 = scalar_lea.vmem %s13, %s537
        %p539 = scmp.lt.s32.totalorder %s29, 1
        %s540 = scalar_select %p539, %s29, 1
        %s541 = smul.addr %s540, 4
        %s542 = smul.addr %s541, 4
        %s543 = scalar_lea.vmem %s0, %s542
        %p544 = scmp.lt.s32.totalorder %s29, 1
        %s545 = scalar_select %p544, %s29, 1
        %s546 = smul.addr %s545, 2
        %s547 = scalar_lea.vmem %s13, %s546
        %v549 = vld [vmem:[%s543] sm:$0xf]
        %v550 = vld [vmem:[%s543 + $0x4] sm:$0xf]
        %v551 = vld [vmem:[%s543 + $0x8] sm:$0xf]
        %v552 = vld [vmem:[%s543 + $0xc] sm:$0xf]
        %v553 = vld [vmem:[%s1] sm:$0xf]
        %v554 = vld [vmem:[%s1 + $0x4] sm:$0xf]
        %v555 = vld [vmem:[%s1 + $0x8] sm:$0xf]
        %v556 = vld [vmem:[%s1 + $0xc] sm:$0xf]
        %v557 = vld [vmem:[%s1 + $0x10] sm:$0xf]
        %v558 = vld [vmem:[%s1 + $0x14] sm:$0xf]
        %v559 = vld [vmem:[%s1 + $0x18] sm:$0xf]
        %v560 = vld [vmem:[%s1 + $0x1c] sm:$0xf]
        %v561 = vld [vmem:[%s1 + $0x20] sm:$0xf]
        %v562 = vld [vmem:[%s1 + $0x24] sm:$0xf]
        %v563 = vld [vmem:[%s1 + $0x28] sm:$0xf]
        %v564 = vld [vmem:[%s1 + $0x2c] sm:$0xf]
        %v565 = vld [vmem:[%s1 + $0x30] sm:$0xf]
        %v566 = vld [vmem:[%s1 + $0x34] sm:$0xf]
        %v581 = vunpack.c.l.b16 %v553
        %v582 = vunpack.c.l.b16 %v554
        %v583 = vunpack.c.l.b16 %v555
        %v584 = vunpack.c.l.b16 %v556
        %v585 = vunpack.c.l.b16 %v557
        %v586 = vunpack.c.l.b16 %v558
        %v587 = vunpack.c.l.b16 %v559
        %v588 = vunpack.c.l.b16 %v560
        %v589 = vunpack.c.l.b16 %v561
        %v590 = vunpack.c.l.b16 %v562
        %v591 = vunpack.c.l.b16 %v563
        %v592 = vunpack.c.l.b16 %v564
        %v593 = vunpack.c.l.b16 %v565
        %v594 = vunpack.c.l.b16 %v566
        %v595 = vpack.c.b16 %v582, %v581
        %v596 = vpack.c.b16 %v584, %v583
        %v597 = vpack.c.b16 %v586, %v585
        %v598 = vpack.c.b16 %v588, %v587
        %v599 = vpack.c.b16 %v590, %v589
        %v600 = vpack.c.b16 %v592, %v591
        %v601 = vpack.c.b16 %v594, %v593
        %v606 = vunpack.c.l.b16 %v549
        %v607 = vunpack.c.l.b16 %v550
        %v608 = vunpack.c.l.b16 %v551
        %v609 = vunpack.c.l.b16 %v552
        %v610 = vpack.c.b16 %v607, %v606
        %v611 = vpack.c.b16 %v609, %v608
        %vm614 = vcmask 261120
        %v616 = vsel %vm614, %v595, 0
        %v619 = vsel %vm614, %v596, 0
        %v622 = vsel %vm614, %v597, 0
        %v625 = vsel %vm614, %v598, 0
        %v628 = vsel %vm614, %v599, 0
        %v631 = vsel %vm614, %v600, 0
        %v634 = vsel %vm614, %v601, 0
        %636 = vmatprep.subr.bf16.mxu0 0
        %637 = vmatpush1.bf16.msra.mxu0 %v610
        %638 = vmatprep.subr.bf16.mxu0 0
        %639 = vmatpush1.bf16.msra.mxu0 %v611
        %640 = vmatprep.subr.bf16.mxu0 0
        %641 = vmatpush1.bf16.msra.mxu0 0
        %642 = vmatprep.subr.bf16.mxu0 0
        %643 = vmatpush1.bf16.msra.mxu0 0
        %644 = vmatprep.subr.bf16.mxu0 0
        %645 = vmatpush1.bf16.msra.mxu0 0
        %646 = vmatprep.subr.bf16.mxu0 0
        %647 = vmatpush1.bf16.msra.mxu0 0
        %648 = vmatprep.subr.bf16.mxu0 0
        %649 = vmatpush1.bf16.msra.mxu0 0
        %650 = vmatprep.subr.bf16.mxu0 0
        %651 = vmatpush1.bf16.msra.mxu0 0
        %652 = vmatprep.subr.bf16.mxu0 0
        %653 = vmatpush1.bf16.msra.mxu0 0
        %654 = vmatprep.subr.bf16.mxu0 0
        %655 = vmatpush1.bf16.msra.mxu0 0
        %656 = vmatprep.subr.bf16.mxu0 0
        %657 = vmatpush1.bf16.msra.mxu0 0
        %658 = vmatprep.subr.bf16.mxu0 0
        %659 = vmatpush1.bf16.msra.mxu0 0
        %660 = vmatprep.subr.bf16.mxu0 0
        %661 = vmatpush1.bf16.msra.mxu0 0
        %662 = vmatprep.subr.bf16.mxu0 0
        %663 = vmatpush1.bf16.msra.mxu0 0
        %664 = vmatprep.subr.bf16.mxu0 0
        %665 = vmatpush1.bf16.msra.mxu0 0
        %666 = vmatprep.subr.bf16.mxu0 0
        %667 = vmatpush1.bf16.msra.mxu0 0
        %668 = vmatprep.mubr.bf16.mxu0 0
        %669 = vmatmul.mubr.bf16.gmra.mrb[0].mxu0 %v616
        %v670 = vpop.f32.mrb[0].mxu0
        %v671 = vadd.f32 0.0, %v670
        %v672 = vpop.f32.mrb[0].mxu0
        %v673 = vpop.f32.mrb[0].mxu0
        %v674 = vadd.f32 0.0, %v673
        %v675 = vpop.f32.mrb[0].mxu0
        %676 = vmatprep.mubr.bf16.mxu0 0
        %677 = vmatmul.mubr.bf16.gmra.mrb[0].mxu0 %v619
        %v678 = vpop.f32.mrb[0].mxu0
        %v679 = vadd.f32 0.0, %v678
        %v680 = vpop.f32.mrb[0].mxu0
        %v681 = vpop.f32.mrb[0].mxu0
        %v682 = vadd.f32 0.0, %v681
        %v683 = vpop.f32.mrb[0].mxu0
        %684 = vmatprep.mubr.bf16.mxu0 0
        %685 = vmatmul.mubr.bf16.gmra.mrb[0].mxu0 %v622
        %v686 = vpop.f32.mrb[0].mxu0
        %v687 = vadd.f32 0.0, %v686
        %v688 = vpop.f32.mrb[0].mxu0
        %v689 = vpop.f32.mrb[0].mxu0
        %v690 = vadd.f32 0.0, %v689
        %v691 = vpop.f32.mrb[0].mxu0
        %692 = vmatprep.mubr.bf16.mxu0 0
        %693 = vmatmul.mubr.bf16.gmra.mrb[0].mxu0 %v625
        %v694 = vpop.f32.mrb[0].mxu0
        %v695 = vadd.f32 0.0, %v694
        %v696 = vpop.f32.mrb[0].mxu0
        %v697 = vpop.f32.mrb[0].mxu0
        %v698 = vadd.f32 0.0, %v697
        %v699 = vpop.f32.mrb[0].mxu0
        %700 = vmatprep.mubr.bf16.mxu0 0
        %701 = vmatmul.mubr.bf16.gmra.mrb[0].mxu0 %v628
        %v702 = vpop.f32.mrb[0].mxu0
        %v703 = vadd.f32 0.0, %v702
        %v704 = vpop.f32.mrb[0].mxu0
        %v705 = vpop.f32.mrb[0].mxu0
        %v706 = vadd.f32 0.0, %v705
        %v707 = vpop.f32.mrb[0].mxu0
        %708 = vmatprep.mubr.bf16.mxu0 0
        %709 = vmatmul.mubr.bf16.gmra.mrb[0].mxu0 %v631
        %v710 = vpop.f32.mrb[0].mxu0
        %v711 = vadd.f32 0.0, %v710
        %v712 = vpop.f32.mrb[0].mxu0
        %v713 = vpop.f32.mrb[0].mxu0
        %v714 = vadd.f32 0.0, %v713
        %v715 = vpop.f32.mrb[0].mxu0
        %716 = vmatprep.mubr.bf16.mxu0 0
        %717 = vmatmul.mubr.bf16.gmra.mrb[0].mxu0 %v634
        %v718 = vpop.f32.mrb[0].mxu0
        %v719 = vadd.f32 0.0, %v718
        %v720 = vpop.f32.mrb[0].mxu0
        %v721 = vpop.f32.mrb[0].mxu0
        %v722 = vadd.f32 0.0, %v721
        %v723 = vpop.f32.mrb[0].mxu0
        %724 = vdwg.mxu0
        %v725 = vpack.c.bf16 %v674, %v671
        %v726 = vpack.c.bf16 %v682, %v679
        %v727 = vpack.c.bf16 %v690, %v687
        %v728 = vpack.c.bf16 %v698, %v695
        %v729 = vpack.c.bf16 %v706, %v703
        %v730 = vpack.c.bf16 %v714, %v711
        %v731 = vpack.c.bf16 %v722, %v719
        %v732 = vld [vmem:[#allocation2] sm:$0xff]
        %v733 = vld [vmem:[#allocation2 + $0x8] sm:$0xff]
        %v734 = vld [vmem:[#allocation2 + $0x10] sm:$0xff]
        %v735 = vld [vmem:[#allocation2 + $0x18] sm:$0xff]
        %v736 = vld [vmem:[#allocation2 + $0x20] sm:$0xff]
        %v737 = vld [vmem:[#allocation2 + $0x28] sm:$0xff]
        %v738 = vld [vmem:[#allocation2 + $0x30] sm:$0xff]
        %v739 = vld [vmem:[#allocation2 + $0x38] sm:$0xff]
        %v740 = vld [vmem:[#allocation2 + $0x40] sm:$0xff]
        %v741 = vld [vmem:[#allocation2 + $0x48] sm:$0xff]
        %v742 = vld [vmem:[#allocation2 + $0x50] sm:$0xff]
        %v743 = vld [vmem:[#allocation2 + $0x58] sm:$0xff]
        %v744 = vld [vmem:[#allocation2 + $0x60] sm:$0xff]
        %v745 = vld [vmem:[#allocation2 + $0x68] sm:$0xff]
        %v746 = vld [vmem:[#allocation2 + $0x70] sm:$0xff]
        %v747 = vld [vmem:[#allocation2 + $0x78] sm:$0xff]
        %v748 = vld [vmem:[#allocation2 + $0x80] sm:$0xff]
        %v749 = vld [vmem:[#allocation2 + $0x88] sm:$0xff]
        %v750 = vld [vmem:[#allocation2 + $0x90] sm:$0xff]
        %v751 = vld [vmem:[#allocation2 + $0x98] sm:$0xff]
        %v752 = vld [vmem:[#allocation2 + $0xa0] sm:$0xff]
        %v753 = vld [vmem:[#allocation2 + $0xa8] sm:$0xff]
        %v754 = vld [vmem:[#allocation2 + $0xb0] sm:$0xff]
        %v755 = vld [vmem:[#allocation2 + $0xb8] sm:$0xff]
        %v756 = vld [vmem:[#allocation2 + $0xc0] sm:$0xff]
        %v757 = vld [vmem:[#allocation2 + $0xc8] sm:$0xff]
        %v758 = vld [vmem:[#allocation2 + $0xd0] sm:$0xff]
        %v759 = vld [vmem:[#allocation2 + $0xd8] sm:$0xff]
        %v760 = vld [vmem:[#allocation2 + $0xe0] sm:$0xff]
        %v761 = vld [vmem:[#allocation2 + $0xe8] sm:$0xff]
        %v762 = vld [vmem:[#allocation2 + $0xf0] sm:$0xff]
        %v763 = vld [vmem:[#allocation2 + $0xf8] sm:$0xff]
        %s764 = scalar_lea.vmem [#allocation2], 256
        %v765 = vld [vmem:[%s764] sm:$0xff]
        %v766 = vld [vmem:[%s764 + $0x8] sm:$0xff]
        %v767 = vld [vmem:[%s764 + $0x10] sm:$0xff]
        %v768 = vld [vmem:[%s764 + $0x18] sm:$0xff]
        %v769 = vld [vmem:[%s764 + $0x20] sm:$0xff]
        %v770 = vld [vmem:[%s764 + $0x28] sm:$0xff]
        %v771 = vld [vmem:[%s764 + $0x30] sm:$0xff]
        %v772 = vld [vmem:[%s764 + $0x38] sm:$0xff]
        %v773 = vld [vmem:[%s764 + $0x40] sm:$0xff]
        %v774 = vld [vmem:[%s764 + $0x48] sm:$0xff]
        %v775 = vld [vmem:[%s764 + $0x50] sm:$0xff]
        %v776 = vld [vmem:[%s764 + $0x58] sm:$0xff]
        %v777 = vld [vmem:[%s764 + $0x60] sm:$0xff]
        %v778 = vld [vmem:[%s764 + $0x68] sm:$0xff]
        %v779 = vld [vmem:[%s764 + $0x70] sm:$0xff]
        %v780 = vld [vmem:[%s764 + $0x78] sm:$0xff]
        %v781 = vld [vmem:[%s764 + $0x80] sm:$0xff]
        %v782 = vld [vmem:[%s764 + $0x88] sm:$0xff]
        %v783 = vld [vmem:[%s764 + $0x90] sm:$0xff]
        %v784 = vld [vmem:[%s764 + $0x98] sm:$0xff]
        %v785 = vld [vmem:[%s764 + $0xa0] sm:$0xff]
        %v786 = vld [vmem:[%s764 + $0xa8] sm:$0xff]
        %v787 = vld [vmem:[%s764 + $0xb0] sm:$0xff]
        %v788 = vld [vmem:[%s764 + $0xb8] sm:$0xff]
        %v789 = vld [vmem:[%s764 + $0xc0] sm:$0xff]
        %v790 = vld [vmem:[%s764 + $0xc8] sm:$0xff]
        %v791 = vld [vmem:[%s764 + $0xd0] sm:$0xff]
        %v792 = vld [vmem:[%s764 + $0xd8] sm:$0xff]
        %v793 = vld [vmem:[%s764 + $0xe0] sm:$0xff]
        %v794 = vld [vmem:[%s764 + $0xe8] sm:$0xff]
        %v795 = vld [vmem:[%s764 + $0xf0] sm:$0xff]
        %v796 = vld [vmem:[%s764 + $0xf8] sm:$0xff]
        %v829 = vunpack.c.l.b16 %v765
        %v830 = vunpack.c.h.b16 %v765
        %v831 = vunpack.c.l.b16 %v766
        %v832 = vunpack.c.h.b16 %v766
        %v833 = vunpack.c.l.b16 %v767
        %v834 = vunpack.c.h.b16 %v767
        %v835 = vunpack.c.l.b16 %v768
        %v836 = vunpack.c.h.b16 %v768
        %v837 = vunpack.c.l.b16 %v769
        %v838 = vunpack.c.h.b16 %v769
        %v839 = vunpack.c.l.b16 %v770
        %v840 = vunpack.c.h.b16 %v770
        %v841 = vunpack.c.l.b16 %v771
        %v842 = vunpack.c.h.b16 %v771
        %v843 = vunpack.c.l.b16 %v772
        %v844 = vunpack.c.h.b16 %v772
        %v845 = vunpack.c.l.b16 %v773
        %v846 = vunpack.c.h.b16 %v773
        %v847 = vunpack.c.l.b16 %v774
        %v848 = vunpack.c.h.b16 %v774
        %v849 = vunpack.c.l.b16 %v775
        %v850 = vunpack.c.h.b16 %v775
        %v851 = vunpack.c.l.b16 %v776
        %v852 = vunpack.c.h.b16 %v776
        %v853 = vunpack.c.l.b16 %v777
        %v854 = vunpack.c.h.b16 %v777
        %v855 = vunpack.c.l.b16 %v778
        %v856 = vunpack.c.h.b16 %v778
        %v857 = vunpack.c.l.b16 %v779
        %v858 = vunpack.c.h.b16 %v779
        %v859 = vunpack.c.l.b16 %v780
        %v860 = vunpack.c.h.b16 %v780
        %v861 = vunpack.c.l.b16 %v781
        %v862 = vunpack.c.h.b16 %v781
        %v863 = vunpack.c.l.b16 %v782
        %v864 = vunpack.c.h.b16 %v782
        %v865 = vunpack.c.l.b16 %v783
        %v866 = vunpack.c.h.b16 %v783
        %v867 = vunpack.c.l.b16 %v784
        %v868 = vunpack.c.h.b16 %v784
        %v869 = vunpack.c.l.b16 %v785
        %v870 = vunpack.c.h.b16 %v785
        %v871 = vunpack.c.l.b16 %v786
        %v872 = vunpack.c.h.b16 %v786
        %v873 = vunpack.c.l.b16 %v787
        %v874 = vunpack.c.h.b16 %v787
        %v875 = vunpack.c.l.b16 %v788
        %v876 = vunpack.c.h.b16 %v788
        %v877 = vunpack.c.l.b16 %v789
        %v878 = vunpack.c.h.b16 %v789
        %v879 = vunpack.c.l.b16 %v790
        %v880 = vunpack.c.h.b16 %v790
        %v881 = vunpack.c.l.b16 %v791
        %v882 = vunpack.c.h.b16 %v791
        %v883 = vunpack.c.l.b16 %v792
        %v884 = vunpack.c.h.b16 %v792
        %v885 = vunpack.c.l.b16 %v793
        %v886 = vunpack.c.h.b16 %v793
        %v887 = vunpack.c.l.b16 %v794
        %v888 = vunpack.c.h.b16 %v794
        %v889 = vunpack.c.l.b16 %v795
        %v890 = vunpack.c.h.b16 %v795
        %v891 = vunpack.c.l.b16 %v796
        %v892 = vunpack.c.h.b16 %v796
        %v893 = vpack.c.b16 %v833, %v829
        %v894 = vpack.c.b16 %v834, %v830
        %v895 = vpack.c.b16 %v835, %v831
        %v896 = vpack.c.b16 %v836, %v832
        %v897 = vpack.c.b16 %v841, %v837
        %v898 = vpack.c.b16 %v842, %v838
        %v899 = vpack.c.b16 %v843, %v839
        %v900 = vpack.c.b16 %v844, %v840
        %v901 = vpack.c.b16 %v849, %v845
        %v902 = vpack.c.b16 %v850, %v846
        %v903 = vpack.c.b16 %v851, %v847
        %v904 = vpack.c.b16 %v852, %v848
        %v905 = vpack.c.b16 %v857, %v853
        %v906 = vpack.c.b16 %v858, %v854
        %v907 = vpack.c.b16 %v859, %v855
        %v908 = vpack.c.b16 %v860, %v856
        %v909 = vpack.c.b16 %v865, %v861
        %v910 = vpack.c.b16 %v866, %v862
        %v911 = vpack.c.b16 %v867, %v863
        %v912 = vpack.c.b16 %v868, %v864
        %v913 = vpack.c.b16 %v873, %v869
        %v914 = vpack.c.b16 %v874, %v870
        %v915 = vpack.c.b16 %v875, %v871
        %v916 = vpack.c.b16 %v876, %v872
        %v917 = vpack.c.b16 %v881, %v877
        %v918 = vpack.c.b16 %v882, %v878
        %v919 = vpack.c.b16 %v883, %v879
        %v920 = vpack.c.b16 %v884, %v880
        %v921 = vpack.c.b16 %v889, %v885
        %v922 = vpack.c.b16 %v890, %v886
        %v923 = vpack.c.b16 %v891, %v887
        %v924 = vpack.c.b16 %v892, %v888
        %957 = vmatprep.subr.bf16.mxu0 %v894
        %958 = vmatpush1.bf16.msra.mxu0 %v893
        %959 = vmatprep.subr.bf16.mxu0 %v898
        %960 = vmatpush1.bf16.msra.mxu0 %v897
        %961 = vmatprep.subr.bf16.mxu0 %v902
        %962 = vmatpush1.bf16.msra.mxu0 %v901
        %963 = vmatprep.subr.bf16.mxu0 %v906
        %964 = vmatpush1.bf16.msra.mxu0 %v905
        %965 = vmatprep.subr.bf16.mxu0 %v910
        %966 = vmatpush1.bf16.msra.mxu0 %v909
        %967 = vmatprep.subr.bf16.mxu0 %v914
        %968 = vmatpush1.bf16.msra.mxu0 %v913
        %969 = vmatprep.subr.bf16.mxu0 %v918
        %970 = vmatpush1.bf16.msra.mxu0 %v917
        %971 = vmatprep.subr.bf16.mxu0 %v922
        %972 = vmatpush1.bf16.msra.mxu0 %v921
        %973 = vmatprep.subr.bf16.mxu0 0
        %974 = vmatpush1.bf16.msra.mxu0 0
        %975 = vmatprep.subr.bf16.mxu0 0
        %976 = vmatpush1.bf16.msra.mxu0 0
        %977 = vmatprep.subr.bf16.mxu0 0
        %978 = vmatpush1.bf16.msra.mxu0 0
        %979 = vmatprep.subr.bf16.mxu0 0
        %980 = vmatpush1.bf16.msra.mxu0 0
        %981 = vmatprep.subr.bf16.mxu0 0
        %982 = vmatpush1.bf16.msra.mxu0 0
        %983 = vmatprep.subr.bf16.mxu0 0
        %984 = vmatpush1.bf16.msra.mxu0 0
        %985 = vmatprep.subr.bf16.mxu0 0
        %986 = vmatpush1.bf16.msra.mxu0 0
        %987 = vmatprep.subr.bf16.mxu0 0
        %988 = vmatpush1.bf16.msra.mxu0 0
        %989 = vmatprep.mubr.bf16.mxu0 0
        %990 = vmatmul.mubr.bf16.gmra.mrb[0].mxu0 %v726
        %v991 = vpop.f32.mrb[0].mxu0
        %v992 = vadd.f32 0.0, %v991
        %v993 = vpop.f32.mrb[0].mxu0
        %v994 = vadd.f32 0.0, %v993
        %v995 = vpop.f32.mrb[0].mxu0
        %v996 = vadd.f32 0.0, %v995
        %v997 = vpop.f32.mrb[0].mxu0
        %v998 = vadd.f32 0.0, %v997
        %999 = vdwg.mxu0
        %1000 = vmatprep.subr.bf16.mxu0 %v896
        %1001 = vmatpush1.bf16.msra.mxu0 %v895
        %1002 = vmatprep.subr.bf16.mxu0 %v900
        %1003 = vmatpush1.bf16.msra.mxu0 %v899
        %1004 = vmatprep.subr.bf16.mxu0 %v904
        %1005 = vmatpush1.bf16.msra.mxu0 %v903
        %1006 = vmatprep.subr.bf16.mxu0 %v908
        %1007 = vmatpush1.bf16.msra.mxu0 %v907
        %1008 = vmatprep.subr.bf16.mxu0 %v912
        %1009 = vmatpush1.bf16.msra.mxu0 %v911
        %1010 = vmatprep.subr.bf16.mxu0 %v916
        %1011 = vmatpush1.bf16.msra.mxu0 %v915
        %1012 = vmatprep.subr.bf16.mxu0 %v920
        %1013 = vmatpush1.bf16.msra.mxu0 %v919
        %1014 = vmatprep.subr.bf16.mxu0 %v924
        %1015 = vmatpush1.bf16.msra.mxu0 %v923
        %1016 = vmatprep.subr.bf16.mxu0 0
        %1017 = vmatpush1.bf16.msra.mxu0 0
        %1018 = vmatprep.subr.bf16.mxu0 0
        %1019 = vmatpush1.bf16.msra.mxu0 0
        %1020 = vmatprep.subr.bf16.mxu0 0
        %1021 = vmatpush1.bf16.msra.mxu0 0
        %1022 = vmatprep.subr.bf16.mxu0 0
        %1023 = vmatpush1.bf16.msra.mxu0 0
        %1024 = vmatprep.subr.bf16.mxu0 0
        %1025 = vmatpush1.bf16.msra.mxu0 0
        %1026 = vmatprep.subr.bf16.mxu0 0
        %1027 = vmatpush1.bf16.msra.mxu0 0
        %1028 = vmatprep.subr.bf16.mxu0 0
        %1029 = vmatpush1.bf16.msra.mxu0 0
        %1030 = vmatprep.subr.bf16.mxu0 0
        %1031 = vmatpush1.bf16.msra.mxu0 0
        %1032 = vmatprep.mubr.bf16.mxu0 0
        %1033 = vmatmul.mubr.bf16.gmra.mrb[0].mxu0 %v726
        %v1034 = vpop.f32.mrb[0].mxu0
        %v1035 = vadd.f32 0.0, %v1034
        %v1036 = vpop.f32.mrb[0].mxu0
        %v1037 = vadd.f32 0.0, %v1036
        %v1038 = vpop.f32.mrb[0].mxu0
        %v1039 = vadd.f32 0.0, %v1038
        %v1040 = vpop.f32.mrb[0].mxu0
        %v1041 = vadd.f32 0.0, %v1040
        %1042 = vdwg.mxu0
        %v1075 = vunpack.c.l.b16 %v732
        %v1076 = vunpack.c.h.b16 %v732
        %v1077 = vunpack.c.l.b16 %v733
        %v1078 = vunpack.c.h.b16 %v733
        %v1079 = vunpack.c.l.b16 %v734
        %v1080 = vunpack.c.h.b16 %v734
        %v1081 = vunpack.c.l.b16 %v735
        %v1082 = vunpack.c.h.b16 %v735
        %v1083 = vunpack.c.l.b16 %v736
        %v1084 = vunpack.c.h.b16 %v736
        %v1085 = vunpack.c.l.b16 %v737
        %v1086 = vunpack.c.h.b16 %v737
        %v1087 = vunpack.c.l.b16 %v738
        %v1088 = vunpack.c.h.b16 %v738
        %v1089 = vunpack.c.l.b16 %v739
        %v1090 = vunpack.c.h.b16 %v739
        %v1091 = vunpack.c.l.b16 %v740
        %v1092 = vunpack.c.h.b16 %v740
        %v1093 = vunpack.c.l.b16 %v741
        %v1094 = vunpack.c.h.b16 %v741
        %v1095 = vunpack.c.l.b16 %v742
        %v1096 = vunpack.c.h.b16 %v742
        %v1097 = vunpack.c.l.b16 %v743
        %v1098 = vunpack.c.h.b16 %v743
        %v1099 = vunpack.c.l.b16 %v744
        %v1100 = vunpack.c.h.b16 %v744
        %v1101 = vunpack.c.l.b16 %v745
        %v1102 = vunpack.c.h.b16 %v745
        %v1103 = vunpack.c.l.b16 %v746
        %v1104 = vunpack.c.h.b16 %v746
        %v1105 = vunpack.c.l.b16 %v747
        %v1106 = vunpack.c.h.b16 %v747
        %v1107 = vunpack.c.l.b16 %v748
        %v1108 = vunpack.c.h.b16 %v748
        %v1109 = vunpack.c.l.b16 %v749
        %v1110 = vunpack.c.h.b16 %v749
        %v1111 = vunpack.c.l.b16 %v750
        %v1112 = vunpack.c.h.b16 %v750
        %v1113 = vunpack.c.l.b16 %v751
        %v1114 = vunpack.c.h.b16 %v751
        %v1115 = vunpack.c.l.b16 %v752
        %v1116 = vunpack.c.h.b16 %v752
        %v1117 = vunpack.c.l.b16 %v753
        %v1118 = vunpack.c.h.b16 %v753
        %v1119 = vunpack.c.l.b16 %v754
        %v1120 = vunpack.c.h.b16 %v754
        %v1121 = vunpack.c.l.b16 %v755
        %v1122 = vunpack.c.h.b16 %v755
        %v1123 = vunpack.c.l.b16 %v756
        %v1124 = vunpack.c.h.b16 %v756
        %v1125 = vunpack.c.l.b16 %v757
        %v1126 = vunpack.c.h.b16 %v757
        %v1127 = vunpack.c.l.b16 %v758
        %v1128 = vunpack.c.h.b16 %v758
        %v1129 = vunpack.c.l.b16 %v759
        %v1130 = vunpack.c.h.b16 %v759
        %v1131 = vunpack.c.l.b16 %v760
        %v1132 = vunpack.c.h.b16 %v760
        %v1133 = vunpack.c.l.b16 %v761
        %v1134 = vunpack.c.h.b16 %v761
        %v1135 = vunpack.c.l.b16 %v762
        %v1136 = vunpack.c.h.b16 %v762
        %v1137 = vunpack.c.l.b16 %v763
        %v1138 = vunpack.c.h.b16 %v763
        %v1139 = vpack.c.b16 %v1079, %v1075
        %v1140 = vpack.c.b16 %v1080, %v1076
        %v1141 = vpack.c.b16 %v1081, %v1077
        %v1142 = vpack.c.b16 %v1082, %v1078
        %v1143 = vpack.c.b16 %v1087, %v1083
        %v1144 = vpack.c.b16 %v1088, %v1084
        %v1145 = vpack.c.b16 %v1089, %v1085
        %v1146 = vpack.c.b16 %v1090, %v1086
        %v1147 = vpack.c.b16 %v1095, %v1091
        %v1148 = vpack.c.b16 %v1096, %v1092
        %v1149 = vpack.c.b16 %v1097, %v1093
        %v1150 = vpack.c.b16 %v1098, %v1094
        %v1151 = vpack.c.b16 %v1103, %v1099
        %v1152 = vpack.c.b16 %v1104, %v1100
        %v1153 = vpack.c.b16 %v1105, %v1101
        %v1154 = vpack.c.b16 %v1106, %v1102
        %v1155 = vpack.c.b16 %v1111, %v1107
        %v1156 = vpack.c.b16 %v1112, %v1108
        %v1157 = vpack.c.b16 %v1113, %v1109
        %v1158 = vpack.c.b16 %v1114, %v1110
        %v1159 = vpack.c.b16 %v1119, %v1115
        %v1160 = vpack.c.b16 %v1120, %v1116
        %v1161 = vpack.c.b16 %v1121, %v1117
        %v1162 = vpack.c.b16 %v1122, %v1118
        %v1163 = vpack.c.b16 %v1127, %v1123
        %v1164 = vpack.c.b16 %v1128, %v1124
        %v1165 = vpack.c.b16 %v1129, %v1125
        %v1166 = vpack.c.b16 %v1130, %v1126
        %v1167 = vpack.c.b16 %v1135, %v1131
        %v1168 = vpack.c.b16 %v1136, %v1132
        %v1169 = vpack.c.b16 %v1137, %v1133
        %v1170 = vpack.c.b16 %v1138, %v1134
        %1203 = vmatprep.subr.bf16.mxu0 %v1140
        %1204 = vmatpush1.bf16.msra.mxu0 %v1139
        %1205 = vmatprep.subr.bf16.mxu0 %v1144
        %1206 = vmatpush1.bf16.msra.mxu0 %v1143
        %1207 = vmatprep.subr.bf16.mxu0 %v1148
        %1208 = vmatpush1.bf16.msra.mxu0 %v1147
        %1209 = vmatprep.subr.bf16.mxu0 %v1152
        %1210 = vmatpush1.bf16.msra.mxu0 %v1151
        %1211 = vmatprep.subr.bf16.mxu0 %v1156
        %1212 = vmatpush1.bf16.msra.mxu0 %v1155
        %1213 = vmatprep.subr.bf16.mxu0 %v1160
        %1214 = vmatpush1.bf16.msra.mxu0 %v1159
        %1215 = vmatprep.subr.bf16.mxu0 %v1164
        %1216 = vmatpush1.bf16.msra.mxu0 %v1163
        %1217 = vmatprep.subr.bf16.mxu0 %v1168
        %1218 = vmatpush1.bf16.msra.mxu0 %v1167
        %1219 = vmatprep.subr.bf16.mxu0 0
        %1220 = vmatpush1.bf16.msra.mxu0 0
        %1221 = vmatprep.subr.bf16.mxu0 0
        %1222 = vmatpush1.bf16.msra.mxu0 0
        %1223 = vmatprep.subr.bf16.mxu0 0
        %1224 = vmatpush1.bf16.msra.mxu0 0
        %1225 = vmatprep.subr.bf16.mxu0 0
        %1226 = vmatpush1.bf16.msra.mxu0 0
        %1227 = vmatprep.subr.bf16.mxu0 0
        %1228 = vmatpush1.bf16.msra.mxu0 0
        %1229 = vmatprep.subr.bf16.mxu0 0
        %1230 = vmatpush1.bf16.msra.mxu0 0
        %1231 = vmatprep.subr.bf16.mxu0 0
        %1232 = vmatpush1.bf16.msra.mxu0 0
        %1233 = vmatprep.subr.bf16.mxu0 0
        %1234 = vmatpush1.bf16.msra.mxu0 0
        %1235 = vmatprep.mubr.bf16.mxu0 0
        %1236 = vmatmul.mubr.bf16.gmra.mrb[0].mxu0 %v725
        %v1237 = vpop.f32.mrb[0].mxu0
        %v1238 = vadd.f32 %v992, %v1237
        %v1239 = vpop.f32.mrb[0].mxu0
        %v1240 = vadd.f32 %v994, %v1239
        %v1241 = vpop.f32.mrb[0].mxu0
        %v1242 = vadd.f32 %v996, %v1241
        %v1243 = vpop.f32.mrb[0].mxu0
        %v1244 = vadd.f32 %v998, %v1243
        %1245 = vdwg.mxu0
        %1246 = vmatprep.subr.bf16.mxu0 %v1142
        %1247 = vmatpush1.bf16.msra.mxu0 %v1141
        %1248 = vmatprep.subr.bf16.mxu0 %v1146
        %1249 = vmatpush1.bf16.msra.mxu0 %v1145
        %1250 = vmatprep.subr.bf16.mxu0 %v1150
        %1251 = vmatpush1.bf16.msra.mxu0 %v1149
        %1252 = vmatprep.subr.bf16.mxu0 %v1154
        %1253 = vmatpush1.bf16.msra.mxu0 %v1153
        %1254 = vmatprep.subr.bf16.mxu0 %v1158
        %1255 = vmatpush1.bf16.msra.mxu0 %v1157
        %1256 = vmatprep.subr.bf16.mxu0 %v1162
        %1257 = vmatpush1.bf16.msra.mxu0 %v1161
        %1258 = vmatprep.subr.bf16.mxu0 %v1166
        %1259 = vmatpush1.bf16.msra.mxu0 %v1165
        %1260 = vmatprep.subr.bf16.mxu0 %v1170
        %1261 = vmatpush1.bf16.msra.mxu0 %v1169
        %1262 = vmatprep.subr.bf16.mxu0 0
        %1263 = vmatpush1.bf16.msra.mxu0 0
        %1264 = vmatprep.subr.bf16.mxu0 0
        %1265 = vmatpush1.bf16.msra.mxu0 0
        %1266 = vmatprep.subr.bf16.mxu0 0
        %1267 = vmatpush1.bf16.msra.mxu0 0
        %1268 = vmatprep.subr.bf16.mxu0 0
        %1269 = vmatpush1.bf16.msra.mxu0 0
        %1270 = vmatprep.subr.bf16.mxu0 0
        %1271 = vmatpush1.bf16.msra.mxu0 0
        %1272 = vmatprep.subr.bf16.mxu0 0
        %1273 = vmatpush1.bf16.msra.mxu0 0
        %1274 = vmatprep.subr.bf16.mxu0 0
        %1275 = vmatpush1.bf16.msra.mxu0 0
        %1276 = vmatprep.subr.bf16.mxu0 0
        %1277 = vmatpush1.bf16.msra.mxu0 0
        %1278 = vmatprep.mubr.bf16.mxu0 0
        %1279 = vmatmul.mubr.bf16.gmra.mrb[0].mxu0 %v725
        %v1280 = vpop.f32.mrb[0].mxu0
        %v1281 = vadd.f32 %v1035, %v1280
        %v1282 = vpop.f32.mrb[0].mxu0
        %v1283 = vadd.f32 %v1037, %v1282
        %v1284 = vpop.f32.mrb[0].mxu0
        %v1285 = vadd.f32 %v1039, %v1284
        %v1286 = vpop.f32.mrb[0].mxu0
        %v1287 = vadd.f32 %v1041, %v1286
        %1288 = vdwg.mxu0
        %s1289 = scalar_lea.vmem [#allocation2], 512
        %v1290 = vld [vmem:[%s1289] sm:$0xff]
        %v1291 = vld [vmem:[%s1289 + $0x8] sm:$0xff]
        %v1292 = vld [vmem:[%s1289 + $0x10] sm:$0xff]
        %v1293 = vld [vmem:[%s1289 + $0x18] sm:$0xff]
        %v1294 = vld [vmem:[%s1289 + $0x20] sm:$0xff]
        %v1295 = vld [vmem:[%s1289 + $0x28] sm:$0xff]
        %v1296 = vld [vmem:[%s1289 + $0x30] sm:$0xff]
        %v1297 = vld [vmem:[%s1289 + $0x38] sm:$0xff]
        %v1298 = vld [vmem:[%s1289 + $0x40] sm:$0xff]
        %v1299 = vld [vmem:[%s1289 + $0x48] sm:$0xff]
        %v1300 = vld [vmem:[%s1289 + $0x50] sm:$0xff]
        %v1301 = vld [vmem:[%s1289 + $0x58] sm:$0xff]
        %v1302 = vld [vmem:[%s1289 + $0x60] sm:$0xff]
        %v1303 = vld [vmem:[%s1289 + $0x68] sm:$0xff]
        %v1304 = vld [vmem:[%s1289 + $0x70] sm:$0xff]
        %v1305 = vld [vmem:[%s1289 + $0x78] sm:$0xff]
        %v1306 = vld [vmem:[%s1289 + $0x80] sm:$0xff]
        %v1307 = vld [vmem:[%s1289 + $0x88] sm:$0xff]
        %v1308 = vld [vmem:[%s1289 + $0x90] sm:$0xff]
        %v1309 = vld [vmem:[%s1289 + $0x98] sm:$0xff]
        %v1310 = vld [vmem:[%s1289 + $0xa0] sm:$0xff]
        %v1311 = vld [vmem:[%s1289 + $0xa8] sm:$0xff]
        %v1312 = vld [vmem:[%s1289 + $0xb0] sm:$0xff]
        %v1313 = vld [vmem:[%s1289 + $0xb8] sm:$0xff]
        %v1314 = vld [vmem:[%s1289 + $0xc0] sm:$0xff]
        %v1315 = vld [vmem:[%s1289 + $0xc8] sm:$0xff]
        %v1316 = vld [vmem:[%s1289 + $0xd0] sm:$0xff]
        %v1317 = vld [vmem:[%s1289 + $0xd8] sm:$0xff]
        %v1318 = vld [vmem:[%s1289 + $0xe0] sm:$0xff]
        %v1319 = vld [vmem:[%s1289 + $0xe8] sm:$0xff]
        %v1320 = vld [vmem:[%s1289 + $0xf0] sm:$0xff]
        %v1321 = vld [vmem:[%s1289 + $0xf8] sm:$0xff]
        %v1354 = vunpack.c.l.b16 %v1290
        %v1355 = vunpack.c.h.b16 %v1290
        %v1356 = vunpack.c.l.b16 %v1291
        %v1357 = vunpack.c.h.b16 %v1291
        %v1358 = vunpack.c.l.b16 %v1292
        %v1359 = vunpack.c.h.b16 %v1292
        %v1360 = vunpack.c.l.b16 %v1293
        %v1361 = vunpack.c.h.b16 %v1293
        %v1362 = vunpack.c.l.b16 %v1294
        %v1363 = vunpack.c.h.b16 %v1294
        %v1364 = vunpack.c.l.b16 %v1295
        %v1365 = vunpack.c.h.b16 %v1295
        %v1366 = vunpack.c.l.b16 %v1296
        %v1367 = vunpack.c.h.b16 %v1296
        %v1368 = vunpack.c.l.b16 %v1297
        %v1369 = vunpack.c.h.b16 %v1297
        %v1370 = vunpack.c.l.b16 %v1298
        %v1371 = vunpack.c.h.b16 %v1298
        %v1372 = vunpack.c.l.b16 %v1299
        %v1373 = vunpack.c.h.b16 %v1299
        %v1374 = vunpack.c.l.b16 %v1300
        %v1375 = vunpack.c.h.b16 %v1300
        %v1376 = vunpack.c.l.b16 %v1301
        %v1377 = vunpack.c.h.b16 %v1301
        %v1378 = vunpack.c.l.b16 %v1302
        %v1379 = vunpack.c.h.b16 %v1302
        %v1380 = vunpack.c.l.b16 %v1303
        %v1381 = vunpack.c.h.b16 %v1303
        %v1382 = vunpack.c.l.b16 %v1304
        %v1383 = vunpack.c.h.b16 %v1304
        %v1384 = vunpack.c.l.b16 %v1305
        %v1385 = vunpack.c.h.b16 %v1305
        %v1386 = vunpack.c.l.b16 %v1306
        %v1387 = vunpack.c.h.b16 %v1306
        %v1388 = vunpack.c.l.b16 %v1307
        %v1389 = vunpack.c.h.b16 %v1307
        %v1390 = vunpack.c.l.b16 %v1308
        %v1391 = vunpack.c.h.b16 %v1308
        %v1392 = vunpack.c.l.b16 %v1309
        %v1393 = vunpack.c.h.b16 %v1309
        %v1394 = vunpack.c.l.b16 %v1310
        %v1395 = vunpack.c.h.b16 %v1310
        %v1396 = vunpack.c.l.b16 %v1311
        %v1397 = vunpack.c.h.b16 %v1311
        %v1398 = vunpack.c.l.b16 %v1312
        %v1399 = vunpack.c.h.b16 %v1312
        %v1400 = vunpack.c.l.b16 %v1313
        %v1401 = vunpack.c.h.b16 %v1313
        %v1402 = vunpack.c.l.b16 %v1314
        %v1403 = vunpack.c.h.b16 %v1314
        %v1404 = vunpack.c.l.b16 %v1315
        %v1405 = vunpack.c.h.b16 %v1315
        %v1406 = vunpack.c.l.b16 %v1316
        %v1407 = vunpack.c.h.b16 %v1316
        %v1408 = vunpack.c.l.b16 %v1317
        %v1409 = vunpack.c.h.b16 %v1317
        %v1410 = vunpack.c.l.b16 %v1318
        %v1411 = vunpack.c.h.b16 %v1318
        %v1412 = vunpack.c.l.b16 %v1319
        %v1413 = vunpack.c.h.b16 %v1319
        %v1414 = vunpack.c.l.b16 %v1320
        %v1415 = vunpack.c.h.b16 %v1320
        %v1416 = vunpack.c.l.b16 %v1321
        %v1417 = vunpack.c.h.b16 %v1321
        %v1418 = vpack.c.b16 %v1358, %v1354
        %v1419 = vpack.c.b16 %v1359, %v1355
        %v1420 = vpack.c.b16 %v1360, %v1356
        %v1421 = vpack.c.b16 %v1361, %v1357
        %v1422 = vpack.c.b16 %v1366, %v1362
        %v1423 = vpack.c.b16 %v1367, %v1363
        %v1424 = vpack.c.b16 %v1368, %v1364
        %v1425 = vpack.c.b16 %v1369, %v1365
        %v1426 = vpack.c.b16 %v1374, %v1370
        %v1427 = vpack.c.b16 %v1375, %v1371
        %v1428 = vpack.c.b16 %v1376, %v1372
        %v1429 = vpack.c.b16 %v1377, %v1373
        %v1430 = vpack.c.b16 %v1382, %v1378
        %v1431 = vpack.c.b16 %v1383, %v1379
        %v1432 = vpack.c.b16 %v1384, %v1380
        %v1433 = vpack.c.b16 %v1385, %v1381
        %v1434 = vpack.c.b16 %v1390, %v1386
        %v1435 = vpack.c.b16 %v1391, %v1387
        %v1436 = vpack.c.b16 %v1392, %v1388
        %v1437 = vpack.c.b16 %v1393, %v1389
        %v1438 = vpack.c.b16 %v1398, %v1394
        %v1439 = vpack.c.b16 %v1399, %v1395
        %v1440 = vpack.c.b16 %v1400, %v1396
        %v1441 = vpack.c.b16 %v1401, %v1397
        %v1442 = vpack.c.b16 %v1406, %v1402
        %v1443 = vpack.c.b16 %v1407, %v1403
        %v1444 = vpack.c.b16 %v1408, %v1404
        %v1445 = vpack.c.b16 %v1409, %v1405
        %v1446 = vpack.c.b16 %v1414, %v1410
        %v1447 = vpack.c.b16 %v1415, %v1411
        %v1448 = vpack.c.b16 %v1416, %v1412
        %v1449 = vpack.c.b16 %v1417, %v1413
        %1482 = vmatprep.subr.bf16.mxu0 %v1419
        %1483 = vmatpush1.bf16.msra.mxu0 %v1418
        %1484 = vmatprep.subr.bf16.mxu0 %v1423
        %1485 = vmatpush1.bf16.msra.mxu0 %v1422
        %1486 = vmatprep.subr.bf16.mxu0 %v1427
        %1487 = vmatpush1.bf16.msra.mxu0 %v1426
        %1488 = vmatprep.subr.bf16.mxu0 %v1431
        %1489 = vmatpush1.bf16.msra.mxu0 %v1430
        %1490 = vmatprep.subr.bf16.mxu0 %v1435
        %1491 = vmatpush1.bf16.msra.mxu0 %v1434
        %1492 = vmatprep.subr.bf16.mxu0 %v1439
        %1493 = vmatpush1.bf16.msra.mxu0 %v1438
        %1494 = vmatprep.subr.bf16.mxu0 %v1443
        %1495 = vmatpush1.bf16.msra.mxu0 %v1442
        %1496 = vmatprep.subr.bf16.mxu0 %v1447
        %1497 = vmatpush1.bf16.msra.mxu0 %v1446
        %1498 = vmatprep.subr.bf16.mxu0 0
        %1499 = vmatpush1.bf16.msra.mxu0 0
        %1500 = vmatprep.subr.bf16.mxu0 0
        %1501 = vmatpush1.bf16.msra.mxu0 0
        %1502 = vmatprep.subr.bf16.mxu0 0
        %1503 = vmatpush1.bf16.msra.mxu0 0
        %1504 = vmatprep.subr.bf16.mxu0 0
        %1505 = vmatpush1.bf16.msra.mxu0 0
        %1506 = vmatprep.subr.bf16.mxu0 0
        %1507 = vmatpush1.bf16.msra.mxu0 0
        %1508 = vmatprep.subr.bf16.mxu0 0
        %1509 = vmatpush1.bf16.msra.mxu0 0
        %1510 = vmatprep.subr.bf16.mxu0 0
        %1511 = vmatpush1.bf16.msra.mxu0 0
        %1512 = vmatprep.subr.bf16.mxu0 0
        %1513 = vmatpush1.bf16.msra.mxu0 0
        %1514 = vmatprep.mubr.bf16.mxu0 0
        %1515 = vmatmul.mubr.bf16.gmra.mrb[0].mxu0 %v727
        %v1516 = vpop.f32.mrb[0].mxu0
        %v1517 = vadd.f32 0.0, %v1516
        %v1518 = vpop.f32.mrb[0].mxu0
        %v1519 = vadd.f32 0.0, %v1518
        %v1520 = vpop.f32.mrb[0].mxu0
        %v1521 = vadd.f32 0.0, %v1520
        %v1522 = vpop.f32.mrb[0].mxu0
        %v1523 = vadd.f32 0.0, %v1522
        %1524 = vdwg.mxu0
        %1525 = vmatprep.subr.bf16.mxu0 %v1421
        %1526 = vmatpush1.bf16.msra.mxu0 %v1420
        %1527 = vmatprep.subr.bf16.mxu0 %v1425
        %1528 = vmatpush1.bf16.msra.mxu0 %v1424
        %1529 = vmatprep.subr.bf16.mxu0 %v1429
        %1530 = vmatpush1.bf16.msra.mxu0 %v1428
        %1531 = vmatprep.subr.bf16.mxu0 %v1433
        %1532 = vmatpush1.bf16.msra.mxu0 %v1432
        %1533 = vmatprep.subr.bf16.mxu0 %v1437
        %1534 = vmatpush1.bf16.msra.mxu0 %v1436
        %1535 = vmatprep.subr.bf16.mxu0 %v1441
        %1536 = vmatpush1.bf16.msra.mxu0 %v1440
        %1537 = vmatprep.subr.bf16.mxu0 %v1445
        %1538 = vmatpush1.bf16.msra.mxu0 %v1444
        %1539 = vmatprep.subr.bf16.mxu0 %v1449
        %1540 = vmatpush1.bf16.msra.mxu0 %v1448
        %1541 = vmatprep.subr.bf16.mxu0 0
        %1542 = vmatpush1.bf16.msra.mxu0 0
        %1543 = vmatprep.subr.bf16.mxu0 0
        %1544 = vmatpush1.bf16.msra.mxu0 0
        %1545 = vmatprep.subr.bf16.mxu0 0
        %1546 = vmatpush1.bf16.msra.mxu0 0
        %1547 = vmatprep.subr.bf16.mxu0 0
        %1548 = vmatpush1.bf16.msra.mxu0 0
        %1549 = vmatprep.subr.bf16.mxu0 0
        %1550 = vmatpush1.bf16.msra.mxu0 0
        %1551 = vmatprep.subr.bf16.mxu0 0
        %1552 = vmatpush1.bf16.msra.mxu0 0
        %1553 = vmatprep.subr.bf16.mxu0 0
        %1554 = vmatpush1.bf16.msra.mxu0 0
        %1555 = vmatprep.subr.bf16.mxu0 0
        %1556 = vmatpush1.bf16.msra.mxu0 0
        %1557 = vmatprep.mubr.bf16.mxu0 0
        %1558 = vmatmul.mubr.bf16.gmra.mrb[0].mxu0 %v727
        %v1559 = vpop.f32.mrb[0].mxu0
        %v1560 = vadd.f32 0.0, %v1559
        %v1561 = vpop.f32.mrb[0].mxu0
        %v1562 = vadd.f32 0.0, %v1561
        %v1563 = vpop.f32.mrb[0].mxu0
        %v1564 = vadd.f32 0.0, %v1563
        %v1565 = vpop.f32.mrb[0].mxu0
        %v1566 = vadd.f32 0.0, %v1565
        %1567 = vdwg.mxu0
        %v1568 = vadd.f32 %v1238, %v1517
        %v1569 = vadd.f32 %v1240, %v1519
        %v1570 = vadd.f32 %v1281, %v1560
        %v1571 = vadd.f32 %v1283, %v1562
        %v1572 = vadd.f32 %v1242, %v1521
        %v1573 = vadd.f32 %v1244, %v1523
        %v1574 = vadd.f32 %v1285, %v1564
        %v1575 = vadd.f32 %v1287, %v1566
        %s1576 = scalar_lea.vmem [#allocation2], 768
        %v1577 = vld [vmem:[%s1576] sm:$0xff]
        %v1578 = vld [vmem:[%s1576 + $0x8] sm:$0xff]
        %v1579 = vld [vmem:[%s1576 + $0x10] sm:$0xff]
        %v1580 = vld [vmem:[%s1576 + $0x18] sm:$0xff]
        %v1581 = vld [vmem:[%s1576 + $0x20] sm:$0xff]
        %v1582 = vld [vmem:[%s1576 + $0x28] sm:$0xff]
        %v1583 = vld [vmem:[%s1576 + $0x30] sm:$0xff]
        %v1584 = vld [vmem:[%s1576 + $0x38] sm:$0xff]
        %v1585 = vld [vmem:[%s1576 + $0x40] sm:$0xff]
        %v1586 = vld [vmem:[%s1576 + $0x48] sm:$0xff]
        %v1587 = vld [vmem:[%s1576 + $0x50] sm:$0xff]
        %v1588 = vld [vmem:[%s1576 + $0x58] sm:$0xff]
        %v1589 = vld [vmem:[%s1576 + $0x60] sm:$0xff]
        %v1590 = vld [vmem:[%s1576 + $0x68] sm:$0xff]
        %v1591 = vld [vmem:[%s1576 + $0x70] sm:$0xff]
        %v1592 = vld [vmem:[%s1576 + $0x78] sm:$0xff]
        %v1593 = vld [vmem:[%s1576 + $0x80] sm:$0xff]
        %v1594 = vld [vmem:[%s1576 + $0x88] sm:$0xff]
        %v1595 = vld [vmem:[%s1576 + $0x90] sm:$0xff]
        %v1596 = vld [vmem:[%s1576 + $0x98] sm:$0xff]
        %v1597 = vld [vmem:[%s1576 + $0xa0] sm:$0xff]
        %v1598 = vld [vmem:[%s1576 + $0xa8] sm:$0xff]
        %v1599 = vld [vmem:[%s1576 + $0xb0] sm:$0xff]
        %v1600 = vld [vmem:[%s1576 + $0xb8] sm:$0xff]
        %v1601 = vld [vmem:[%s1576 + $0xc0] sm:$0xff]
        %v1602 = vld [vmem:[%s1576 + $0xc8] sm:$0xff]
        %v1603 = vld [vmem:[%s1576 + $0xd0] sm:$0xff]
        %v1604 = vld [vmem:[%s1576 + $0xd8] sm:$0xff]
        %v1605 = vld [vmem:[%s1576 + $0xe0] sm:$0xff]
        %v1606 = vld [vmem:[%s1576 + $0xe8] sm:$0xff]
        %v1607 = vld [vmem:[%s1576 + $0xf0] sm:$0xff]
        %v1608 = vld [vmem:[%s1576 + $0xf8] sm:$0xff]
        %v1641 = vunpack.c.l.b16 %v1577
        %v1642 = vunpack.c.h.b16 %v1577
        %v1643 = vunpack.c.l.b16 %v1578
        %v1644 = vunpack.c.h.b16 %v1578
        %v1645 = vunpack.c.l.b16 %v1579
        %v1646 = vunpack.c.h.b16 %v1579
        %v1647 = vunpack.c.l.b16 %v1580
        %v1648 = vunpack.c.h.b16 %v1580
        %v1649 = vunpack.c.l.b16 %v1581
        %v1650 = vunpack.c.h.b16 %v1581
        %v1651 = vunpack.c.l.b16 %v1582
        %v1652 = vunpack.c.h.b16 %v1582
        %v1653 = vunpack.c.l.b16 %v1583
        %v1654 = vunpack.c.h.b16 %v1583
        %v1655 = vunpack.c.l.b16 %v1584
        %v1656 = vunpack.c.h.b16 %v1584
        %v1657 = vunpack.c.l.b16 %v1585
        %v1658 = vunpack.c.h.b16 %v1585
        %v1659 = vunpack.c.l.b16 %v1586
        %v1660 = vunpack.c.h.b16 %v1586
        %v1661 = vunpack.c.l.b16 %v1587
        %v1662 = vunpack.c.h.b16 %v1587
        %v1663 = vunpack.c.l.b16 %v1588
        %v1664 = vunpack.c.h.b16 %v1588
        %v1665 = vunpack.c.l.b16 %v1589
        %v1666 = vunpack.c.h.b16 %v1589
        %v1667 = vunpack.c.l.b16 %v1590
        %v1668 = vunpack.c.h.b16 %v1590
        %v1669 = vunpack.c.l.b16 %v1591
        %v1670 = vunpack.c.h.b16 %v1591
        %v1671 = vunpack.c.l.b16 %v1592
        %v1672 = vunpack.c.h.b16 %v1592
        %v1673 = vunpack.c.l.b16 %v1593
        %v1674 = vunpack.c.h.b16 %v1593
        %v1675 = vunpack.c.l.b16 %v1594
        %v1676 = vunpack.c.h.b16 %v1594
        %v1677 = vunpack.c.l.b16 %v1595
        %v1678 = vunpack.c.h.b16 %v1595
        %v1679 = vunpack.c.l.b16 %v1596
        %v1680 = vunpack.c.h.b16 %v1596
        %v1681 = vunpack.c.l.b16 %v1597
        %v1682 = vunpack.c.h.b16 %v1597
        %v1683 = vunpack.c.l.b16 %v1598
        %v1684 = vunpack.c.h.b16 %v1598
        %v1685 = vunpack.c.l.b16 %v1599
        %v1686 = vunpack.c.h.b16 %v1599
        %v1687 = vunpack.c.l.b16 %v1600
        %v1688 = vunpack.c.h.b16 %v1600
        %v1689 = vunpack.c.l.b16 %v1601
        %v1690 = vunpack.c.h.b16 %v1601
        %v1691 = vunpack.c.l.b16 %v1602
        %v1692 = vunpack.c.h.b16 %v1602
        %v1693 = vunpack.c.l.b16 %v1603
        %v1694 = vunpack.c.h.b16 %v1603
        %v1695 = vunpack.c.l.b16 %v1604
        %v1696 = vunpack.c.h.b16 %v1604
        %v1697 = vunpack.c.l.b16 %v1605
        %v1698 = vunpack.c.h.b16 %v1605
        %v1699 = vunpack.c.l.b16 %v1606
        %v1700 = vunpack.c.h.b16 %v1606
        %v1701 = vunpack.c.l.b16 %v1607
        %v1702 = vunpack.c.h.b16 %v1607
        %v1703 = vunpack.c.l.b16 %v1608
        %v1704 = vunpack.c.h.b16 %v1608
        %v1705 = vpack.c.b16 %v1645, %v1641
        %v1706 = vpack.c.b16 %v1646, %v1642
        %v1707 = vpack.c.b16 %v1647, %v1643
        %v1708 = vpack.c.b16 %v1648, %v1644
        %v1709 = vpack.c.b16 %v1653, %v1649
        %v1710 = vpack.c.b16 %v1654, %v1650
        %v1711 = vpack.c.b16 %v1655, %v1651
        %v1712 = vpack.c.b16 %v1656, %v1652
        %v1713 = vpack.c.b16 %v1661, %v1657
        %v1714 = vpack.c.b16 %v1662, %v1658
        %v1715 = vpack.c.b16 %v1663, %v1659
        %v1716 = vpack.c.b16 %v1664, %v1660
        %v1717 = vpack.c.b16 %v1669, %v1665
        %v1718 = vpack.c.b16 %v1670, %v1666
        %v1719 = vpack.c.b16 %v1671, %v1667
        %v1720 = vpack.c.b16 %v1672, %v1668
        %v1721 = vpack.c.b16 %v1677, %v1673
        %v1722 = vpack.c.b16 %v1678, %v1674
        %v1723 = vpack.c.b16 %v1679, %v1675
        %v1724 = vpack.c.b16 %v1680, %v1676
        %v1725 = vpack.c.b16 %v1685, %v1681
        %v1726 = vpack.c.b16 %v1686, %v1682
        %v1727 = vpack.c.b16 %v1687, %v1683
        %v1728 = vpack.c.b16 %v1688, %v1684
        %v1729 = vpack.c.b16 %v1693, %v1689
        %v1730 = vpack.c.b16 %v1694, %v1690
        %v1731 = vpack.c.b16 %v1695, %v1691
        %v1732 = vpack.c.b16 %v1696, %v1692
        %v1733 = vpack.c.b16 %v1701, %v1697
        %v1734 = vpack.c.b16 %v1702, %v1698
        %v1735 = vpack.c.b16 %v1703, %v1699
        %v1736 = vpack.c.b16 %v1704, %v1700
        %1769 = vmatprep.subr.bf16.mxu0 %v1706
        %1770 = vmatpush1.bf16.msra.mxu0 %v1705
        %1771 = vmatprep.subr.bf16.mxu0 %v1710
        %1772 = vmatpush1.bf16.msra.mxu0 %v1709
        %1773 = vmatprep.subr.bf16.mxu0 %v1714
        %1774 = vmatpush1.bf16.msra.mxu0 %v1713
        %1775 = vmatprep.subr.bf16.mxu0 %v1718
        %1776 = vmatpush1.bf16.msra.mxu0 %v1717
        %1777 = vmatprep.subr.bf16.mxu0 %v1722
        %1778 = vmatpush1.bf16.msra.mxu0 %v1721
        %1779 = vmatprep.subr.bf16.mxu0 %v1726
        %1780 = vmatpush1.bf16.msra.mxu0 %v1725
        %1781 = vmatprep.subr.bf16.mxu0 %v1730
        %1782 = vmatpush1.bf16.msra.mxu0 %v1729
        %1783 = vmatprep.subr.bf16.mxu0 %v1734
        %1784 = vmatpush1.bf16.msra.mxu0 %v1733
        %1785 = vmatprep.subr.bf16.mxu0 0
        %1786 = vmatpush1.bf16.msra.mxu0 0
        %1787 = vmatprep.subr.bf16.mxu0 0
        %1788 = vmatpush1.bf16.msra.mxu0 0
        %1789 = vmatprep.subr.bf16.mxu0 0
        %1790 = vmatpush1.bf16.msra.mxu0 0
        %1791 = vmatprep.subr.bf16.mxu0 0
        %1792 = vmatpush1.bf16.msra.mxu0 0
        %1793 = vmatprep.subr.bf16.mxu0 0
        %1794 = vmatpush1.bf16.msra.mxu0 0
        %1795 = vmatprep.subr.bf16.mxu0 0
        %1796 = vmatpush1.bf16.msra.mxu0 0
        %1797 = vmatprep.subr.bf16.mxu0 0
        %1798 = vmatpush1.bf16.msra.mxu0 0
        %1799 = vmatprep.subr.bf16.mxu0 0
        %1800 = vmatpush1.bf16.msra.mxu0 0
        %1801 = vmatprep.mubr.bf16.mxu0 0
        %1802 = vmatmul.mubr.bf16.gmra.mrb[0].mxu0 %v728
        %v1803 = vpop.f32.mrb[0].mxu0
        %v1804 = vadd.f32 0.0, %v1803
        %v1805 = vpop.f32.mrb[0].mxu0
        %v1806 = vadd.f32 0.0, %v1805
        %v1807 = vpop.f32.mrb[0].mxu0
        %v1808 = vadd.f32 0.0, %v1807
        %v1809 = vpop.f32.mrb[0].mxu0
        %v1810 = vadd.f32 0.0, %v1809
        %1811 = vdwg.mxu0
        %1812 = vmatprep.subr.bf16.mxu0 %v1708
        %1813 = vmatpush1.bf16.msra.mxu0 %v1707
        %1814 = vmatprep.subr.bf16.mxu0 %v1712
        %1815 = vmatpush1.bf16.msra.mxu0 %v1711
        %1816 = vmatprep.subr.bf16.mxu0 %v1716
        %1817 = vmatpush1.bf16.msra.mxu0 %v1715
        %1818 = vmatprep.subr.bf16.mxu0 %v1720
        %1819 = vmatpush1.bf16.msra.mxu0 %v1719
        %1820 = vmatprep.subr.bf16.mxu0 %v1724
        %1821 = vmatpush1.bf16.msra.mxu0 %v1723
        %1822 = vmatprep.subr.bf16.mxu0 %v1728
        %1823 = vmatpush1.bf16.msra.mxu0 %v1727
        %1824 = vmatprep.subr.bf16.mxu0 %v1732
        %1825 = vmatpush1.bf16.msra.mxu0 %v1731
        %1826 = vmatprep.subr.bf16.mxu0 %v1736
        %1827 = vmatpush1.bf16.msra.mxu0 %v1735
        %1828 = vmatprep.subr.bf16.mxu0 0
        %1829 = vmatpush1.bf16.msra.mxu0 0
        %1830 = vmatprep.subr.bf16.mxu0 0
        %1831 = vmatpush1.bf16.msra.mxu0 0
        %1832 = vmatprep.subr.bf16.mxu0 0
        %1833 = vmatpush1.bf16.msra.mxu0 0
        %1834 = vmatprep.subr.bf16.mxu0 0
        %1835 = vmatpush1.bf16.msra.mxu0 0
        %1836 = vmatprep.subr.bf16.mxu0 0
        %1837 = vmatpush1.bf16.msra.mxu0 0
        %1838 = vmatprep.subr.bf16.mxu0 0
        %1839 = vmatpush1.bf16.msra.mxu0 0
        %1840 = vmatprep.subr.bf16.mxu0 0
        %1841 = vmatpush1.bf16.msra.mxu0 0
        %1842 = vmatprep.subr.bf16.mxu0 0
        %1843 = vmatpush1.bf16.msra.mxu0 0
        %1844 = vmatprep.mubr.bf16.mxu0 0
        %1845 = vmatmul.mubr.bf16.gmra.mrb[0].mxu0 %v728
        %v1846 = vpop.f32.mrb[0].mxu0
        %v1847 = vadd.f32 0.0, %v1846
        %v1848 = vpop.f32.mrb[0].mxu0
        %v1849 = vadd.f32 0.0, %v1848
        %v1850 = vpop.f32.mrb[0].mxu0
        %v1851 = vadd.f32 0.0, %v1850
        %v1852 = vpop.f32.mrb[0].mxu0
        %v1853 = vadd.f32 0.0, %v1852
        %1854 = vdwg.mxu0
        %v1855 = vadd.f32 %v1568, %v1804
        %v1856 = vadd.f32 %v1569, %v1806
        %v1857 = vadd.f32 %v1570, %v1847
        %v1858 = vadd.f32 %v1571, %v1849
        %v1859 = vadd.f32 %v1572, %v1808
        %v1860 = vadd.f32 %v1573, %v1810
        %v1861 = vadd.f32 %v1574, %v1851
        %v1862 = vadd.f32 %v1575, %v1853
        %s1863 = scalar_lea.vmem [#allocation2], 1024
        %v1864 = vld [vmem:[%s1863] sm:$0xff]
        %v1865 = vld [vmem:[%s1863 + $0x8] sm:$0xff]
        %v1866 = vld [vmem:[%s1863 + $0x10] sm:$0xff]
        %v1867 = vld [vmem:[%s1863 + $0x18] sm:$0xff]
        %v1868 = vld [vmem:[%s1863 + $0x20] sm:$0xff]
        %v1869 = vld [vmem:[%s1863 + $0x28] sm:$0xff]
        %v1870 = vld [vmem:[%s1863 + $0x30] sm:$0xff]
        %v1871 = vld [vmem:[%s1863 + $0x38] sm:$0xff]
        %v1872 = vld [vmem:[%s1863 + $0x40] sm:$0xff]
        %v1873 = vld [vmem:[%s1863 + $0x48] sm:$0xff]
        %v1874 = vld [vmem:[%s1863 + $0x50] sm:$0xff]
        %v1875 = vld [vmem:[%s1863 + $0x58] sm:$0xff]
        %v1876 = vld [vmem:[%s1863 + $0x60] sm:$0xff]
        %v1877 = vld [vmem:[%s1863 + $0x68] sm:$0xff]
        %v1878 = vld [vmem:[%s1863 + $0x70] sm:$0xff]
        %v1879 = vld [vmem:[%s1863 + $0x78] sm:$0xff]
        %v1880 = vld [vmem:[%s1863 + $0x80] sm:$0xff]
        %v1881 = vld [vmem:[%s1863 + $0x88] sm:$0xff]
        %v1882 = vld [vmem:[%s1863 + $0x90] sm:$0xff]
        %v1883 = vld [vmem:[%s1863 + $0x98] sm:$0xff]
        %v1884 = vld [vmem:[%s1863 + $0xa0] sm:$0xff]
        %v1885 = vld [vmem:[%s1863 + $0xa8] sm:$0xff]
        %v1886 = vld [vmem:[%s1863 + $0xb0] sm:$0xff]
        %v1887 = vld [vmem:[%s1863 + $0xb8] sm:$0xff]
        %v1888 = vld [vmem:[%s1863 + $0xc0] sm:$0xff]
        %v1889 = vld [vmem:[%s1863 + $0xc8] sm:$0xff]
        %v1890 = vld [vmem:[%s1863 + $0xd0] sm:$0xff]
        %v1891 = vld [vmem:[%s1863 + $0xd8] sm:$0xff]
        %v1892 = vld [vmem:[%s1863 + $0xe0] sm:$0xff]
        %v1893 = vld [vmem:[%s1863 + $0xe8] sm:$0xff]
        %v1894 = vld [vmem:[%s1863 + $0xf0] sm:$0xff]
        %v1895 = vld [vmem:[%s1863 + $0xf8] sm:$0xff]
        %v1928 = vunpack.c.l.b16 %v1864
        %v1929 = vunpack.c.h.b16 %v1864
        %v1930 = vunpack.c.l.b16 %v1865
        %v1931 = vunpack.c.h.b16 %v1865
        %v1932 = vunpack.c.l.b16 %v1866
        %v1933 = vunpack.c.h.b16 %v1866
        %v1934 = vunpack.c.l.b16 %v1867
        %v1935 = vunpack.c.h.b16 %v1867
        %v1936 = vunpack.c.l.b16 %v1868
        %v1937 = vunpack.c.h.b16 %v1868
        %v1938 = vunpack.c.l.b16 %v1869
        %v1939 = vunpack.c.h.b16 %v1869
        %v1940 = vunpack.c.l.b16 %v1870
        %v1941 = vunpack.c.h.b16 %v1870
        %v1942 = vunpack.c.l.b16 %v1871
        %v1943 = vunpack.c.h.b16 %v1871
        %v1944 = vunpack.c.l.b16 %v1872
        %v1945 = vunpack.c.h.b16 %v1872
        %v1946 = vunpack.c.l.b16 %v1873
        %v1947 = vunpack.c.h.b16 %v1873
        %v1948 = vunpack.c.l.b16 %v1874
        %v1949 = vunpack.c.h.b16 %v1874
        %v1950 = vunpack.c.l.b16 %v1875
        %v1951 = vunpack.c.h.b16 %v1875
        %v1952 = vunpack.c.l.b16 %v1876
        %v1953 = vunpack.c.h.b16 %v1876
        %v1954 = vunpack.c.l.b16 %v1877
        %v1955 = vunpack.c.h.b16 %v1877
        %v1956 = vunpack.c.l.b16 %v1878
        %v1957 = vunpack.c.h.b16 %v1878
        %v1958 = vunpack.c.l.b16 %v1879
        %v1959 = vunpack.c.h.b16 %v1879
        %v1960 = vunpack.c.l.b16 %v1880
        %v1961 = vunpack.c.h.b16 %v1880
        %v1962 = vunpack.c.l.b16 %v1881
        %v1963 = vunpack.c.h.b16 %v1881
        %v1964 = vunpack.c.l.b16 %v1882
        %v1965 = vunpack.c.h.b16 %v1882
        %v1966 = vunpack.c.l.b16 %v1883
        %v1967 = vunpack.c.h.b16 %v1883
        %v1968 = vunpack.c.l.b16 %v1884
        %v1969 = vunpack.c.h.b16 %v1884
        %v1970 = vunpack.c.l.b16 %v1885
        %v1971 = vunpack.c.h.b16 %v1885
        %v1972 = vunpack.c.l.b16 %v1886
        %v1973 = vunpack.c.h.b16 %v1886
        %v1974 = vunpack.c.l.b16 %v1887
        %v1975 = vunpack.c.h.b16 %v1887
        %v1976 = vunpack.c.l.b16 %v1888
        %v1977 = vunpack.c.h.b16 %v1888
        %v1978 = vunpack.c.l.b16 %v1889
        %v1979 = vunpack.c.h.b16 %v1889
        %v1980 = vunpack.c.l.b16 %v1890
        %v1981 = vunpack.c.h.b16 %v1890
        %v1982 = vunpack.c.l.b16 %v1891
        %v1983 = vunpack.c.h.b16 %v1891
        %v1984 = vunpack.c.l.b16 %v1892
        %v1985 = vunpack.c.h.b16 %v1892
        %v1986 = vunpack.c.l.b16 %v1893
        %v1987 = vunpack.c.h.b16 %v1893
        %v1988 = vunpack.c.l.b16 %v1894
        %v1989 = vunpack.c.h.b16 %v1894
        %v1990 = vunpack.c.l.b16 %v1895
        %v1991 = vunpack.c.h.b16 %v1895
        %v1992 = vpack.c.b16 %v1932, %v1928
        %v1993 = vpack.c.b16 %v1933, %v1929
        %v1994 = vpack.c.b16 %v1934, %v1930
        %v1995 = vpack.c.b16 %v1935, %v1931
        %v1996 = vpack.c.b16 %v1940, %v1936
        %v1997 = vpack.c.b16 %v1941, %v1937
        %v1998 = vpack.c.b16 %v1942, %v1938
        %v1999 = vpack.c.b16 %v1943, %v1939
        %v2000 = vpack.c.b16 %v1948, %v1944
        %v2001 = vpack.c.b16 %v1949, %v1945
        %v2002 = vpack.c.b16 %v1950, %v1946
        %v2003 = vpack.c.b16 %v1951, %v1947
        %v2004 = vpack.c.b16 %v1956, %v1952
        %v2005 = vpack.c.b16 %v1957, %v1953
        %v2006 = vpack.c.b16 %v1958, %v1954
        %v2007 = vpack.c.b16 %v1959, %v1955
        %v2008 = vpack.c.b16 %v1964, %v1960
        %v2009 = vpack.c.b16 %v1965, %v1961
        %v2010 = vpack.c.b16 %v1966, %v1962
        %v2011 = vpack.c.b16 %v1967, %v1963
        %v2012 = vpack.c.b16 %v1972, %v1968
        %v2013 = vpack.c.b16 %v1973, %v1969
        %v2014 = vpack.c.b16 %v1974, %v1970
        %v2015 = vpack.c.b16 %v1975, %v1971
        %v2016 = vpack.c.b16 %v1980, %v1976
        %v2017 = vpack.c.b16 %v1981, %v1977
        %v2018 = vpack.c.b16 %v1982, %v1978
        %v2019 = vpack.c.b16 %v1983, %v1979
        %v2020 = vpack.c.b16 %v1988, %v1984
        %v2021 = vpack.c.b16 %v1989, %v1985
        %v2022 = vpack.c.b16 %v1990, %v1986
        %v2023 = vpack.c.b16 %v1991, %v1987
        %2056 = vmatprep.subr.bf16.mxu0 %v1993
        %2057 = vmatpush1.bf16.msra.mxu0 %v1992
        %2058 = vmatprep.subr.bf16.mxu0 %v1997
        %2059 = vmatpush1.bf16.msra.mxu0 %v1996
        %2060 = vmatprep.subr.bf16.mxu0 %v2001
        %2061 = vmatpush1.bf16.msra.mxu0 %v2000
        %2062 = vmatprep.subr.bf16.mxu0 %v2005
        %2063 = vmatpush1.bf16.msra.mxu0 %v2004
        %2064 = vmatprep.subr.bf16.mxu0 %v2009
        %2065 = vmatpush1.bf16.msra.mxu0 %v2008
        %2066 = vmatprep.subr.bf16.mxu0 %v2013
        %2067 = vmatpush1.bf16.msra.mxu0 %v2012
        %2068 = vmatprep.subr.bf16.mxu0 %v2017
        %2069 = vmatpush1.bf16.msra.mxu0 %v2016
        %2070 = vmatprep.subr.bf16.mxu0 %v2021
        %2071 = vmatpush1.bf16.msra.mxu0 %v2020
        %2072 = vmatprep.subr.bf16.mxu0 0
        %2073 = vmatpush1.bf16.msra.mxu0 0
        %2074 = vmatprep.subr.bf16.mxu0 0
        %2075 = vmatpush1.bf16.msra.mxu0 0
        %2076 = vmatprep.subr.bf16.mxu0 0
        %2077 = vmatpush1.bf16.msra.mxu0 0
        %2078 = vmatprep.subr.bf16.mxu0 0
        %2079 = vmatpush1.bf16.msra.mxu0 0
        %2080 = vmatprep.subr.bf16.mxu0 0
        %2081 = vmatpush1.bf16.msra.mxu0 0
        %2082 = vmatprep.subr.bf16.mxu0 0
        %2083 = vmatpush1.bf16.msra.mxu0 0
        %2084 = vmatprep.subr.bf16.mxu0 0
        %2085 = vmatpush1.bf16.msra.mxu0 0
        %2086 = vmatprep.subr.bf16.mxu0 0
        %2087 = vmatpush1.bf16.msra.mxu0 0
        %2088 = vmatprep.mubr.bf16.mxu0 0
        %2089 = vmatmul.mubr.bf16.gmra.mrb[0].mxu0 %v729
        %v2090 = vpop.f32.mrb[0].mxu0
        %v2091 = vadd.f32 0.0, %v2090
        %v2092 = vpop.f32.mrb[0].mxu0
        %v2093 = vadd.f32 0.0, %v2092
        %v2094 = vpop.f32.mrb[0].mxu0
        %v2095 = vadd.f32 0.0, %v2094
        %v2096 = vpop.f32.mrb[0].mxu0
        %v2097 = vadd.f32 0.0, %v2096
        %2098 = vdwg.mxu0
        %2099 = vmatprep.subr.bf16.mxu0 %v1995
        %2100 = vmatpush1.bf16.msra.mxu0 %v1994
        %2101 = vmatprep.subr.bf16.mxu0 %v1999
        %2102 = vmatpush1.bf16.msra.mxu0 %v1998
        %2103 = vmatprep.subr.bf16.mxu0 %v2003
        %2104 = vmatpush1.bf16.msra.mxu0 %v2002
        %2105 = vmatprep.subr.bf16.mxu0 %v2007
        %2106 = vmatpush1.bf16.msra.mxu0 %v2006
        %2107 = vmatprep.subr.bf16.mxu0 %v2011
        %2108 = vmatpush1.bf16.msra.mxu0 %v2010
        %2109 = vmatprep.subr.bf16.mxu0 %v2015
        %2110 = vmatpush1.bf16.msra.mxu0 %v2014
        %2111 = vmatprep.subr.bf16.mxu0 %v2019
        %2112 = vmatpush1.bf16.msra.mxu0 %v2018
        %2113 = vmatprep.subr.bf16.mxu0 %v2023
        %2114 = vmatpush1.bf16.msra.mxu0 %v2022
        %2115 = vmatprep.subr.bf16.mxu0 0
        %2116 = vmatpush1.bf16.msra.mxu0 0
        %2117 = vmatprep.subr.bf16.mxu0 0
        %2118 = vmatpush1.bf16.msra.mxu0 0
        %2119 = vmatprep.subr.bf16.mxu0 0
        %2120 = vmatpush1.bf16.msra.mxu0 0
        %2121 = vmatprep.subr.bf16.mxu0 0
        %2122 = vmatpush1.bf16.msra.mxu0 0
        %2123 = vmatprep.subr.bf16.mxu0 0
        %2124 = vmatpush1.bf16.msra.mxu0 0
        %2125 = vmatprep.subr.bf16.mxu0 0
        %2126 = vmatpush1.bf16.msra.mxu0 0
        %2127 = vmatprep.subr.bf16.mxu0 0
        %2128 = vmatpush1.bf16.msra.mxu0 0
        %2129 = vmatprep.subr.bf16.mxu0 0
        %2130 = vmatpush1.bf16.msra.mxu0 0
        %2131 = vmatprep.mubr.bf16.mxu0 0
        %2132 = vmatmul.mubr.bf16.gmra.mrb[0].mxu0 %v729
        %v2133 = vpop.f32.mrb[0].mxu0
        %v2134 = vadd.f32 0.0, %v2133
        %v2135 = vpop.f32.mrb[0].mxu0
        %v2136 = vadd.f32 0.0, %v2135
        %v2137 = vpop.f32.mrb[0].mxu0
        %v2138 = vadd.f32 0.0, %v2137
        %v2139 = vpop.f32.mrb[0].mxu0
        %v2140 = vadd.f32 0.0, %v2139
        %2141 = vdwg.mxu0
        %v2142 = vadd.f32 %v1855, %v2091
        %v2143 = vadd.f32 %v1856, %v2093
        %v2144 = vadd.f32 %v1857, %v2134
        %v2145 = vadd.f32 %v1858, %v2136
        %v2146 = vadd.f32 %v1859, %v2095
        %v2147 = vadd.f32 %v1860, %v2097
        %v2148 = vadd.f32 %v1861, %v2138
        %v2149 = vadd.f32 %v1862, %v2140
        %s2150 = scalar_lea.vmem [#allocation2], 1280
        %v2151 = vld [vmem:[%s2150] sm:$0xff]
        %v2152 = vld [vmem:[%s2150 + $0x8] sm:$0xff]
        %v2153 = vld [vmem:[%s2150 + $0x10] sm:$0xff]
        %v2154 = vld [vmem:[%s2150 + $0x18] sm:$0xff]
        %v2155 = vld [vmem:[%s2150 + $0x20] sm:$0xff]
        %v2156 = vld [vmem:[%s2150 + $0x28] sm:$0xff]
        %v2157 = vld [vmem:[%s2150 + $0x30] sm:$0xff]
        %v2158 = vld [vmem:[%s2150 + $0x38] sm:$0xff]
        %v2159 = vld [vmem:[%s2150 + $0x40] sm:$0xff]
        %v2160 = vld [vmem:[%s2150 + $0x48] sm:$0xff]
        %v2161 = vld [vmem:[%s2150 + $0x50] sm:$0xff]
        %v2162 = vld [vmem:[%s2150 + $0x58] sm:$0xff]
        %v2163 = vld [vmem:[%s2150 + $0x60] sm:$0xff]
        %v2164 = vld [vmem:[%s2150 + $0x68] sm:$0xff]
        %v2165 = vld [vmem:[%s2150 + $0x70] sm:$0xff]
        %v2166 = vld [vmem:[%s2150 + $0x78] sm:$0xff]
        %v2167 = vld [vmem:[%s2150 + $0x80] sm:$0xff]
        %v2168 = vld [vmem:[%s2150 + $0x88] sm:$0xff]
        %v2169 = vld [vmem:[%s2150 + $0x90] sm:$0xff]
        %v2170 = vld [vmem:[%s2150 + $0x98] sm:$0xff]
        %v2171 = vld [vmem:[%s2150 + $0xa0] sm:$0xff]
        %v2172 = vld [vmem:[%s2150 + $0xa8] sm:$0xff]
        %v2173 = vld [vmem:[%s2150 + $0xb0] sm:$0xff]
        %v2174 = vld [vmem:[%s2150 + $0xb8] sm:$0xff]
        %v2175 = vld [vmem:[%s2150 + $0xc0] sm:$0xff]
        %v2176 = vld [vmem:[%s2150 + $0xc8] sm:$0xff]
        %v2177 = vld [vmem:[%s2150 + $0xd0] sm:$0xff]
        %v2178 = vld [vmem:[%s2150 + $0xd8] sm:$0xff]
        %v2179 = vld [vmem:[%s2150 + $0xe0] sm:$0xff]
        %v2180 = vld [vmem:[%s2150 + $0xe8] sm:$0xff]
        %v2181 = vld [vmem:[%s2150 + $0xf0] sm:$0xff]
        %v2182 = vld [vmem:[%s2150 + $0xf8] sm:$0xff]
        %v2215 = vunpack.c.l.b16 %v2151
        %v2216 = vunpack.c.h.b16 %v2151
        %v2217 = vunpack.c.l.b16 %v2152
        %v2218 = vunpack.c.h.b16 %v2152
        %v2219 = vunpack.c.l.b16 %v2153
        %v2220 = vunpack.c.h.b16 %v2153
        %v2221 = vunpack.c.l.b16 %v2154
        %v2222 = vunpack.c.h.b16 %v2154
        %v2223 = vunpack.c.l.b16 %v2155
        %v2224 = vunpack.c.h.b16 %v2155
        %v2225 = vunpack.c.l.b16 %v2156
        %v2226 = vunpack.c.h.b16 %v2156
        %v2227 = vunpack.c.l.b16 %v2157
        %v2228 = vunpack.c.h.b16 %v2157
        %v2229 = vunpack.c.l.b16 %v2158
        %v2230 = vunpack.c.h.b16 %v2158
        %v2231 = vunpack.c.l.b16 %v2159
        %v2232 = vunpack.c.h.b16 %v2159
        %v2233 = vunpack.c.l.b16 %v2160
        %v2234 = vunpack.c.h.b16 %v2160
        %v2235 = vunpack.c.l.b16 %v2161
        %v2236 = vunpack.c.h.b16 %v2161
        %v2237 = vunpack.c.l.b16 %v2162
        %v2238 = vunpack.c.h.b16 %v2162
        %v2239 = vunpack.c.l.b16 %v2163
        %v2240 = vunpack.c.h.b16 %v2163
        %v2241 = vunpack.c.l.b16 %v2164
        %v2242 = vunpack.c.h.b16 %v2164
        %v2243 = vunpack.c.l.b16 %v2165
        %v2244 = vunpack.c.h.b16 %v2165
        %v2245 = vunpack.c.l.b16 %v2166
        %v2246 = vunpack.c.h.b16 %v2166
        %v2247 = vunpack.c.l.b16 %v2167
        %v2248 = vunpack.c.h.b16 %v2167
        %v2249 = vunpack.c.l.b16 %v2168
        %v2250 = vunpack.c.h.b16 %v2168
        %v2251 = vunpack.c.l.b16 %v2169
        %v2252 = vunpack.c.h.b16 %v2169
        %v2253 = vunpack.c.l.b16 %v2170
        %v2254 = vunpack.c.h.b16 %v2170
        %v2255 = vunpack.c.l.b16 %v2171
        %v2256 = vunpack.c.h.b16 %v2171
        %v2257 = vunpack.c.l.b16 %v2172
        %v2258 = vunpack.c.h.b16 %v2172
        %v2259 = vunpack.c.l.b16 %v2173
        %v2260 = vunpack.c.h.b16 %v2173
        %v2261 = vunpack.c.l.b16 %v2174
        %v2262 = vunpack.c.h.b16 %v2174
        %v2263 = vunpack.c.l.b16 %v2175
        %v2264 = vunpack.c.h.b16 %v2175
        %v2265 = vunpack.c.l.b16 %v2176
        %v2266 = vunpack.c.h.b16 %v2176
        %v2267 = vunpack.c.l.b16 %v2177
        %v2268 = vunpack.c.h.b16 %v2177
        %v2269 = vunpack.c.l.b16 %v2178
        %v2270 = vunpack.c.h.b16 %v2178
        %v2271 = vunpack.c.l.b16 %v2179
        %v2272 = vunpack.c.h.b16 %v2179
        %v2273 = vunpack.c.l.b16 %v2180
        %v2274 = vunpack.c.h.b16 %v2180
        %v2275 = vunpack.c.l.b16 %v2181
        %v2276 = vunpack.c.h.b16 %v2181
        %v2277 = vunpack.c.l.b16 %v2182
        %v2278 = vunpack.c.h.b16 %v2182
        %v2279 = vpack.c.b16 %v2219, %v2215
        %v2280 = vpack.c.b16 %v2220, %v2216
        %v2281 = vpack.c.b16 %v2221, %v2217
        %v2282 = vpack.c.b16 %v2222, %v2218
        %v2283 = vpack.c.b16 %v2227, %v2223
        %v2284 = vpack.c.b16 %v2228, %v2224
        %v2285 = vpack.c.b16 %v2229, %v2225
        %v2286 = vpack.c.b16 %v2230, %v2226
        %v2287 = vpack.c.b16 %v2235, %v2231
        %v2288 = vpack.c.b16 %v2236, %v2232
        %v2289 = vpack.c.b16 %v2237, %v2233
        %v2290 = vpack.c.b16 %v2238, %v2234
        %v2291 = vpack.c.b16 %v2243, %v2239
        %v2292 = vpack.c.b16 %v2244, %v2240
        %v2293 = vpack.c.b16 %v2245, %v2241
        %v2294 = vpack.c.b16 %v2246, %v2242
        %v2295 = vpack.c.b16 %v2251, %v2247
        %v2296 = vpack.c.b16 %v2252, %v2248
        %v2297 = vpack.c.b16 %v2253, %v2249
        %v2298 = vpack.c.b16 %v2254, %v2250
        %v2299 = vpack.c.b16 %v2259, %v2255
        %v2300 = vpack.c.b16 %v2260, %v2256
        %v2301 = vpack.c.b16 %v2261, %v2257
        %v2302 = vpack.c.b16 %v2262, %v2258
        %v2303 = vpack.c.b16 %v2267, %v2263
        %v2304 = vpack.c.b16 %v2268, %v2264
        %v2305 = vpack.c.b16 %v2269, %v2265
        %v2306 = vpack.c.b16 %v2270, %v2266
        %v2307 = vpack.c.b16 %v2275, %v2271
        %v2308 = vpack.c.b16 %v2276, %v2272
        %v2309 = vpack.c.b16 %v2277, %v2273
        %v2310 = vpack.c.b16 %v2278, %v2274
        %2343 = vmatprep.subr.bf16.mxu0 %v2280
        %2344 = vmatpush1.bf16.msra.mxu0 %v2279
        %2345 = vmatprep.subr.bf16.mxu0 %v2284
        %2346 = vmatpush1.bf16.msra.mxu0 %v2283
        %2347 = vmatprep.subr.bf16.mxu0 %v2288
        %2348 = vmatpush1.bf16.msra.mxu0 %v2287
        %2349 = vmatprep.subr.bf16.mxu0 %v2292
        %2350 = vmatpush1.bf16.msra.mxu0 %v2291
        %2351 = vmatprep.subr.bf16.mxu0 %v2296
        %2352 = vmatpush1.bf16.msra.mxu0 %v2295
        %2353 = vmatprep.subr.bf16.mxu0 %v2300
        %2354 = vmatpush1.bf16.msra.mxu0 %v2299
        %2355 = vmatprep.subr.bf16.mxu0 %v2304
        %2356 = vmatpush1.bf16.msra.mxu0 %v2303
        %2357 = vmatprep.subr.bf16.mxu0 %v2308
        %2358 = vmatpush1.bf16.msra.mxu0 %v2307
        %2359 = vmatprep.subr.bf16.mxu0 0
        %2360 = vmatpush1.bf16.msra.mxu0 0
        %2361 = vmatprep.subr.bf16.mxu0 0
        %2362 = vmatpush1.bf16.msra.mxu0 0
        %2363 = vmatprep.subr.bf16.mxu0 0
        %2364 = vmatpush1.bf16.msra.mxu0 0
        %2365 = vmatprep.subr.bf16.mxu0 0
        %2366 = vmatpush1.bf16.msra.mxu0 0
        %2367 = vmatprep.subr.bf16.mxu0 0
        %2368 = vmatpush1.bf16.msra.mxu0 0
        %2369 = vmatprep.subr.bf16.mxu0 0
        %2370 = vmatpush1.bf16.msra.mxu0 0
        %2371 = vmatprep.subr.bf16.mxu0 0
        %2372 = vmatpush1.bf16.msra.mxu0 0
        %2373 = vmatprep.subr.bf16.mxu0 0
        %2374 = vmatpush1.bf16.msra.mxu0 0
        %2375 = vmatprep.mubr.bf16.mxu0 0
        %2376 = vmatmul.mubr.bf16.gmra.mrb[0].mxu0 %v730
        %v2377 = vpop.f32.mrb[0].mxu0
        %v2378 = vadd.f32 0.0, %v2377
        %v2379 = vpop.f32.mrb[0].mxu0
        %v2380 = vadd.f32 0.0, %v2379
        %v2381 = vpop.f32.mrb[0].mxu0
        %v2382 = vadd.f32 0.0, %v2381
        %v2383 = vpop.f32.mrb[0].mxu0
        %v2384 = vadd.f32 0.0, %v2383
        %2385 = vdwg.mxu0
        %2386 = vmatprep.subr.bf16.mxu0 %v2282
        %2387 = vmatpush1.bf16.msra.mxu0 %v2281
        %2388 = vmatprep.subr.bf16.mxu0 %v2286
        %2389 = vmatpush1.bf16.msra.mxu0 %v2285
        %2390 = vmatprep.subr.bf16.mxu0 %v2290
        %2391 = vmatpush1.bf16.msra.mxu0 %v2289
        %2392 = vmatprep.subr.bf16.mxu0 %v2294
        %2393 = vmatpush1.bf16.msra.mxu0 %v2293
        %2394 = vmatprep.subr.bf16.mxu0 %v2298
        %2395 = vmatpush1.bf16.msra.mxu0 %v2297
        %2396 = vmatprep.subr.bf16.mxu0 %v2302
        %2397 = vmatpush1.bf16.msra.mxu0 %v2301
        %2398 = vmatprep.subr.bf16.mxu0 %v2306
        %2399 = vmatpush1.bf16.msra.mxu0 %v2305
        %2400 = vmatprep.subr.bf16.mxu0 %v2310
        %2401 = vmatpush1.bf16.msra.mxu0 %v2309
        %2402 = vmatprep.subr.bf16.mxu0 0
        %2403 = vmatpush1.bf16.msra.mxu0 0
        %2404 = vmatprep.subr.bf16.mxu0 0
        %2405 = vmatpush1.bf16.msra.mxu0 0
        %2406 = vmatprep.subr.bf16.mxu0 0
        %2407 = vmatpush1.bf16.msra.mxu0 0
        %2408 = vmatprep.subr.bf16.mxu0 0
        %2409 = vmatpush1.bf16.msra.mxu0 0
        %2410 = vmatprep.subr.bf16.mxu0 0
        %2411 = vmatpush1.bf16.msra.mxu0 0
        %2412 = vmatprep.subr.bf16.mxu0 0
        %2413 = vmatpush1.bf16.msra.mxu0 0
        %2414 = vmatprep.subr.bf16.mxu0 0
        %2415 = vmatpush1.bf16.msra.mxu0 0
        %2416 = vmatprep.subr.bf16.mxu0 0
        %2417 = vmatpush1.bf16.msra.mxu0 0
        %2418 = vmatprep.mubr.bf16.mxu0 0
        %2419 = vmatmul.mubr.bf16.gmra.mrb[0].mxu0 %v730
        %v2420 = vpop.f32.mrb[0].mxu0
        %v2421 = vadd.f32 0.0, %v2420
        %v2422 = vpop.f32.mrb[0].mxu0
        %v2423 = vadd.f32 0.0, %v2422
        %v2424 = vpop.f32.mrb[0].mxu0
        %v2425 = vadd.f32 0.0, %v2424
        %v2426 = vpop.f32.mrb[0].mxu0
        %v2427 = vadd.f32 0.0, %v2426
        %2428 = vdwg.mxu0
        %v2429 = vadd.f32 %v2142, %v2378
        %v2430 = vadd.f32 %v2143, %v2380
        %v2431 = vadd.f32 %v2144, %v2421
        %v2432 = vadd.f32 %v2145, %v2423
        %v2433 = vadd.f32 %v2146, %v2382
        %v2434 = vadd.f32 %v2147, %v2384
        %v2435 = vadd.f32 %v2148, %v2425
        %v2436 = vadd.f32 %v2149, %v2427
        %s2437 = scalar_lea.vmem [#allocation2], 1536
        %v2438 = vld [vmem:[%s2437] sm:$0xff]
        %v2439 = vld [vmem:[%s2437 + $0x8] sm:$0xff]
        %v2440 = vld [vmem:[%s2437 + $0x10] sm:$0xff]
        %v2441 = vld [vmem:[%s2437 + $0x18] sm:$0xff]
        %v2442 = vld [vmem:[%s2437 + $0x20] sm:$0xff]
        %v2443 = vld [vmem:[%s2437 + $0x28] sm:$0xff]
        %v2444 = vld [vmem:[%s2437 + $0x30] sm:$0xff]
        %v2445 = vld [vmem:[%s2437 + $0x38] sm:$0xff]
        %v2446 = vld [vmem:[%s2437 + $0x40] sm:$0xff]
        %v2447 = vld [vmem:[%s2437 + $0x48] sm:$0xff]
        %v2448 = vld [vmem:[%s2437 + $0x50] sm:$0xff]
        %v2449 = vld [vmem:[%s2437 + $0x58] sm:$0xff]
        %v2450 = vld [vmem:[%s2437 + $0x60] sm:$0xff]
        %v2451 = vld [vmem:[%s2437 + $0x68] sm:$0xff]
        %v2452 = vld [vmem:[%s2437 + $0x70] sm:$0xff]
        %v2453 = vld [vmem:[%s2437 + $0x78] sm:$0xff]
        %v2454 = vld [vmem:[%s2437 + $0x80] sm:$0xff]
        %v2455 = vld [vmem:[%s2437 + $0x88] sm:$0xff]
        %v2456 = vld [vmem:[%s2437 + $0x90] sm:$0xff]
        %v2457 = vld [vmem:[%s2437 + $0x98] sm:$0xff]
        %v2458 = vld [vmem:[%s2437 + $0xa0] sm:$0xff]
        %v2459 = vld [vmem:[%s2437 + $0xa8] sm:$0xff]
        %v2460 = vld [vmem:[%s2437 + $0xb0] sm:$0xff]
        %v2461 = vld [vmem:[%s2437 + $0xb8] sm:$0xff]
        %v2462 = vld [vmem:[%s2437 + $0xc0] sm:$0xff]
        %v2463 = vld [vmem:[%s2437 + $0xc8] sm:$0xff]
        %v2464 = vld [vmem:[%s2437 + $0xd0] sm:$0xff]
        %v2465 = vld [vmem:[%s2437 + $0xd8] sm:$0xff]
        %v2466 = vld [vmem:[%s2437 + $0xe0] sm:$0xff]
        %v2467 = vld [vmem:[%s2437 + $0xe8] sm:$0xff]
        %v2468 = vld [vmem:[%s2437 + $0xf0] sm:$0xff]
        %v2469 = vld [vmem:[%s2437 + $0xf8] sm:$0xff]
        %v2502 = vunpack.c.l.b16 %v2438
        %v2503 = vunpack.c.h.b16 %v2438
        %v2504 = vunpack.c.l.b16 %v2439
        %v2505 = vunpack.c.h.b16 %v2439
        %v2506 = vunpack.c.l.b16 %v2440
        %v2507 = vunpack.c.h.b16 %v2440
        %v2508 = vunpack.c.l.b16 %v2441
        %v2509 = vunpack.c.h.b16 %v2441
        %v2510 = vunpack.c.l.b16 %v2442
        %v2511 = vunpack.c.h.b16 %v2442
        %v2512 = vunpack.c.l.b16 %v2443
        %v2513 = vunpack.c.h.b16 %v2443
        %v2514 = vunpack.c.l.b16 %v2444
        %v2515 = vunpack.c.h.b16 %v2444
        %v2516 = vunpack.c.l.b16 %v2445
        %v2517 = vunpack.c.h.b16 %v2445
        %v2518 = vunpack.c.l.b16 %v2446
        %v2519 = vunpack.c.h.b16 %v2446
        %v2520 = vunpack.c.l.b16 %v2447
        %v2521 = vunpack.c.h.b16 %v2447
        %v2522 = vunpack.c.l.b16 %v2448
        %v2523 = vunpack.c.h.b16 %v2448
        %v2524 = vunpack.c.l.b16 %v2449
        %v2525 = vunpack.c.h.b16 %v2449
        %v2526 = vunpack.c.l.b16 %v2450
        %v2527 = vunpack.c.h.b16 %v2450
        %v2528 = vunpack.c.l.b16 %v2451
        %v2529 = vunpack.c.h.b16 %v2451
        %v2530 = vunpack.c.l.b16 %v2452
        %v2531 = vunpack.c.h.b16 %v2452
        %v2532 = vunpack.c.l.b16 %v2453
        %v2533 = vunpack.c.h.b16 %v2453
        %v2534 = vunpack.c.l.b16 %v2454
        %v2535 = vunpack.c.h.b16 %v2454
        %v2536 = vunpack.c.l.b16 %v2455
        %v2537 = vunpack.c.h.b16 %v2455
        %v2538 = vunpack.c.l.b16 %v2456
        %v2539 = vunpack.c.h.b16 %v2456
        %v2540 = vunpack.c.l.b16 %v2457
        %v2541 = vunpack.c.h.b16 %v2457
        %v2542 = vunpack.c.l.b16 %v2458
        %v2543 = vunpack.c.h.b16 %v2458
        %v2544 = vunpack.c.l.b16 %v2459
        %v2545 = vunpack.c.h.b16 %v2459
        %v2546 = vunpack.c.l.b16 %v2460
        %v2547 = vunpack.c.h.b16 %v2460
        %v2548 = vunpack.c.l.b16 %v2461
        %v2549 = vunpack.c.h.b16 %v2461
        %v2550 = vunpack.c.l.b16 %v2462
        %v2551 = vunpack.c.h.b16 %v2462
        %v2552 = vunpack.c.l.b16 %v2463
        %v2553 = vunpack.c.h.b16 %v2463
        %v2554 = vunpack.c.l.b16 %v2464
        %v2555 = vunpack.c.h.b16 %v2464
        %v2556 = vunpack.c.l.b16 %v2465
        %v2557 = vunpack.c.h.b16 %v2465
        %v2558 = vunpack.c.l.b16 %v2466
        %v2559 = vunpack.c.h.b16 %v2466
        %v2560 = vunpack.c.l.b16 %v2467
        %v2561 = vunpack.c.h.b16 %v2467
        %v2562 = vunpack.c.l.b16 %v2468
        %v2563 = vunpack.c.h.b16 %v2468
        %v2564 = vunpack.c.l.b16 %v2469
        %v2565 = vunpack.c.h.b16 %v2469
        %v2566 = vpack.c.b16 %v2506, %v2502
        %v2567 = vpack.c.b16 %v2507, %v2503
        %v2568 = vpack.c.b16 %v2508, %v2504
        %v2569 = vpack.c.b16 %v2509, %v2505
        %v2570 = vpack.c.b16 %v2514, %v2510
        %v2571 = vpack.c.b16 %v2515, %v2511
        %v2572 = vpack.c.b16 %v2516, %v2512
        %v2573 = vpack.c.b16 %v2517, %v2513
        %v2574 = vpack.c.b16 %v2522, %v2518
        %v2575 = vpack.c.b16 %v2523, %v2519
        %v2576 = vpack.c.b16 %v2524, %v2520
        %v2577 = vpack.c.b16 %v2525, %v2521
        %v2578 = vpack.c.b16 %v2530, %v2526
        %v2579 = vpack.c.b16 %v2531, %v2527
        %v2580 = vpack.c.b16 %v2532, %v2528
        %v2581 = vpack.c.b16 %v2533, %v2529
        %v2582 = vpack.c.b16 %v2538, %v2534
        %v2583 = vpack.c.b16 %v2539, %v2535
        %v2584 = vpack.c.b16 %v2540, %v2536
        %v2585 = vpack.c.b16 %v2541, %v2537
        %v2586 = vpack.c.b16 %v2546, %v2542
        %v2587 = vpack.c.b16 %v2547, %v2543
        %v2588 = vpack.c.b16 %v2548, %v2544
        %v2589 = vpack.c.b16 %v2549, %v2545
        %v2590 = vpack.c.b16 %v2554, %v2550
        %v2591 = vpack.c.b16 %v2555, %v2551
        %v2592 = vpack.c.b16 %v2556, %v2552
        %v2593 = vpack.c.b16 %v2557, %v2553
        %v2594 = vpack.c.b16 %v2562, %v2558
        %v2595 = vpack.c.b16 %v2563, %v2559
        %v2596 = vpack.c.b16 %v2564, %v2560
        %v2597 = vpack.c.b16 %v2565, %v2561
        %2630 = vmatprep.subr.bf16.mxu0 %v2567
        %2631 = vmatpush1.bf16.msra.mxu0 %v2566
        %2632 = vmatprep.subr.bf16.mxu0 %v2571
        %2633 = vmatpush1.bf16.msra.mxu0 %v2570
        %2634 = vmatprep.subr.bf16.mxu0 %v2575
        %2635 = vmatpush1.bf16.msra.mxu0 %v2574
        %2636 = vmatprep.subr.bf16.mxu0 %v2579
        %2637 = vmatpush1.bf16.msra.mxu0 %v2578
        %2638 = vmatprep.subr.bf16.mxu0 %v2583
        %2639 = vmatpush1.bf16.msra.mxu0 %v2582
        %2640 = vmatprep.subr.bf16.mxu0 %v2587
        %2641 = vmatpush1.bf16.msra.mxu0 %v2586
        %2642 = vmatprep.subr.bf16.mxu0 %v2591
        %2643 = vmatpush1.bf16.msra.mxu0 %v2590
        %2644 = vmatprep.subr.bf16.mxu0 %v2595
        %2645 = vmatpush1.bf16.msra.mxu0 %v2594
        %2646 = vmatprep.subr.bf16.mxu0 0
        %2647 = vmatpush1.bf16.msra.mxu0 0
        %2648 = vmatprep.subr.bf16.mxu0 0
        %2649 = vmatpush1.bf16.msra.mxu0 0
        %2650 = vmatprep.subr.bf16.mxu0 0
        %2651 = vmatpush1.bf16.msra.mxu0 0
        %2652 = vmatprep.subr.bf16.mxu0 0
        %2653 = vmatpush1.bf16.msra.mxu0 0
        %2654 = vmatprep.subr.bf16.mxu0 0
        %2655 = vmatpush1.bf16.msra.mxu0 0
        %2656 = vmatprep.subr.bf16.mxu0 0
        %2657 = vmatpush1.bf16.msra.mxu0 0
        %2658 = vmatprep.subr.bf16.mxu0 0
        %2659 = vmatpush1.bf16.msra.mxu0 0
        %2660 = vmatprep.subr.bf16.mxu0 0
        %2661 = vmatpush1.bf16.msra.mxu0 0
        %2662 = vmatprep.mubr.bf16.mxu0 0
        %2663 = vmatmul.mubr.bf16.gmra.mrb[0].mxu0 %v731
        %v2664 = vpop.f32.mrb[0].mxu0
        %v2665 = vadd.f32 0.0, %v2664
        %v2666 = vpop.f32.mrb[0].mxu0
        %v2667 = vadd.f32 0.0, %v2666
        %v2668 = vpop.f32.mrb[0].mxu0
        %v2669 = vadd.f32 0.0, %v2668
        %v2670 = vpop.f32.mrb[0].mxu0
        %v2671 = vadd.f32 0.0, %v2670
        %2672 = vdwg.mxu0
        %2673 = vmatprep.subr.bf16.mxu0 %v2569
        %2674 = vmatpush1.bf16.msra.mxu0 %v2568
        %2675 = vmatprep.subr.bf16.mxu0 %v2573
        %2676 = vmatpush1.bf16.msra.mxu0 %v2572
        %2677 = vmatprep.subr.bf16.mxu0 %v2577
        %2678 = vmatpush1.bf16.msra.mxu0 %v2576
        %2679 = vmatprep.subr.bf16.mxu0 %v2581
        %2680 = vmatpush1.bf16.msra.mxu0 %v2580
        %2681 = vmatprep.subr.bf16.mxu0 %v2585
        %2682 = vmatpush1.bf16.msra.mxu0 %v2584
        %2683 = vmatprep.subr.bf16.mxu0 %v2589
        %2684 = vmatpush1.bf16.msra.mxu0 %v2588
        %2685 = vmatprep.subr.bf16.mxu0 %v2593
        %2686 = vmatpush1.bf16.msra.mxu0 %v2592
        %2687 = vmatprep.subr.bf16.mxu0 %v2597
        %2688 = vmatpush1.bf16.msra.mxu0 %v2596
        %2689 = vmatprep.subr.bf16.mxu0 0
        %2690 = vmatpush1.bf16.msra.mxu0 0
        %2691 = vmatprep.subr.bf16.mxu0 0
        %2692 = vmatpush1.bf16.msra.mxu0 0
        %2693 = vmatprep.subr.bf16.mxu0 0
        %2694 = vmatpush1.bf16.msra.mxu0 0
        %2695 = vmatprep.subr.bf16.mxu0 0
        %2696 = vmatpush1.bf16.msra.mxu0 0
        %2697 = vmatprep.subr.bf16.mxu0 0
        %2698 = vmatpush1.bf16.msra.mxu0 0
        %2699 = vmatprep.subr.bf16.mxu0 0
        %2700 = vmatpush1.bf16.msra.mxu0 0
        %2701 = vmatprep.subr.bf16.mxu0 0
        %2702 = vmatpush1.bf16.msra.mxu0 0
        %2703 = vmatprep.subr.bf16.mxu0 0
        %2704 = vmatpush1.bf16.msra.mxu0 0
        %2705 = vmatprep.mubr.bf16.mxu0 0
        %2706 = vmatmul.mubr.bf16.gmra.mrb[0].mxu0 %v731
        %v2707 = vpop.f32.mrb[0].mxu0
        %v2708 = vadd.f32 0.0, %v2707
        %v2709 = vpop.f32.mrb[0].mxu0
        %v2710 = vadd.f32 0.0, %v2709
        %v2711 = vpop.f32.mrb[0].mxu0
        %v2712 = vadd.f32 0.0, %v2711
        %v2713 = vpop.f32.mrb[0].mxu0
        %v2714 = vadd.f32 0.0, %v2713
        %2715 = vdwg.mxu0
        %v2716 = vadd.f32 %v2429, %v2665
        %v2717 = vadd.f32 %v2430, %v2667
        %v2718 = vadd.f32 %v2431, %v2708
        %v2719 = vadd.f32 %v2432, %v2710
        %v2720 = vadd.f32 %v2433, %v2669
        %v2721 = vadd.f32 %v2434, %v2671
        %v2722 = vadd.f32 %v2435, %v2712
        %v2723 = vadd.f32 %v2436, %v2714
        %v2724 = vld [vmem:[#allocation4] sm:$0xf]
        %v2726 = vlaneseq
        %v2727 = vshrl.u32 %v2726, 7
        %v2728 = vsub.s32 0, %v2727
        %v2729 = vrot.slane %v2724, %v2728
        %v2730 = vlaneseq
        %v2731 = vshrl.u32 %v2730, 7
        %v2732 = vsub.s32 1, %v2731
        %v2733 = vrot.slane %v2724, %v2732
        %v2734 = vlaneseq
        %v2735 = vshrl.u32 %v2734, 7
        %v2736 = vsub.s32 2, %v2735
        %v2737 = vrot.slane %v2724, %v2736
        %v2738 = vlaneseq
        %v2739 = vshrl.u32 %v2738, 7
        %v2740 = vsub.s32 3, %v2739
        %v2741 = vrot.slane %v2724, %v2740
        %v2746 = vadd.f32 %v2716, %v2729
        %v2747 = vadd.f32 %v2717, %v2733
        %v2748 = vadd.f32 %v2718, %v2737
        %v2749 = vadd.f32 %v2719, %v2741
        %v2750 = vadd.f32 %v2720, %v2729
        %v2751 = vadd.f32 %v2721, %v2733
        %v2752 = vadd.f32 %v2722, %v2737
        %v2753 = vadd.f32 %v2723, %v2741
        %v2754 = vmax.f32 %v2746, 0.0
        %v2755 = vmax.f32 %v2747, 0.0
        %v2756 = vmax.f32 %v2748, 0.0
        %v2757 = vmax.f32 %v2749, 0.0
        %v2758 = vmax.f32 %v2750, 0.0
        %v2759 = vmax.f32 %v2751, 0.0
        %v2760 = vmax.f32 %v2752, 0.0
        %v2761 = vmax.f32 %v2753, 0.0
        %v2762 = vpack.c.bf16 %v2758, %v2754
        %v2763 = vpack.c.bf16 %v2759, %v2755
        %v2764 = vpack.c.bf16 %v2760, %v2756
        %v2765 = vpack.c.bf16 %v2761, %v2757
        %v2766 = vld [vmem:[%s4] sm:$0xf]
        %v2767 = vld [vmem:[%s4 + $0x4] sm:$0xf]
        %v2768 = vld [vmem:[%s4 + $0x8] sm:$0xf]
        %v2769 = vld [vmem:[%s4 + $0xc] sm:$0xf]
        %v2770 = vld [vmem:[%s4 + $0x10] sm:$0xf]
        %v2776 = vunpack.c.l.b16 %v2766
        %v2777 = vunpack.c.l.b16 %v2767
        %v2778 = vunpack.c.l.b16 %v2768
        %v2779 = vunpack.c.l.b16 %v2769
        %v2780 = vunpack.c.l.b16 %v2770
        %v2781 = vpack.c.b16 %v2777, %v2776
        %v2782 = vpack.c.b16 %v2779, %v2778
        %v2783 = vpack.c.b16 %v2780, %v2780
        %vm2784 = vcmask 130048
        %v2786 = vsel %vm2784, %v2781, 0
        %v2789 = vsel %vm2784, %v2782, 0
        %v2792 = vsel %vm2784, %v2783, 0
        %2794 = vmatprep.subr.bf16.mxu0 %v2763
        %2795 = vmatpush1.bf16.msra.mxu0 %v2762
        %2796 = vmatprep.subr.bf16.mxu0 0
        %2797 = vmatpush1.bf16.msra.mxu0 0
        %2798 = vmatprep.subr.bf16.mxu0 0
        %2799 = vmatpush1.bf16.msra.mxu0 0
        %2800 = vmatprep.subr.bf16.mxu0 0
        %2801 = vmatpush1.bf16.msra.mxu0 0
        %2802 = vmatprep.subr.bf16.mxu0 0
        %2803 = vmatpush1.bf16.msra.mxu0 0
        %2804 = vmatprep.subr.bf16.mxu0 0
        %2805 = vmatpush1.bf16.msra.mxu0 0
        %2806 = vmatprep.subr.bf16.mxu0 0
        %2807 = vmatpush1.bf16.msra.mxu0 0
        %2808 = vmatprep.subr.bf16.mxu0 0
        %2809 = vmatpush1.bf16.msra.mxu0 0
        %2810 = vmatprep.subr.bf16.mxu0 0
        %2811 = vmatpush1.bf16.msra.mxu0 0
        %2812 = vmatprep.subr.bf16.mxu0 0
        %2813 = vmatpush1.bf16.msra.mxu0 0
        %2814 = vmatprep.subr.bf16.mxu0 0
        %2815 = vmatpush1.bf16.msra.mxu0 0
        %2816 = vmatprep.subr.bf16.mxu0 0
        %2817 = vmatpush1.bf16.msra.mxu0 0
        %2818 = vmatprep.subr.bf16.mxu0 0
        %2819 = vmatpush1.bf16.msra.mxu0 0
        %2820 = vmatprep.subr.bf16.mxu0 0
        %2821 = vmatpush1.bf16.msra.mxu0 0
        %2822 = vmatprep.subr.bf16.mxu0 0
        %2823 = vmatpush1.bf16.msra.mxu0 0
        %2824 = vmatprep.subr.bf16.mxu0 0
        %2825 = vmatpush1.bf16.msra.mxu0 0
        %2826 = vmatprep.mubr.bf16.mxu0 0
        %2827 = vmatmul.mubr.bf16.gmra.mrb[0].mxu0 %v2786
        %v2828 = vpop.f32.mrb[0].mxu0
        %v2829 = vadd.f32 0.0, %v2828
        %v2830 = vpop.f32.mrb[0].mxu0
        %v2831 = vadd.f32 0.0, %v2830
        %v2832 = vpop.f32.mrb[0].mxu0
        %v2833 = vadd.f32 0.0, %v2832
        %v2834 = vpop.f32.mrb[0].mxu0
        %v2835 = vadd.f32 0.0, %v2834
        %2836 = vmatprep.mubr.bf16.mxu0 0
        %2837 = vmatmul.mubr.bf16.gmra.mrb[0].mxu0 %v2789
        %v2838 = vpop.f32.mrb[0].mxu0
        %v2839 = vadd.f32 0.0, %v2838
        %v2840 = vpop.f32.mrb[0].mxu0
        %v2841 = vadd.f32 0.0, %v2840
        %v2842 = vpop.f32.mrb[0].mxu0
        %v2843 = vadd.f32 0.0, %v2842
        %v2844 = vpop.f32.mrb[0].mxu0
        %v2845 = vadd.f32 0.0, %v2844
        %2846 = vmatprep.mubr.bf16.mxu0 0
        %2847 = vmatmul.mubr.bf16.gmra.mrb[0].mxu0 %v2792
        %v2848 = vpop.f32.mrb[0].mxu0
        %v2849 = vadd.f32 0.0, %v2848
        %v2850 = vpop.f32.mrb[0].mxu0
        %v2851 = vadd.f32 0.0, %v2850
        %v2852 = vpop.f32.mrb[0].mxu0
        %v2853 = vpop.f32.mrb[0].mxu0
        %2854 = vdwg.mxu0
        %2855 = vmatprep.subr.bf16.mxu0 %v2765
        %2856 = vmatpush1.bf16.msra.mxu0 %v2764
        %2857 = vmatprep.subr.bf16.mxu0 0
        %2858 = vmatpush1.bf16.msra.mxu0 0
        %2859 = vmatprep.subr.bf16.mxu0 0
        %2860 = vmatpush1.bf16.msra.mxu0 0
        %2861 = vmatprep.subr.bf16.mxu0 0
        %2862 = vmatpush1.bf16.msra.mxu0 0
        %2863 = vmatprep.subr.bf16.mxu0 0
        %2864 = vmatpush1.bf16.msra.mxu0 0
        %2865 = vmatprep.subr.bf16.mxu0 0
        %2866 = vmatpush1.bf16.msra.mxu0 0
        %2867 = vmatprep.subr.bf16.mxu0 0
        %2868 = vmatpush1.bf16.msra.mxu0 0
        %2869 = vmatprep.subr.bf16.mxu0 0
        %2870 = vmatpush1.bf16.msra.mxu0 0
        %2871 = vmatprep.subr.bf16.mxu0 0
        %2872 = vmatpush1.bf16.msra.mxu0 0
        %2873 = vmatprep.subr.bf16.mxu0 0
        %2874 = vmatpush1.bf16.msra.mxu0 0
        %2875 = vmatprep.subr.bf16.mxu0 0
        %2876 = vmatpush1.bf16.msra.mxu0 0
        %2877 = vmatprep.subr.bf16.mxu0 0
        %2878 = vmatpush1.bf16.msra.mxu0 0
        %2879 = vmatprep.subr.bf16.mxu0 0
        %2880 = vmatpush1.bf16.msra.mxu0 0
        %2881 = vmatprep.subr.bf16.mxu0 0
        %2882 = vmatpush1.bf16.msra.mxu0 0
        %2883 = vmatprep.subr.bf16.mxu0 0
        %2884 = vmatpush1.bf16.msra.mxu0 0
        %2885 = vmatprep.subr.bf16.mxu0 0
        %2886 = vmatpush1.bf16.msra.mxu0 0
        %2887 = vmatprep.mubr.bf16.mxu0 0
        %2888 = vmatmul.mubr.bf16.gmra.mrb[0].mxu0 %v2786
        %v2889 = vpop.f32.mrb[0].mxu0
        %v2890 = vadd.f32 0.0, %v2889
        %v2891 = vpop.f32.mrb[0].mxu0
        %v2892 = vadd.f32 0.0, %v2891
        %v2893 = vpop.f32.mrb[0].mxu0
        %v2894 = vadd.f32 0.0, %v2893
        %v2895 = vpop.f32.mrb[0].mxu0
        %v2896 = vadd.f32 0.0, %v2895
        %2897 = vmatprep.mubr.bf16.mxu0 0
        %2898 = vmatmul.mubr.bf16.gmra.mrb[0].mxu0 %v2789
        %v2899 = vpop.f32.mrb[0].mxu0
        %v2900 = vadd.f32 0.0, %v2899
        %v2901 = vpop.f32.mrb[0].mxu0
        %v2902 = vadd.f32 0.0, %v2901
        %v2903 = vpop.f32.mrb[0].mxu0
        %v2904 = vadd.f32 0.0, %v2903
        %v2905 = vpop.f32.mrb[0].mxu0
        %v2906 = vadd.f32 0.0, %v2905
        %2907 = vmatprep.mubr.bf16.mxu0 0
        %2908 = vmatmul.mubr.bf16.gmra.mrb[0].mxu0 %v2792
        %v2909 = vpop.f32.mrb[0].mxu0
        %v2910 = vadd.f32 0.0, %v2909
        %v2911 = vpop.f32.mrb[0].mxu0
        %v2912 = vadd.f32 0.0, %v2911
        %v2913 = vpop.f32.mrb[0].mxu0
        %v2914 = vpop.f32.mrb[0].mxu0
        %2915 = vdwg.mxu0
        %v2916 = vpack.c.bf16 %v2833, %v2829
        %v2917 = vpack.c.bf16 %v2835, %v2831
        %v2918 = vpack.c.bf16 %v2894, %v2890
        %v2919 = vpack.c.bf16 %v2896, %v2892
        %v2920 = vpack.c.bf16 %v2843, %v2839
        %v2921 = vpack.c.bf16 %v2845, %v2841
        %v2922 = vpack.c.bf16 %v2904, %v2900
        %v2923 = vpack.c.bf16 %v2906, %v2902
        %v2924 = vpack.c.bf16 %v2849, %v2849
        %v2925 = vpack.c.bf16 %v2851, %v2851
        %v2926 = vpack.c.bf16 %v2910, %v2910
        %v2927 = vpack.c.bf16 %v2912, %v2912
        %v2928 = vld [vmem:[#allocation6] sm:$0xff]
        %v2929 = vld [vmem:[#allocation6 + $0x8] sm:$0xff]
        %v2930 = vld [vmem:[#allocation6 + $0x10] sm:$0xff]
        %v2931 = vld [vmem:[#allocation6 + $0x18] sm:$0xff]
        %v2932 = vld [vmem:[#allocation6 + $0x20] sm:$0xff]
        %v2933 = vld [vmem:[#allocation6 + $0x28] sm:$0xff]
        %v2934 = vld [vmem:[#allocation6 + $0x30] sm:$0xff]
        %v2935 = vld [vmem:[#allocation6 + $0x38] sm:$0xff]
        %v2936 = vld [vmem:[#allocation6 + $0x40] sm:$0xff]
        %v2937 = vld [vmem:[#allocation6 + $0x48] sm:$0xff]
        %v2938 = vld [vmem:[#allocation6 + $0x50] sm:$0xff]
        %v2939 = vld [vmem:[#allocation6 + $0x58] sm:$0xff]
        %v2940 = vld [vmem:[#allocation6 + $0x60] sm:$0xff]
        %v2941 = vld [vmem:[#allocation6 + $0x68] sm:$0xff]
        %v2942 = vld [vmem:[#allocation6 + $0x70] sm:$0xff]
        %v2943 = vld [vmem:[#allocation6 + $0x78] sm:$0xff]
        %v2944 = vld [vmem:[#allocation6 + $0x80] sm:$0xff]
        %v2945 = vld [vmem:[#allocation6 + $0x88] sm:$0xff]
        %v2946 = vld [vmem:[#allocation6 + $0x90] sm:$0xff]
        %v2947 = vld [vmem:[#allocation6 + $0x98] sm:$0xff]
        %v2948 = vld [vmem:[#allocation6 + $0xa0] sm:$0xff]
        %v2949 = vld [vmem:[#allocation6 + $0xa8] sm:$0xff]
        %v2950 = vld [vmem:[#allocation6 + $0xb0] sm:$0xff]
        %v2951 = vld [vmem:[#allocation6 + $0xb8] sm:$0xff]
        %v2952 = vld [vmem:[#allocation6 + $0xc0] sm:$0xff]
        %v2953 = vld [vmem:[#allocation6 + $0xc8] sm:$0xff]
        %v2954 = vld [vmem:[#allocation6 + $0xd0] sm:$0xff]
        %v2955 = vld [vmem:[#allocation6 + $0xd8] sm:$0xff]
        %v2956 = vld [vmem:[#allocation6 + $0xe0] sm:$0xff]
        %v2957 = vld [vmem:[#allocation6 + $0xe8] sm:$0xff]
        %v2958 = vld [vmem:[#allocation6 + $0xf0] sm:$0xff]
        %v2959 = vld [vmem:[#allocation6 + $0xf8] sm:$0xff]
        %v2960 = vld [vmem:[#allocation6 + $0x100] sm:$0xff]
        %v2961 = vld [vmem:[#allocation6 + $0x108] sm:$0xff]
        %v2962 = vld [vmem:[#allocation6 + $0x110] sm:$0xff]
        %v2963 = vld [vmem:[#allocation6 + $0x118] sm:$0xff]
        %v2964 = vld [vmem:[#allocation6 + $0x120] sm:$0xff]
        %v2965 = vld [vmem:[#allocation6 + $0x128] sm:$0xff]
        %v2966 = vld [vmem:[#allocation6 + $0x130] sm:$0xff]
        %v2967 = vld [vmem:[#allocation6 + $0x138] sm:$0xff]
        %v2968 = vld [vmem:[#allocation6 + $0x140] sm:$0xff]
        %v2969 = vld [vmem:[#allocation6 + $0x148] sm:$0xff]
        %v2970 = vld [vmem:[#allocation6 + $0x150] sm:$0xff]
        %v2971 = vld [vmem:[#allocation6 + $0x158] sm:$0xff]
        %v2972 = vld [vmem:[#allocation6 + $0x160] sm:$0xff]
        %v2973 = vld [vmem:[#allocation6 + $0x168] sm:$0xff]
        %v2974 = vld [vmem:[#allocation6 + $0x170] sm:$0xff]
        %v2975 = vld [vmem:[#allocation6 + $0x178] sm:$0xff]
        %v2976 = vld [vmem:[#allocation6 + $0x180] sm:$0xff]
        %v2977 = vld [vmem:[#allocation6 + $0x188] sm:$0xff]
        %v2978 = vld [vmem:[#allocation6 + $0x190] sm:$0xff]
        %v2979 = vld [vmem:[#allocation6 + $0x198] sm:$0xff]
        %v2980 = vld [vmem:[#allocation6 + $0x1a0] sm:$0xff]
        %v2981 = vld [vmem:[#allocation6 + $0x1a8] sm:$0xff]
        %v2982 = vld [vmem:[#allocation6 + $0x1b0] sm:$0xff]
        %v2983 = vld [vmem:[#allocation6 + $0x1b8] sm:$0xff]
        %v2984 = vld [vmem:[#allocation6 + $0x1c0] sm:$0xff]
        %v2985 = vld [vmem:[#allocation6 + $0x1c8] sm:$0xff]
        %v2986 = vld [vmem:[#allocation6 + $0x1d0] sm:$0xff]
        %v2987 = vld [vmem:[#allocation6 + $0x1d8] sm:$0xff]
        %v2988 = vld [vmem:[#allocation6 + $0x1e0] sm:$0xff]
        %v2989 = vld [vmem:[#allocation6 + $0x1e8] sm:$0xff]
        %v2990 = vld [vmem:[#allocation6 + $0x1f0] sm:$0xff]
        %v2991 = vld [vmem:[#allocation6 + $0x1f8] sm:$0xff]
        %s2992 = scalar_lea.vmem [#allocation6], 512
        %v2993 = vld [vmem:[%s2992] sm:$0xff]
        %v2994 = vld [vmem:[%s2992 + $0x8] sm:$0xff]
        %v2995 = vld [vmem:[%s2992 + $0x10] sm:$0xff]
        %v2996 = vld [vmem:[%s2992 + $0x18] sm:$0xff]
        %v2997 = vld [vmem:[%s2992 + $0x20] sm:$0xff]
        %v2998 = vld [vmem:[%s2992 + $0x28] sm:$0xff]
        %v2999 = vld [vmem:[%s2992 + $0x30] sm:$0xff]
        %v3000 = vld [vmem:[%s2992 + $0x38] sm:$0xff]
        %v3001 = vld [vmem:[%s2992 + $0x40] sm:$0xff]
        %v3002 = vld [vmem:[%s2992 + $0x48] sm:$0xff]
        %v3003 = vld [vmem:[%s2992 + $0x50] sm:$0xff]
        %v3004 = vld [vmem:[%s2992 + $0x58] sm:$0xff]
        %v3005 = vld [vmem:[%s2992 + $0x60] sm:$0xff]
        %v3006 = vld [vmem:[%s2992 + $0x68] sm:$0xff]
        %v3007 = vld [vmem:[%s2992 + $0x70] sm:$0xff]
        %v3008 = vld [vmem:[%s2992 + $0x78] sm:$0xff]
        %v3009 = vld [vmem:[%s2992 + $0x80] sm:$0xff]
        %v3010 = vld [vmem:[%s2992 + $0x88] sm:$0xff]
        %v3011 = vld [vmem:[%s2992 + $0x90] sm:$0xff]
        %v3012 = vld [vmem:[%s2992 + $0x98] sm:$0xff]
        %v3013 = vld [vmem:[%s2992 + $0xa0] sm:$0xff]
        %v3014 = vld [vmem:[%s2992 + $0xa8] sm:$0xff]
        %v3015 = vld [vmem:[%s2992 + $0xb0] sm:$0xff]
        %v3016 = vld [vmem:[%s2992 + $0xb8] sm:$0xff]
        %v3017 = vld [vmem:[%s2992 + $0xc0] sm:$0xff]
        %v3018 = vld [vmem:[%s2992 + $0xc8] sm:$0xff]
        %v3019 = vld [vmem:[%s2992 + $0xd0] sm:$0xff]
        %v3020 = vld [vmem:[%s2992 + $0xd8] sm:$0xff]
        %v3021 = vld [vmem:[%s2992 + $0xe0] sm:$0xff]
        %v3022 = vld [vmem:[%s2992 + $0xe8] sm:$0xff]
        %v3023 = vld [vmem:[%s2992 + $0xf0] sm:$0xff]
        %v3024 = vld [vmem:[%s2992 + $0xf8] sm:$0xff]
        %v3025 = vld [vmem:[%s2992 + $0x100] sm:$0xff]
        %v3026 = vld [vmem:[%s2992 + $0x108] sm:$0xff]
        %v3027 = vld [vmem:[%s2992 + $0x110] sm:$0xff]
        %v3028 = vld [vmem:[%s2992 + $0x118] sm:$0xff]
        %v3029 = vld [vmem:[%s2992 + $0x120] sm:$0xff]
        %v3030 = vld [vmem:[%s2992 + $0x128] sm:$0xff]
        %v3031 = vld [vmem:[%s2992 + $0x130] sm:$0xff]
        %v3032 = vld [vmem:[%s2992 + $0x138] sm:$0xff]
        %v3033 = vld [vmem:[%s2992 + $0x140] sm:$0xff]
        %v3034 = vld [vmem:[%s2992 + $0x148] sm:$0xff]
        %v3035 = vld [vmem:[%s2992 + $0x150] sm:$0xff]
        %v3036 = vld [vmem:[%s2992 + $0x158] sm:$0xff]
        %v3037 = vld [vmem:[%s2992 + $0x160] sm:$0xff]
        %v3038 = vld [vmem:[%s2992 + $0x168] sm:$0xff]
        %v3039 = vld [vmem:[%s2992 + $0x170] sm:$0xff]
        %v3040 = vld [vmem:[%s2992 + $0x178] sm:$0xff]
        %v3041 = vld [vmem:[%s2992 + $0x180] sm:$0xff]
        %v3042 = vld [vmem:[%s2992 + $0x188] sm:$0xff]
        %v3043 = vld [vmem:[%s2992 + $0x190] sm:$0xff]
        %v3044 = vld [vmem:[%s2992 + $0x198] sm:$0xff]
        %v3045 = vld [vmem:[%s2992 + $0x1a0] sm:$0xff]
        %v3046 = vld [vmem:[%s2992 + $0x1a8] sm:$0xff]
        %v3047 = vld [vmem:[%s2992 + $0x1b0] sm:$0xff]
        %v3048 = vld [vmem:[%s2992 + $0x1b8] sm:$0xff]
        %v3049 = vld [vmem:[%s2992 + $0x1c0] sm:$0xff]
        %v3050 = vld [vmem:[%s2992 + $0x1c8] sm:$0xff]
        %v3051 = vld [vmem:[%s2992 + $0x1d0] sm:$0xff]
        %v3052 = vld [vmem:[%s2992 + $0x1d8] sm:$0xff]
        %v3053 = vld [vmem:[%s2992 + $0x1e0] sm:$0xff]
        %v3054 = vld [vmem:[%s2992 + $0x1e8] sm:$0xff]
        %v3055 = vld [vmem:[%s2992 + $0x1f0] sm:$0xff]
        %v3056 = vld [vmem:[%s2992 + $0x1f8] sm:$0xff]
        %v3061 = vrot.slane %v2916, 4
        %v3062 = vrot.slane %v2917, 4
        %v3063 = vrot.slane %v2918, 4
        %v3064 = vrot.slane %v2919, 4
        %v3133 = vunpack.c.l.b16 %v2993
        %v3134 = vunpack.c.h.b16 %v2993
        %v3135 = vunpack.c.l.b16 %v2994
        %v3136 = vunpack.c.h.b16 %v2994
        %v3137 = vunpack.c.l.b16 %v2995
        %v3138 = vunpack.c.h.b16 %v2995
        %v3139 = vunpack.c.l.b16 %v2996
        %v3140 = vunpack.c.h.b16 %v2996
        %v3141 = vunpack.c.l.b16 %v2997
        %v3142 = vunpack.c.h.b16 %v2997
        %v3143 = vunpack.c.l.b16 %v2998
        %v3144 = vunpack.c.h.b16 %v2998
        %v3145 = vunpack.c.l.b16 %v2999
        %v3146 = vunpack.c.h.b16 %v2999
        %v3147 = vunpack.c.l.b16 %v3000
        %v3148 = vunpack.c.h.b16 %v3000
        %v3149 = vunpack.c.l.b16 %v3001
        %v3150 = vunpack.c.h.b16 %v3001
        %v3151 = vunpack.c.l.b16 %v3002
        %v3152 = vunpack.c.h.b16 %v3002
        %v3153 = vunpack.c.l.b16 %v3003
        %v3154 = vunpack.c.h.b16 %v3003
        %v3155 = vunpack.c.l.b16 %v3004
        %v3156 = vunpack.c.h.b16 %v3004
        %v3157 = vunpack.c.l.b16 %v3005
        %v3158 = vunpack.c.h.b16 %v3005
        %v3159 = vunpack.c.l.b16 %v3006
        %v3160 = vunpack.c.h.b16 %v3006
        %v3161 = vunpack.c.l.b16 %v3007
        %v3162 = vunpack.c.h.b16 %v3007
        %v3163 = vunpack.c.l.b16 %v3008
        %v3164 = vunpack.c.h.b16 %v3008
        %v3165 = vunpack.c.l.b16 %v3009
        %v3166 = vunpack.c.h.b16 %v3009
        %v3167 = vunpack.c.l.b16 %v3010
        %v3168 = vunpack.c.h.b16 %v3010
        %v3169 = vunpack.c.l.b16 %v3011
        %v3170 = vunpack.c.h.b16 %v3011
        %v3171 = vunpack.c.l.b16 %v3012
        %v3172 = vunpack.c.h.b16 %v3012
        %v3173 = vunpack.c.l.b16 %v3013
        %v3174 = vunpack.c.h.b16 %v3013
        %v3175 = vunpack.c.l.b16 %v3014
        %v3176 = vunpack.c.h.b16 %v3014
        %v3177 = vunpack.c.l.b16 %v3015
        %v3178 = vunpack.c.h.b16 %v3015
        %v3179 = vunpack.c.l.b16 %v3016
        %v3180 = vunpack.c.h.b16 %v3016
        %v3181 = vunpack.c.l.b16 %v3017
        %v3182 = vunpack.c.h.b16 %v3017
        %v3183 = vunpack.c.l.b16 %v3018
        %v3184 = vunpack.c.h.b16 %v3018
        %v3185 = vunpack.c.l.b16 %v3019
        %v3186 = vunpack.c.h.b16 %v3019
        %v3187 = vunpack.c.l.b16 %v3020
        %v3188 = vunpack.c.h.b16 %v3020
        %v3189 = vunpack.c.l.b16 %v3021
        %v3190 = vunpack.c.h.b16 %v3021
        %v3191 = vunpack.c.l.b16 %v3022
        %v3192 = vunpack.c.h.b16 %v3022
        %v3193 = vunpack.c.l.b16 %v3023
        %v3194 = vunpack.c.h.b16 %v3023
        %v3195 = vunpack.c.l.b16 %v3024
        %v3196 = vunpack.c.h.b16 %v3024
        %v3197 = vunpack.c.l.b16 %v3025
        %v3198 = vunpack.c.h.b16 %v3025
        %v3199 = vunpack.c.l.b16 %v3026
        %v3200 = vunpack.c.h.b16 %v3026
        %v3201 = vunpack.c.l.b16 %v3027
        %v3202 = vunpack.c.h.b16 %v3027
        %v3203 = vunpack.c.l.b16 %v3028
        %v3204 = vunpack.c.h.b16 %v3028
        %v3205 = vunpack.c.l.b16 %v3029
        %v3206 = vunpack.c.h.b16 %v3029
        %v3207 = vunpack.c.l.b16 %v3030
        %v3208 = vunpack.c.h.b16 %v3030
        %v3209 = vunpack.c.l.b16 %v3031
        %v3210 = vunpack.c.h.b16 %v3031
        %v3211 = vunpack.c.l.b16 %v3032
        %v3212 = vunpack.c.h.b16 %v3032
        %v3213 = vunpack.c.l.b16 %v3033
        %v3214 = vunpack.c.h.b16 %v3033
        %v3215 = vunpack.c.l.b16 %v3034
        %v3216 = vunpack.c.h.b16 %v3034
        %v3217 = vunpack.c.l.b16 %v3035
        %v3218 = vunpack.c.h.b16 %v3035
        %v3219 = vunpack.c.l.b16 %v3036
        %v3220 = vunpack.c.h.b16 %v3036
        %v3221 = vunpack.c.l.b16 %v3037
        %v3222 = vunpack.c.h.b16 %v3037
        %v3223 = vunpack.c.l.b16 %v3038
        %v3224 = vunpack.c.h.b16 %v3038
        %v3225 = vunpack.c.l.b16 %v3039
        %v3226 = vunpack.c.h.b16 %v3039
        %v3227 = vunpack.c.l.b16 %v3040
        %v3228 = vunpack.c.h.b16 %v3040
        %v3229 = vunpack.c.l.b16 %v3041
        %v3230 = vunpack.c.h.b16 %v3041
        %v3231 = vunpack.c.l.b16 %v3042
        %v3232 = vunpack.c.h.b16 %v3042
        %v3233 = vunpack.c.l.b16 %v3043
        %v3234 = vunpack.c.h.b16 %v3043
        %v3235 = vunpack.c.l.b16 %v3044
        %v3236 = vunpack.c.h.b16 %v3044
        %v3237 = vunpack.c.l.b16 %v3045
        %v3238 = vunpack.c.h.b16 %v3045
        %v3239 = vunpack.c.l.b16 %v3046
        %v3240 = vunpack.c.h.b16 %v3046
        %v3241 = vunpack.c.l.b16 %v3047
        %v3242 = vunpack.c.h.b16 %v3047
        %v3243 = vunpack.c.l.b16 %v3048
        %v3244 = vunpack.c.h.b16 %v3048
        %v3245 = vunpack.c.l.b16 %v3049
        %v3246 = vunpack.c.h.b16 %v3049
        %v3247 = vunpack.c.l.b16 %v3050
        %v3248 = vunpack.c.h.b16 %v3050
        %v3249 = vunpack.c.l.b16 %v3051
        %v3250 = vunpack.c.h.b16 %v3051
        %v3251 = vunpack.c.l.b16 %v3052
        %v3252 = vunpack.c.h.b16 %v3052
        %v3253 = vunpack.c.l.b16 %v3053
        %v3254 = vunpack.c.h.b16 %v3053
        %v3255 = vunpack.c.l.b16 %v3054
        %v3256 = vunpack.c.h.b16 %v3054
        %v3257 = vunpack.c.l.b16 %v3055
        %v3258 = vunpack.c.h.b16 %v3055
        %v3259 = vunpack.c.l.b16 %v3056
        %v3260 = vunpack.c.h.b16 %v3056
        %v3261 = vpack.c.b16 %v3135, %v3133
        %v3262 = vpack.c.b16 %v3136, %v3134
        %v3263 = vpack.c.b16 %v3139, %v3137
        %v3264 = vpack.c.b16 %v3140, %v3138
        %v3265 = vpack.c.b16 %v3143, %v3141
        %v3266 = vpack.c.b16 %v3144, %v3142
        %v3267 = vpack.c.b16 %v3147, %v3145
        %v3268 = vpack.c.b16 %v3148, %v3146
        %v3269 = vpack.c.b16 %v3151, %v3149
        %v3270 = vpack.c.b16 %v3152, %v3150
        %v3271 = vpack.c.b16 %v3155, %v3153
        %v3272 = vpack.c.b16 %v3156, %v3154
        %v3273 = vpack.c.b16 %v3159, %v3157
        %v3274 = vpack.c.b16 %v3160, %v3158
        %v3275 = vpack.c.b16 %v3163, %v3161
        %v3276 = vpack.c.b16 %v3164, %v3162
        %v3277 = vpack.c.b16 %v3167, %v3165
        %v3278 = vpack.c.b16 %v3168, %v3166
        %v3279 = vpack.c.b16 %v3171, %v3169
        %v3280 = vpack.c.b16 %v3172, %v3170
        %v3281 = vpack.c.b16 %v3175, %v3173
        %v3282 = vpack.c.b16 %v3176, %v3174
        %v3283 = vpack.c.b16 %v3179, %v3177
        %v3284 = vpack.c.b16 %v3180, %v3178
        %v3285 = vpack.c.b16 %v3183, %v3181
        %v3286 = vpack.c.b16 %v3184, %v3182
        %v3287 = vpack.c.b16 %v3187, %v3185
        %v3288 = vpack.c.b16 %v3188, %v3186
        %v3289 = vpack.c.b16 %v3191, %v3189
        %v3290 = vpack.c.b16 %v3192, %v3190
        %v3291 = vpack.c.b16 %v3195, %v3193
        %v3292 = vpack.c.b16 %v3196, %v3194
        %v3293 = vpack.c.b16 %v3199, %v3197
        %v3294 = vpack.c.b16 %v3200, %v3198
        %v3295 = vpack.c.b16 %v3203, %v3201
        %v3296 = vpack.c.b16 %v3204, %v3202
        %v3297 = vpack.c.b16 %v3207, %v3205
        %v3298 = vpack.c.b16 %v3208, %v3206
        %v3299 = vpack.c.b16 %v3211, %v3209
        %v3300 = vpack.c.b16 %v3212, %v3210
        %v3301 = vpack.c.b16 %v3215, %v3213
        %v3302 = vpack.c.b16 %v3216, %v3214
        %v3303 = vpack.c.b16 %v3219, %v3217
        %v3304 = vpack.c.b16 %v3220, %v3218
        %v3305 = vpack.c.b16 %v3223, %v3221
        %v3306 = vpack.c.b16 %v3224, %v3222
        %v3307 = vpack.c.b16 %v3227, %v3225
        %v3308 = vpack.c.b16 %v3228, %v3226
        %v3309 = vpack.c.b16 %v3231, %v3229
        %v3310 = vpack.c.b16 %v3232, %v3230
        %v3311 = vpack.c.b16 %v3235, %v3233
        %v3312 = vpack.c.b16 %v3236, %v3234
        %v3313 = vpack.c.b16 %v3239, %v3237
        %v3314 = vpack.c.b16 %v3240, %v3238
        %v3315 = vpack.c.b16 %v3243, %v3241
        %v3316 = vpack.c.b16 %v3244, %v3242
        %v3317 = vpack.c.b16 %v3247, %v3245
        %v3318 = vpack.c.b16 %v3248, %v3246
        %v3319 = vpack.c.b16 %v3251, %v3249
        %v3320 = vpack.c.b16 %v3252, %v3250
        %v3321 = vpack.c.b16 %v3255, %v3253
        %v3322 = vpack.c.b16 %v3256, %v3254
        %v3323 = vpack.c.b16 %v3259, %v3257
        %v3324 = vpack.c.b16 %v3260, %v3258
        %3389 = vmatprep.subr.bf16.mxu0 %v3262
        %3390 = vmatpush1.bf16.msra.mxu0 %v3261
        %3391 = vmatprep.subr.bf16.mxu0 %v3264
        %3392 = vmatpush1.bf16.msra.mxu0 %v3263
        %3393 = vmatprep.subr.bf16.mxu0 %v3266
        %3394 = vmatpush1.bf16.msra.mxu0 %v3265
        %3395 = vmatprep.subr.bf16.mxu0 %v3268
        %3396 = vmatpush1.bf16.msra.mxu0 %v3267
        %3397 = vmatprep.subr.bf16.mxu0 %v3270
        %3398 = vmatpush1.bf16.msra.mxu0 %v3269
        %3399 = vmatprep.subr.bf16.mxu0 %v3272
        %3400 = vmatpush1.bf16.msra.mxu0 %v3271
        %3401 = vmatprep.subr.bf16.mxu0 %v3274
        %3402 = vmatpush1.bf16.msra.mxu0 %v3273
        %3403 = vmatprep.subr.bf16.mxu0 %v3276
        %3404 = vmatpush1.bf16.msra.mxu0 %v3275
        %3405 = vmatprep.subr.bf16.mxu0 %v3278
        %3406 = vmatpush1.bf16.msra.mxu0 %v3277
        %3407 = vmatprep.subr.bf16.mxu0 %v3280
        %3408 = vmatpush1.bf16.msra.mxu0 %v3279
        %3409 = vmatprep.subr.bf16.mxu0 %v3282
        %3410 = vmatpush1.bf16.msra.mxu0 %v3281
        %3411 = vmatprep.subr.bf16.mxu0 %v3284
        %3412 = vmatpush1.bf16.msra.mxu0 %v3283
        %3413 = vmatprep.subr.bf16.mxu0 %v3286
        %3414 = vmatpush1.bf16.msra.mxu0 %v3285
        %3415 = vmatprep.subr.bf16.mxu0 %v3288
        %3416 = vmatpush1.bf16.msra.mxu0 %v3287
        %3417 = vmatprep.subr.bf16.mxu0 %v3290
        %3418 = vmatpush1.bf16.msra.mxu0 %v3289
        %3419 = vmatprep.subr.bf16.mxu0 %v3292
        %3420 = vmatpush1.bf16.msra.mxu0 %v3291
        %3421 = vmatprep.mubr.bf16.mxu0 %v3062
        %3422 = vmatmul.mubr.bf16.gmra.mrb[0].mxu0 %v3061
        %v3423 = vpop.f32.mrb[0].mxu0
        %v3424 = vadd.f32 0.0, %v3423
        %v3425 = vpop.f32.mrb[0].mxu0
        %v3426 = vadd.f32 0.0, %v3425
        %v3427 = vpop.f32.mrb[0].mxu0
        %v3428 = vpop.f32.mrb[0].mxu0
        %3429 = vdwg.mxu0
        %3430 = vmatprep.subr.bf16.mxu0 %v3294
        %3431 = vmatpush1.bf16.msra.mxu0 %v3293
        %3432 = vmatprep.subr.bf16.mxu0 %v3296
        %3433 = vmatpush1.bf16.msra.mxu0 %v3295
        %3434 = vmatprep.subr.bf16.mxu0 %v3298
        %3435 = vmatpush1.bf16.msra.mxu0 %v3297
        %3436 = vmatprep.subr.bf16.mxu0 %v3300
        %3437 = vmatpush1.bf16.msra.mxu0 %v3299
        %3438 = vmatprep.subr.bf16.mxu0 %v3302
        %3439 = vmatpush1.bf16.msra.mxu0 %v3301
        %3440 = vmatprep.subr.bf16.mxu0 %v3304
        %3441 = vmatpush1.bf16.msra.mxu0 %v3303
        %3442 = vmatprep.subr.bf16.mxu0 %v3306
        %3443 = vmatpush1.bf16.msra.mxu0 %v3305
        %3444 = vmatprep.subr.bf16.mxu0 %v3308
        %3445 = vmatpush1.bf16.msra.mxu0 %v3307
        %3446 = vmatprep.subr.bf16.mxu0 %v3310
        %3447 = vmatpush1.bf16.msra.mxu0 %v3309
        %3448 = vmatprep.subr.bf16.mxu0 %v3312
        %3449 = vmatpush1.bf16.msra.mxu0 %v3311
        %3450 = vmatprep.subr.bf16.mxu0 %v3314
        %3451 = vmatpush1.bf16.msra.mxu0 %v3313
        %3452 = vmatprep.subr.bf16.mxu0 %v3316
        %3453 = vmatpush1.bf16.msra.mxu0 %v3315
        %3454 = vmatprep.subr.bf16.mxu0 %v3318
        %3455 = vmatpush1.bf16.msra.mxu0 %v3317
        %3456 = vmatprep.subr.bf16.mxu0 %v3320
        %3457 = vmatpush1.bf16.msra.mxu0 %v3319
        %3458 = vmatprep.subr.bf16.mxu0 %v3322
        %3459 = vmatpush1.bf16.msra.mxu0 %v3321
        %3460 = vmatprep.subr.bf16.mxu0 %v3324
        %3461 = vmatpush1.bf16.msra.mxu0 %v3323
        %3462 = vmatprep.mubr.bf16.mxu0 %v3064
        %3463 = vmatmul.mubr.bf16.gmra.mrb[0].mxu0 %v3063
        %v3464 = vpop.f32.mrb[0].mxu0
        %v3465 = vadd.f32 %v3424, %v3464
        %v3466 = vpop.f32.mrb[0].mxu0
        %v3467 = vadd.f32 %v3426, %v3466
        %v3468 = vpop.f32.mrb[0].mxu0
        %v3469 = vpop.f32.mrb[0].mxu0
        %3470 = vdwg.mxu0
        %v3535 = vunpack.c.l.b16 %v2928
        %v3536 = vunpack.c.h.b16 %v2928
        %v3537 = vunpack.c.l.b16 %v2929
        %v3538 = vunpack.c.h.b16 %v2929
        %v3539 = vunpack.c.l.b16 %v2930
        %v3540 = vunpack.c.h.b16 %v2930
        %v3541 = vunpack.c.l.b16 %v2931
        %v3542 = vunpack.c.h.b16 %v2931
        %v3543 = vunpack.c.l.b16 %v2932
        %v3544 = vunpack.c.h.b16 %v2932
        %v3545 = vunpack.c.l.b16 %v2933
        %v3546 = vunpack.c.h.b16 %v2933
        %v3547 = vunpack.c.l.b16 %v2934
        %v3548 = vunpack.c.h.b16 %v2934
        %v3549 = vunpack.c.l.b16 %v2935
        %v3550 = vunpack.c.h.b16 %v2935
        %v3551 = vunpack.c.l.b16 %v2936
        %v3552 = vunpack.c.h.b16 %v2936
        %v3553 = vunpack.c.l.b16 %v2937
        %v3554 = vunpack.c.h.b16 %v2937
        %v3555 = vunpack.c.l.b16 %v2938
        %v3556 = vunpack.c.h.b16 %v2938
        %v3557 = vunpack.c.l.b16 %v2939
        %v3558 = vunpack.c.h.b16 %v2939
        %v3559 = vunpack.c.l.b16 %v2940
        %v3560 = vunpack.c.h.b16 %v2940
        %v3561 = vunpack.c.l.b16 %v2941
        %v3562 = vunpack.c.h.b16 %v2941
        %v3563 = vunpack.c.l.b16 %v2942
        %v3564 = vunpack.c.h.b16 %v2942
        %v3565 = vunpack.c.l.b16 %v2943
        %v3566 = vunpack.c.h.b16 %v2943
        %v3567 = vunpack.c.l.b16 %v2944
        %v3568 = vunpack.c.h.b16 %v2944
        %v3569 = vunpack.c.l.b16 %v2945
        %v3570 = vunpack.c.h.b16 %v2945
        %v3571 = vunpack.c.l.b16 %v2946
        %v3572 = vunpack.c.h.b16 %v2946
        %v3573 = vunpack.c.l.b16 %v2947
        %v3574 = vunpack.c.h.b16 %v2947
        %v3575 = vunpack.c.l.b16 %v2948
        %v3576 = vunpack.c.h.b16 %v2948
        %v3577 = vunpack.c.l.b16 %v2949
        %v3578 = vunpack.c.h.b16 %v2949
        %v3579 = vunpack.c.l.b16 %v2950
        %v3580 = vunpack.c.h.b16 %v2950
        %v3581 = vunpack.c.l.b16 %v2951
        %v3582 = vunpack.c.h.b16 %v2951
        %v3583 = vunpack.c.l.b16 %v2952
        %v3584 = vunpack.c.h.b16 %v2952
        %v3585 = vunpack.c.l.b16 %v2953
        %v3586 = vunpack.c.h.b16 %v2953
        %v3587 = vunpack.c.l.b16 %v2954
        %v3588 = vunpack.c.h.b16 %v2954
        %v3589 = vunpack.c.l.b16 %v2955
        %v3590 = vunpack.c.h.b16 %v2955
        %v3591 = vunpack.c.l.b16 %v2956
        %v3592 = vunpack.c.h.b16 %v2956
        %v3593 = vunpack.c.l.b16 %v2957
        %v3594 = vunpack.c.h.b16 %v2957
        %v3595 = vunpack.c.l.b16 %v2958
        %v3596 = vunpack.c.h.b16 %v2958
        %v3597 = vunpack.c.l.b16 %v2959
        %v3598 = vunpack.c.h.b16 %v2959
        %v3599 = vunpack.c.l.b16 %v2960
        %v3600 = vunpack.c.h.b16 %v2960
        %v3601 = vunpack.c.l.b16 %v2961
        %v3602 = vunpack.c.h.b16 %v2961
        %v3603 = vunpack.c.l.b16 %v2962
        %v3604 = vunpack.c.h.b16 %v2962
        %v3605 = vunpack.c.l.b16 %v2963
        %v3606 = vunpack.c.h.b16 %v2963
        %v3607 = vunpack.c.l.b16 %v2964
        %v3608 = vunpack.c.h.b16 %v2964
        %v3609 = vunpack.c.l.b16 %v2965
        %v3610 = vunpack.c.h.b16 %v2965
        %v3611 = vunpack.c.l.b16 %v2966
        %v3612 = vunpack.c.h.b16 %v2966
        %v3613 = vunpack.c.l.b16 %v2967
        %v3614 = vunpack.c.h.b16 %v2967
        %v3615 = vunpack.c.l.b16 %v2968
        %v3616 = vunpack.c.h.b16 %v2968
        %v3617 = vunpack.c.l.b16 %v2969
        %v3618 = vunpack.c.h.b16 %v2969
        %v3619 = vunpack.c.l.b16 %v2970
        %v3620 = vunpack.c.h.b16 %v2970
        %v3621 = vunpack.c.l.b16 %v2971
        %v3622 = vunpack.c.h.b16 %v2971
        %v3623 = vunpack.c.l.b16 %v2972
        %v3624 = vunpack.c.h.b16 %v2972
        %v3625 = vunpack.c.l.b16 %v2973
        %v3626 = vunpack.c.h.b16 %v2973
        %v3627 = vunpack.c.l.b16 %v2974
        %v3628 = vunpack.c.h.b16 %v2974
        %v3629 = vunpack.c.l.b16 %v2975
        %v3630 = vunpack.c.h.b16 %v2975
        %v3631 = vunpack.c.l.b16 %v2976
        %v3632 = vunpack.c.h.b16 %v2976
        %v3633 = vunpack.c.l.b16 %v2977
        %v3634 = vunpack.c.h.b16 %v2977
        %v3635 = vunpack.c.l.b16 %v2978
        %v3636 = vunpack.c.h.b16 %v2978
        %v3637 = vunpack.c.l.b16 %v2979
        %v3638 = vunpack.c.h.b16 %v2979
        %v3639 = vunpack.c.l.b16 %v2980
        %v3640 = vunpack.c.h.b16 %v2980
        %v3641 = vunpack.c.l.b16 %v2981
        %v3642 = vunpack.c.h.b16 %v2981
        %v3643 = vunpack.c.l.b16 %v2982
        %v3644 = vunpack.c.h.b16 %v2982
        %v3645 = vunpack.c.l.b16 %v2983
        %v3646 = vunpack.c.h.b16 %v2983
        %v3647 = vunpack.c.l.b16 %v2984
        %v3648 = vunpack.c.h.b16 %v2984
        %v3649 = vunpack.c.l.b16 %v2985
        %v3650 = vunpack.c.h.b16 %v2985
        %v3651 = vunpack.c.l.b16 %v2986
        %v3652 = vunpack.c.h.b16 %v2986
        %v3653 = vunpack.c.l.b16 %v2987
        %v3654 = vunpack.c.h.b16 %v2987
        %v3655 = vunpack.c.l.b16 %v2988
        %v3656 = vunpack.c.h.b16 %v2988
        %v3657 = vunpack.c.l.b16 %v2989
        %v3658 = vunpack.c.h.b16 %v2989
        %v3659 = vunpack.c.l.b16 %v2990
        %v3660 = vunpack.c.h.b16 %v2990
        %v3661 = vunpack.c.l.b16 %v2991
        %v3662 = vunpack.c.h.b16 %v2991
        %v3663 = vpack.c.b16 %v3537, %v3535
        %v3664 = vpack.c.b16 %v3538, %v3536
        %v3665 = vpack.c.b16 %v3541, %v3539
        %v3666 = vpack.c.b16 %v3542, %v3540
        %v3667 = vpack.c.b16 %v3545, %v3543
        %v3668 = vpack.c.b16 %v3546, %v3544
        %v3669 = vpack.c.b16 %v3549, %v3547
        %v3670 = vpack.c.b16 %v3550, %v3548
        %v3671 = vpack.c.b16 %v3553, %v3551
        %v3672 = vpack.c.b16 %v3554, %v3552
        %v3673 = vpack.c.b16 %v3557, %v3555
        %v3674 = vpack.c.b16 %v3558, %v3556
        %v3675 = vpack.c.b16 %v3561, %v3559
        %v3676 = vpack.c.b16 %v3562, %v3560
        %v3677 = vpack.c.b16 %v3565, %v3563
        %v3678 = vpack.c.b16 %v3566, %v3564
        %v3679 = vpack.c.b16 %v3569, %v3567
        %v3680 = vpack.c.b16 %v3570, %v3568
        %v3681 = vpack.c.b16 %v3573, %v3571
        %v3682 = vpack.c.b16 %v3574, %v3572
        %v3683 = vpack.c.b16 %v3577, %v3575
        %v3684 = vpack.c.b16 %v3578, %v3576
        %v3685 = vpack.c.b16 %v3581, %v3579
        %v3686 = vpack.c.b16 %v3582, %v3580
        %v3687 = vpack.c.b16 %v3585, %v3583
        %v3688 = vpack.c.b16 %v3586, %v3584
        %v3689 = vpack.c.b16 %v3589, %v3587
        %v3690 = vpack.c.b16 %v3590, %v3588
        %v3691 = vpack.c.b16 %v3593, %v3591
        %v3692 = vpack.c.b16 %v3594, %v3592
        %v3693 = vpack.c.b16 %v3597, %v3595
        %v3694 = vpack.c.b16 %v3598, %v3596
        %v3695 = vpack.c.b16 %v3601, %v3599
        %v3696 = vpack.c.b16 %v3602, %v3600
        %v3697 = vpack.c.b16 %v3605, %v3603
        %v3698 = vpack.c.b16 %v3606, %v3604
        %v3699 = vpack.c.b16 %v3609, %v3607
        %v3700 = vpack.c.b16 %v3610, %v3608
        %v3701 = vpack.c.b16 %v3613, %v3611
        %v3702 = vpack.c.b16 %v3614, %v3612
        %v3703 = vpack.c.b16 %v3617, %v3615
        %v3704 = vpack.c.b16 %v3618, %v3616
        %v3705 = vpack.c.b16 %v3621, %v3619
        %v3706 = vpack.c.b16 %v3622, %v3620
        %v3707 = vpack.c.b16 %v3625, %v3623
        %v3708 = vpack.c.b16 %v3626, %v3624
        %v3709 = vpack.c.b16 %v3629, %v3627
        %v3710 = vpack.c.b16 %v3630, %v3628
        %v3711 = vpack.c.b16 %v3633, %v3631
        %v3712 = vpack.c.b16 %v3634, %v3632
        %v3713 = vpack.c.b16 %v3637, %v3635
        %v3714 = vpack.c.b16 %v3638, %v3636
        %v3715 = vpack.c.b16 %v3641, %v3639
        %v3716 = vpack.c.b16 %v3642, %v3640
        %v3717 = vpack.c.b16 %v3645, %v3643
        %v3718 = vpack.c.b16 %v3646, %v3644
        %v3719 = vpack.c.b16 %v3649, %v3647
        %v3720 = vpack.c.b16 %v3650, %v3648
        %v3721 = vpack.c.b16 %v3653, %v3651
        %v3722 = vpack.c.b16 %v3654, %v3652
        %v3723 = vpack.c.b16 %v3657, %v3655
        %v3724 = vpack.c.b16 %v3658, %v3656
        %v3725 = vpack.c.b16 %v3661, %v3659
        %v3726 = vpack.c.b16 %v3662, %v3660
        %3791 = vmatprep.subr.bf16.mxu0 %v3664
        %3792 = vmatpush1.bf16.msra.mxu0 %v3663
        %3793 = vmatprep.subr.bf16.mxu0 %v3666
        %3794 = vmatpush1.bf16.msra.mxu0 %v3665
        %3795 = vmatprep.subr.bf16.mxu0 %v3668
        %3796 = vmatpush1.bf16.msra.mxu0 %v3667
        %3797 = vmatprep.subr.bf16.mxu0 %v3670
        %3798 = vmatpush1.bf16.msra.mxu0 %v3669
        %3799 = vmatprep.subr.bf16.mxu0 %v3672
        %3800 = vmatpush1.bf16.msra.mxu0 %v3671
        %3801 = vmatprep.subr.bf16.mxu0 %v3674
        %3802 = vmatpush1.bf16.msra.mxu0 %v3673
        %3803 = vmatprep.subr.bf16.mxu0 %v3676
        %3804 = vmatpush1.bf16.msra.mxu0 %v3675
        %3805 = vmatprep.subr.bf16.mxu0 %v3678
        %3806 = vmatpush1.bf16.msra.mxu0 %v3677
        %3807 = vmatprep.subr.bf16.mxu0 %v3680
        %3808 = vmatpush1.bf16.msra.mxu0 %v3679
        %3809 = vmatprep.subr.bf16.mxu0 %v3682
        %3810 = vmatpush1.bf16.msra.mxu0 %v3681
        %3811 = vmatprep.subr.bf16.mxu0 %v3684
        %3812 = vmatpush1.bf16.msra.mxu0 %v3683
        %3813 = vmatprep.subr.bf16.mxu0 %v3686
        %3814 = vmatpush1.bf16.msra.mxu0 %v3685
        %3815 = vmatprep.subr.bf16.mxu0 %v3688
        %3816 = vmatpush1.bf16.msra.mxu0 %v3687
        %3817 = vmatprep.subr.bf16.mxu0 %v3690
        %3818 = vmatpush1.bf16.msra.mxu0 %v3689
        %3819 = vmatprep.subr.bf16.mxu0 %v3692
        %3820 = vmatpush1.bf16.msra.mxu0 %v3691
        %3821 = vmatprep.subr.bf16.mxu0 %v3694
        %3822 = vmatpush1.bf16.msra.mxu0 %v3693
        %3823 = vmatprep.mubr.bf16.mxu0 %v2917
        %3824 = vmatmul.mubr.bf16.gmra.mrb[0].mxu0 %v2916
        %v3825 = vpop.f32.mrb[0].mxu0
        %v3826 = vadd.f32 %v3465, %v3825
        %v3827 = vpop.f32.mrb[0].mxu0
        %v3828 = vadd.f32 %v3467, %v3827
        %v3829 = vpop.f32.mrb[0].mxu0
        %v3830 = vpop.f32.mrb[0].mxu0
        %3831 = vdwg.mxu0
        %3832 = vmatprep.subr.bf16.mxu0 %v3696
        %3833 = vmatpush1.bf16.msra.mxu0 %v3695
        %3834 = vmatprep.subr.bf16.mxu0 %v3698
        %3835 = vmatpush1.bf16.msra.mxu0 %v3697
        %3836 = vmatprep.subr.bf16.mxu0 %v3700
        %3837 = vmatpush1.bf16.msra.mxu0 %v3699
        %3838 = vmatprep.subr.bf16.mxu0 %v3702
        %3839 = vmatpush1.bf16.msra.mxu0 %v3701
        %3840 = vmatprep.subr.bf16.mxu0 %v3704
        %3841 = vmatpush1.bf16.msra.mxu0 %v3703
        %3842 = vmatprep.subr.bf16.mxu0 %v3706
        %3843 = vmatpush1.bf16.msra.mxu0 %v3705
        %3844 = vmatprep.subr.bf16.mxu0 %v3708
        %3845 = vmatpush1.bf16.msra.mxu0 %v3707
        %3846 = vmatprep.subr.bf16.mxu0 %v3710
        %3847 = vmatpush1.bf16.msra.mxu0 %v3709
        %3848 = vmatprep.subr.bf16.mxu0 %v3712
        %3849 = vmatpush1.bf16.msra.mxu0 %v3711
        %3850 = vmatprep.subr.bf16.mxu0 %v3714
        %3851 = vmatpush1.bf16.msra.mxu0 %v3713
        %3852 = vmatprep.subr.bf16.mxu0 %v3716
        %3853 = vmatpush1.bf16.msra.mxu0 %v3715
        %3854 = vmatprep.subr.bf16.mxu0 %v3718
        %3855 = vmatpush1.bf16.msra.mxu0 %v3717
        %3856 = vmatprep.subr.bf16.mxu0 %v3720
        %3857 = vmatpush1.bf16.msra.mxu0 %v3719
        %3858 = vmatprep.subr.bf16.mxu0 %v3722
        %3859 = vmatpush1.bf16.msra.mxu0 %v3721
        %3860 = vmatprep.subr.bf16.mxu0 %v3724
        %3861 = vmatpush1.bf16.msra.mxu0 %v3723
        %3862 = vmatprep.subr.bf16.mxu0 %v3726
        %3863 = vmatpush1.bf16.msra.mxu0 %v3725
        %3864 = vmatprep.mubr.bf16.mxu0 %v2919
        %3865 = vmatmul.mubr.bf16.gmra.mrb[0].mxu0 %v2918
        %v3866 = vpop.f32.mrb[0].mxu0
        %v3867 = vadd.f32 %v3826, %v3866
        %v3868 = vpop.f32.mrb[0].mxu0
        %v3869 = vadd.f32 %v3828, %v3868
        %v3870 = vpop.f32.mrb[0].mxu0
        %v3871 = vpop.f32.mrb[0].mxu0
        %3872 = vdwg.mxu0
        %s3873 = scalar_lea.vmem [#allocation6], 1024
        %v3874 = vld [vmem:[%s3873] sm:$0xff]
        %v3875 = vld [vmem:[%s3873 + $0x8] sm:$0xff]
        %v3876 = vld [vmem:[%s3873 + $0x10] sm:$0xff]
        %v3877 = vld [vmem:[%s3873 + $0x18] sm:$0xff]
        %v3878 = vld [vmem:[%s3873 + $0x20] sm:$0xff]
        %v3879 = vld [vmem:[%s3873 + $0x28] sm:$0xff]
        %v3880 = vld [vmem:[%s3873 + $0x30] sm:$0xff]
        %v3881 = vld [vmem:[%s3873 + $0x38] sm:$0xff]
        %v3882 = vld [vmem:[%s3873 + $0x40] sm:$0xff]
        %v3883 = vld [vmem:[%s3873 + $0x48] sm:$0xff]
        %v3884 = vld [vmem:[%s3873 + $0x50] sm:$0xff]
        %v3885 = vld [vmem:[%s3873 + $0x58] sm:$0xff]
        %v3886 = vld [vmem:[%s3873 + $0x60] sm:$0xff]
        %v3887 = vld [vmem:[%s3873 + $0x68] sm:$0xff]
        %v3888 = vld [vmem:[%s3873 + $0x70] sm:$0xff]
        %v3889 = vld [vmem:[%s3873 + $0x78] sm:$0xff]
        %v3890 = vld [vmem:[%s3873 + $0x80] sm:$0xff]
        %v3891 = vld [vmem:[%s3873 + $0x88] sm:$0xff]
        %v3892 = vld [vmem:[%s3873 + $0x90] sm:$0xff]
        %v3893 = vld [vmem:[%s3873 + $0x98] sm:$0xff]
        %v3894 = vld [vmem:[%s3873 + $0xa0] sm:$0xff]
        %v3895 = vld [vmem:[%s3873 + $0xa8] sm:$0xff]
        %v3896 = vld [vmem:[%s3873 + $0xb0] sm:$0xff]
        %v3897 = vld [vmem:[%s3873 + $0xb8] sm:$0xff]
        %v3898 = vld [vmem:[%s3873 + $0xc0] sm:$0xff]
        %v3899 = vld [vmem:[%s3873 + $0xc8] sm:$0xff]
        %v3900 = vld [vmem:[%s3873 + $0xd0] sm:$0xff]
        %v3901 = vld [vmem:[%s3873 + $0xd8] sm:$0xff]
        %v3902 = vld [vmem:[%s3873 + $0xe0] sm:$0xff]
        %v3903 = vld [vmem:[%s3873 + $0xe8] sm:$0xff]
        %v3904 = vld [vmem:[%s3873 + $0xf0] sm:$0xff]
        %v3905 = vld [vmem:[%s3873 + $0xf8] sm:$0xff]
        %v3906 = vld [vmem:[%s3873 + $0x100] sm:$0xff]
        %v3907 = vld [vmem:[%s3873 + $0x108] sm:$0xff]
        %v3908 = vld [vmem:[%s3873 + $0x110] sm:$0xff]
        %v3909 = vld [vmem:[%s3873 + $0x118] sm:$0xff]
        %v3910 = vld [vmem:[%s3873 + $0x120] sm:$0xff]
        %v3911 = vld [vmem:[%s3873 + $0x128] sm:$0xff]
        %v3912 = vld [vmem:[%s3873 + $0x130] sm:$0xff]
        %v3913 = vld [vmem:[%s3873 + $0x138] sm:$0xff]
        %v3914 = vld [vmem:[%s3873 + $0x140] sm:$0xff]
        %v3915 = vld [vmem:[%s3873 + $0x148] sm:$0xff]
        %v3916 = vld [vmem:[%s3873 + $0x150] sm:$0xff]
        %v3917 = vld [vmem:[%s3873 + $0x158] sm:$0xff]
        %v3918 = vld [vmem:[%s3873 + $0x160] sm:$0xff]
        %v3919 = vld [vmem:[%s3873 + $0x168] sm:$0xff]
        %v3920 = vld [vmem:[%s3873 + $0x170] sm:$0xff]
        %v3921 = vld [vmem:[%s3873 + $0x178] sm:$0xff]
        %v3922 = vld [vmem:[%s3873 + $0x180] sm:$0xff]
        %v3923 = vld [vmem:[%s3873 + $0x188] sm:$0xff]
        %v3924 = vld [vmem:[%s3873 + $0x190] sm:$0xff]
        %v3925 = vld [vmem:[%s3873 + $0x198] sm:$0xff]
        %v3926 = vld [vmem:[%s3873 + $0x1a0] sm:$0xff]
        %v3927 = vld [vmem:[%s3873 + $0x1a8] sm:$0xff]
        %v3928 = vld [vmem:[%s3873 + $0x1b0] sm:$0xff]
        %v3929 = vld [vmem:[%s3873 + $0x1b8] sm:$0xff]
        %v3930 = vld [vmem:[%s3873 + $0x1c0] sm:$0xff]
        %v3931 = vld [vmem:[%s3873 + $0x1c8] sm:$0xff]
        %v3932 = vld [vmem:[%s3873 + $0x1d0] sm:$0xff]
        %v3933 = vld [vmem:[%s3873 + $0x1d8] sm:$0xff]
        %v3934 = vld [vmem:[%s3873 + $0x1e0] sm:$0xff]
        %v3935 = vld [vmem:[%s3873 + $0x1e8] sm:$0xff]
        %v3936 = vld [vmem:[%s3873 + $0x1f0] sm:$0xff]
        %v3937 = vld [vmem:[%s3873 + $0x1f8] sm:$0xff]
        %v4002 = vunpack.c.l.b16 %v3874
        %v4003 = vunpack.c.h.b16 %v3874
        %v4004 = vunpack.c.l.b16 %v3875
        %v4005 = vunpack.c.h.b16 %v3875
        %v4006 = vunpack.c.l.b16 %v3876
        %v4007 = vunpack.c.h.b16 %v3876
        %v4008 = vunpack.c.l.b16 %v3877
        %v4009 = vunpack.c.h.b16 %v3877
        %v4010 = vunpack.c.l.b16 %v3878
        %v4011 = vunpack.c.h.b16 %v3878
        %v4012 = vunpack.c.l.b16 %v3879
        %v4013 = vunpack.c.h.b16 %v3879
        %v4014 = vunpack.c.l.b16 %v3880
        %v4015 = vunpack.c.h.b16 %v3880
        %v4016 = vunpack.c.l.b16 %v3881
        %v4017 = vunpack.c.h.b16 %v3881
        %v4018 = vunpack.c.l.b16 %v3882
        %v4019 = vunpack.c.h.b16 %v3882
        %v4020 = vunpack.c.l.b16 %v3883
        %v4021 = vunpack.c.h.b16 %v3883
        %v4022 = vunpack.c.l.b16 %v3884
        %v4023 = vunpack.c.h.b16 %v3884
        %v4024 = vunpack.c.l.b16 %v3885
        %v4025 = vunpack.c.h.b16 %v3885
        %v4026 = vunpack.c.l.b16 %v3886
        %v4027 = vunpack.c.h.b16 %v3886
        %v4028 = vunpack.c.l.b16 %v3887
        %v4029 = vunpack.c.h.b16 %v3887
        %v4030 = vunpack.c.l.b16 %v3888
        %v4031 = vunpack.c.h.b16 %v3888
        %v4032 = vunpack.c.l.b16 %v3889
        %v4033 = vunpack.c.h.b16 %v3889
        %v4034 = vunpack.c.l.b16 %v3890
        %v4035 = vunpack.c.h.b16 %v3890
        %v4036 = vunpack.c.l.b16 %v3891
        %v4037 = vunpack.c.h.b16 %v3891
        %v4038 = vunpack.c.l.b16 %v3892
        %v4039 = vunpack.c.h.b16 %v3892
        %v4040 = vunpack.c.l.b16 %v3893
        %v4041 = vunpack.c.h.b16 %v3893
        %v4042 = vunpack.c.l.b16 %v3894
        %v4043 = vunpack.c.h.b16 %v3894
        %v4044 = vunpack.c.l.b16 %v3895
        %v4045 = vunpack.c.h.b16 %v3895
        %v4046 = vunpack.c.l.b16 %v3896
        %v4047 = vunpack.c.h.b16 %v3896
        %v4048 = vunpack.c.l.b16 %v3897
        %v4049 = vunpack.c.h.b16 %v3897
        %v4050 = vunpack.c.l.b16 %v3898
        %v4051 = vunpack.c.h.b16 %v3898
        %v4052 = vunpack.c.l.b16 %v3899
        %v4053 = vunpack.c.h.b16 %v3899
        %v4054 = vunpack.c.l.b16 %v3900
        %v4055 = vunpack.c.h.b16 %v3900
        %v4056 = vunpack.c.l.b16 %v3901
        %v4057 = vunpack.c.h.b16 %v3901
        %v4058 = vunpack.c.l.b16 %v3902
        %v4059 = vunpack.c.h.b16 %v3902
        %v4060 = vunpack.c.l.b16 %v3903
        %v4061 = vunpack.c.h.b16 %v3903
        %v4062 = vunpack.c.l.b16 %v3904
        %v4063 = vunpack.c.h.b16 %v3904
        %v4064 = vunpack.c.l.b16 %v3905
        %v4065 = vunpack.c.h.b16 %v3905
        %v4066 = vunpack.c.l.b16 %v3906
        %v4067 = vunpack.c.h.b16 %v3906
        %v4068 = vunpack.c.l.b16 %v3907
        %v4069 = vunpack.c.h.b16 %v3907
        %v4070 = vunpack.c.l.b16 %v3908
        %v4071 = vunpack.c.h.b16 %v3908
        %v4072 = vunpack.c.l.b16 %v3909
        %v4073 = vunpack.c.h.b16 %v3909
        %v4074 = vunpack.c.l.b16 %v3910
        %v4075 = vunpack.c.h.b16 %v3910
        %v4076 = vunpack.c.l.b16 %v3911
        %v4077 = vunpack.c.h.b16 %v3911
        %v4078 = vunpack.c.l.b16 %v3912
        %v4079 = vunpack.c.h.b16 %v3912
        %v4080 = vunpack.c.l.b16 %v3913
        %v4081 = vunpack.c.h.b16 %v3913
        %v4082 = vunpack.c.l.b16 %v3914
        %v4083 = vunpack.c.h.b16 %v3914
        %v4084 = vunpack.c.l.b16 %v3915
        %v4085 = vunpack.c.h.b16 %v3915
        %v4086 = vunpack.c.l.b16 %v3916
        %v4087 = vunpack.c.h.b16 %v3916
        %v4088 = vunpack.c.l.b16 %v3917
        %v4089 = vunpack.c.h.b16 %v3917
        %v4090 = vunpack.c.l.b16 %v3918
        %v4091 = vunpack.c.h.b16 %v3918
        %v4092 = vunpack.c.l.b16 %v3919
        %v4093 = vunpack.c.h.b16 %v3919
        %v4094 = vunpack.c.l.b16 %v3920
        %v4095 = vunpack.c.h.b16 %v3920
        %v4096 = vunpack.c.l.b16 %v3921
        %v4097 = vunpack.c.h.b16 %v3921
        %v4098 = vunpack.c.l.b16 %v3922
        %v4099 = vunpack.c.h.b16 %v3922
        %v4100 = vunpack.c.l.b16 %v3923
        %v4101 = vunpack.c.h.b16 %v3923
        %v4102 = vunpack.c.l.b16 %v3924
        %v4103 = vunpack.c.h.b16 %v3924
        %v4104 = vunpack.c.l.b16 %v3925
        %v4105 = vunpack.c.h.b16 %v3925
        %v4106 = vunpack.c.l.b16 %v3926
        %v4107 = vunpack.c.h.b16 %v3926
        %v4108 = vunpack.c.l.b16 %v3927
        %v4109 = vunpack.c.h.b16 %v3927
        %v4110 = vunpack.c.l.b16 %v3928
        %v4111 = vunpack.c.h.b16 %v3928
        %v4112 = vunpack.c.l.b16 %v3929
        %v4113 = vunpack.c.h.b16 %v3929
        %v4114 = vunpack.c.l.b16 %v3930
        %v4115 = vunpack.c.h.b16 %v3930
        %v4116 = vunpack.c.l.b16 %v3931
        %v4117 = vunpack.c.h.b16 %v3931
        %v4118 = vunpack.c.l.b16 %v3932
        %v4119 = vunpack.c.h.b16 %v3932
        %v4120 = vunpack.c.l.b16 %v3933
        %v4121 = vunpack.c.h.b16 %v3933
        %v4122 = vunpack.c.l.b16 %v3934
        %v4123 = vunpack.c.h.b16 %v3934
        %v4124 = vunpack.c.l.b16 %v3935
        %v4125 = vunpack.c.h.b16 %v3935
        %v4126 = vunpack.c.l.b16 %v3936
        %v4127 = vunpack.c.h.b16 %v3936
        %v4128 = vunpack.c.l.b16 %v3937
        %v4129 = vunpack.c.h.b16 %v3937
        %v4130 = vpack.c.b16 %v4004, %v4002
        %v4131 = vpack.c.b16 %v4005, %v4003
        %v4132 = vpack.c.b16 %v4008, %v4006
        %v4133 = vpack.c.b16 %v4009, %v4007
        %v4134 = vpack.c.b16 %v4012, %v4010
        %v4135 = vpack.c.b16 %v4013, %v4011
        %v4136 = vpack.c.b16 %v4016, %v4014
        %v4137 = vpack.c.b16 %v4017, %v4015
        %v4138 = vpack.c.b16 %v4020, %v4018
        %v4139 = vpack.c.b16 %v4021, %v4019
        %v4140 = vpack.c.b16 %v4024, %v4022
        %v4141 = vpack.c.b16 %v4025, %v4023
        %v4142 = vpack.c.b16 %v4028, %v4026
        %v4143 = vpack.c.b16 %v4029, %v4027
        %v4144 = vpack.c.b16 %v4032, %v4030
        %v4145 = vpack.c.b16 %v4033, %v4031
        %v4146 = vpack.c.b16 %v4036, %v4034
        %v4147 = vpack.c.b16 %v4037, %v4035
        %v4148 = vpack.c.b16 %v4040, %v4038
        %v4149 = vpack.c.b16 %v4041, %v4039
        %v4150 = vpack.c.b16 %v4044, %v4042
        %v4151 = vpack.c.b16 %v4045, %v4043
        %v4152 = vpack.c.b16 %v4048, %v4046
        %v4153 = vpack.c.b16 %v4049, %v4047
        %v4154 = vpack.c.b16 %v4052, %v4050
        %v4155 = vpack.c.b16 %v4053, %v4051
        %v4156 = vpack.c.b16 %v4056, %v4054
        %v4157 = vpack.c.b16 %v4057, %v4055
        %v4158 = vpack.c.b16 %v4060, %v4058
        %v4159 = vpack.c.b16 %v4061, %v4059
        %v4160 = vpack.c.b16 %v4064, %v4062
        %v4161 = vpack.c.b16 %v4065, %v4063
        %v4162 = vpack.c.b16 %v4068, %v4066
        %v4163 = vpack.c.b16 %v4069, %v4067
        %v4164 = vpack.c.b16 %v4072, %v4070
        %v4165 = vpack.c.b16 %v4073, %v4071
        %v4166 = vpack.c.b16 %v4076, %v4074
        %v4167 = vpack.c.b16 %v4077, %v4075
        %v4168 = vpack.c.b16 %v4080, %v4078
        %v4169 = vpack.c.b16 %v4081, %v4079
        %v4170 = vpack.c.b16 %v4084, %v4082
        %v4171 = vpack.c.b16 %v4085, %v4083
        %v4172 = vpack.c.b16 %v4088, %v4086
        %v4173 = vpack.c.b16 %v4089, %v4087
        %v4174 = vpack.c.b16 %v4092, %v4090
        %v4175 = vpack.c.b16 %v4093, %v4091
        %v4176 = vpack.c.b16 %v4096, %v4094
        %v4177 = vpack.c.b16 %v4097, %v4095
        %v4178 = vpack.c.b16 %v4100, %v4098
        %v4179 = vpack.c.b16 %v4101, %v4099
        %v4180 = vpack.c.b16 %v4104, %v4102
        %v4181 = vpack.c.b16 %v4105, %v4103
        %v4182 = vpack.c.b16 %v4108, %v4106
        %v4183 = vpack.c.b16 %v4109, %v4107
        %v4184 = vpack.c.b16 %v4112, %v4110
        %v4185 = vpack.c.b16 %v4113, %v4111
        %v4186 = vpack.c.b16 %v4116, %v4114
        %v4187 = vpack.c.b16 %v4117, %v4115
        %v4188 = vpack.c.b16 %v4120, %v4118
        %v4189 = vpack.c.b16 %v4121, %v4119
        %v4190 = vpack.c.b16 %v4124, %v4122
        %v4191 = vpack.c.b16 %v4125, %v4123
        %v4192 = vpack.c.b16 %v4128, %v4126
        %v4193 = vpack.c.b16 %v4129, %v4127
        %4258 = vmatprep.subr.bf16.mxu0 %v4131
        %4259 = vmatpush1.bf16.msra.mxu0 %v4130
        %4260 = vmatprep.subr.bf16.mxu0 %v4133
        %4261 = vmatpush1.bf16.msra.mxu0 %v4132
        %4262 = vmatprep.subr.bf16.mxu0 %v4135
        %4263 = vmatpush1.bf16.msra.mxu0 %v4134
        %4264 = vmatprep.subr.bf16.mxu0 %v4137
        %4265 = vmatpush1.bf16.msra.mxu0 %v4136
        %4266 = vmatprep.subr.bf16.mxu0 %v4139
        %4267 = vmatpush1.bf16.msra.mxu0 %v4138
        %4268 = vmatprep.subr.bf16.mxu0 %v4141
        %4269 = vmatpush1.bf16.msra.mxu0 %v4140
        %4270 = vmatprep.subr.bf16.mxu0 %v4143
        %4271 = vmatpush1.bf16.msra.mxu0 %v4142
        %4272 = vmatprep.subr.bf16.mxu0 %v4145
        %4273 = vmatpush1.bf16.msra.mxu0 %v4144
        %4274 = vmatprep.subr.bf16.mxu0 %v4147
        %4275 = vmatpush1.bf16.msra.mxu0 %v4146
        %4276 = vmatprep.subr.bf16.mxu0 %v4149
        %4277 = vmatpush1.bf16.msra.mxu0 %v4148
        %4278 = vmatprep.subr.bf16.mxu0 %v4151
        %4279 = vmatpush1.bf16.msra.mxu0 %v4150
        %4280 = vmatprep.subr.bf16.mxu0 %v4153
        %4281 = vmatpush1.bf16.msra.mxu0 %v4152
        %4282 = vmatprep.subr.bf16.mxu0 %v4155
        %4283 = vmatpush1.bf16.msra.mxu0 %v4154
        %4284 = vmatprep.subr.bf16.mxu0 %v4157
        %4285 = vmatpush1.bf16.msra.mxu0 %v4156
        %4286 = vmatprep.subr.bf16.mxu0 %v4159
        %4287 = vmatpush1.bf16.msra.mxu0 %v4158
        %4288 = vmatprep.subr.bf16.mxu0 %v4161
        %4289 = vmatpush1.bf16.msra.mxu0 %v4160
        %4290 = vmatprep.mubr.bf16.mxu0 %v2921
        %4291 = vmatmul.mubr.bf16.gmra.mrb[0].mxu0 %v2920
        %v4292 = vpop.f32.mrb[0].mxu0
        %v4293 = vadd.f32 0.0, %v4292
        %v4294 = vpop.f32.mrb[0].mxu0
        %v4295 = vadd.f32 0.0, %v4294
        %v4296 = vpop.f32.mrb[0].mxu0
        %v4297 = vpop.f32.mrb[0].mxu0
        %4298 = vdwg.mxu0
        %4299 = vmatprep.subr.bf16.mxu0 %v4163
        %4300 = vmatpush1.bf16.msra.mxu0 %v4162
        %4301 = vmatprep.subr.bf16.mxu0 %v4165
        %4302 = vmatpush1.bf16.msra.mxu0 %v4164
        %4303 = vmatprep.subr.bf16.mxu0 %v4167
        %4304 = vmatpush1.bf16.msra.mxu0 %v4166
        %4305 = vmatprep.subr.bf16.mxu0 %v4169
        %4306 = vmatpush1.bf16.msra.mxu0 %v4168
        %4307 = vmatprep.subr.bf16.mxu0 %v4171
        %4308 = vmatpush1.bf16.msra.mxu0 %v4170
        %4309 = vmatprep.subr.bf16.mxu0 %v4173
        %4310 = vmatpush1.bf16.msra.mxu0 %v4172
        %4311 = vmatprep.subr.bf16.mxu0 %v4175
        %4312 = vmatpush1.bf16.msra.mxu0 %v4174
        %4313 = vmatprep.subr.bf16.mxu0 %v4177
        %4314 = vmatpush1.bf16.msra.mxu0 %v4176
        %4315 = vmatprep.subr.bf16.mxu0 %v4179
        %4316 = vmatpush1.bf16.msra.mxu0 %v4178
        %4317 = vmatprep.subr.bf16.mxu0 %v4181
        %4318 = vmatpush1.bf16.msra.mxu0 %v4180
        %4319 = vmatprep.subr.bf16.mxu0 %v4183
        %4320 = vmatpush1.bf16.msra.mxu0 %v4182
        %4321 = vmatprep.subr.bf16.mxu0 %v4185
        %4322 = vmatpush1.bf16.msra.mxu0 %v4184
        %4323 = vmatprep.subr.bf16.mxu0 %v4187
        %4324 = vmatpush1.bf16.msra.mxu0 %v4186
        %4325 = vmatprep.subr.bf16.mxu0 %v4189
        %4326 = vmatpush1.bf16.msra.mxu0 %v4188
        %4327 = vmatprep.subr.bf16.mxu0 %v4191
        %4328 = vmatpush1.bf16.msra.mxu0 %v4190
        %4329 = vmatprep.subr.bf16.mxu0 %v4193
        %4330 = vmatpush1.bf16.msra.mxu0 %v4192
        %4331 = vmatprep.mubr.bf16.mxu0 %v2923
        %4332 = vmatmul.mubr.bf16.gmra.mrb[0].mxu0 %v2922
        %v4333 = vpop.f32.mrb[0].mxu0
        %v4334 = vadd.f32 %v4293, %v4333
        %v4335 = vpop.f32.mrb[0].mxu0
        %v4336 = vadd.f32 %v4295, %v4335
        %v4337 = vpop.f32.mrb[0].mxu0
        %v4338 = vpop.f32.mrb[0].mxu0
        %4339 = vdwg.mxu0
        %v4340 = vadd.f32 %v3867, %v4334
        %v4341 = vadd.f32 %v3869, %v4336
        %s4342 = scalar_lea.vmem [#allocation6], 1536
        %v4343 = vld [vmem:[%s4342] sm:$0xff]
        %v4344 = vld [vmem:[%s4342 + $0x8] sm:$0xff]
        %v4345 = vld [vmem:[%s4342 + $0x10] sm:$0xff]
        %v4346 = vld [vmem:[%s4342 + $0x18] sm:$0xff]
        %v4347 = vld [vmem:[%s4342 + $0x20] sm:$0xff]
        %v4348 = vld [vmem:[%s4342 + $0x28] sm:$0xff]
        %v4349 = vld [vmem:[%s4342 + $0x30] sm:$0xff]
        %v4350 = vld [vmem:[%s4342 + $0x38] sm:$0xff]
        %v4351 = vld [vmem:[%s4342 + $0x40] sm:$0xff]
        %v4352 = vld [vmem:[%s4342 + $0x48] sm:$0xff]
        %v4353 = vld [vmem:[%s4342 + $0x50] sm:$0xff]
        %v4354 = vld [vmem:[%s4342 + $0x58] sm:$0xff]
        %v4355 = vld [vmem:[%s4342 + $0x60] sm:$0xff]
        %v4356 = vld [vmem:[%s4342 + $0x68] sm:$0xff]
        %v4357 = vld [vmem:[%s4342 + $0x70] sm:$0xff]
        %v4358 = vld [vmem:[%s4342 + $0x78] sm:$0xff]
        %v4359 = vld [vmem:[%s4342 + $0x80] sm:$0xff]
        %v4360 = vld [vmem:[%s4342 + $0x88] sm:$0xff]
        %v4361 = vld [vmem:[%s4342 + $0x90] sm:$0xff]
        %v4362 = vld [vmem:[%s4342 + $0x98] sm:$0xff]
        %v4363 = vld [vmem:[%s4342 + $0xa0] sm:$0xff]
        %v4364 = vld [vmem:[%s4342 + $0xa8] sm:$0xff]
        %v4365 = vld [vmem:[%s4342 + $0xb0] sm:$0xff]
        %v4366 = vld [vmem:[%s4342 + $0xb8] sm:$0xff]
        %v4367 = vld [vmem:[%s4342 + $0xc0] sm:$0xff]
        %v4368 = vld [vmem:[%s4342 + $0xc8] sm:$0xff]
        %v4369 = vld [vmem:[%s4342 + $0xd0] sm:$0xff]
        %v4370 = vld [vmem:[%s4342 + $0xd8] sm:$0xff]
        %v4371 = vld [vmem:[%s4342 + $0xe0] sm:$0xff]
        %v4372 = vld [vmem:[%s4342 + $0xe8] sm:$0xff]
        %v4373 = vld [vmem:[%s4342 + $0xf0] sm:$0xff]
        %v4374 = vld [vmem:[%s4342 + $0xf8] sm:$0xff]
        %v4375 = vld [vmem:[%s4342 + $0x100] sm:$0xff]
        %v4376 = vld [vmem:[%s4342 + $0x108] sm:$0xff]
        %v4377 = vld [vmem:[%s4342 + $0x110] sm:$0xff]
        %v4378 = vld [vmem:[%s4342 + $0x118] sm:$0xff]
        %v4379 = vld [vmem:[%s4342 + $0x120] sm:$0xff]
        %v4380 = vld [vmem:[%s4342 + $0x128] sm:$0xff]
        %v4381 = vld [vmem:[%s4342 + $0x130] sm:$0xff]
        %v4382 = vld [vmem:[%s4342 + $0x138] sm:$0xff]
        %v4383 = vld [vmem:[%s4342 + $0x140] sm:$0xff]
        %v4384 = vld [vmem:[%s4342 + $0x148] sm:$0xff]
        %v4385 = vld [vmem:[%s4342 + $0x150] sm:$0xff]
        %v4386 = vld [vmem:[%s4342 + $0x158] sm:$0xff]
        %v4387 = vld [vmem:[%s4342 + $0x160] sm:$0xff]
        %v4388 = vld [vmem:[%s4342 + $0x168] sm:$0xff]
        %v4389 = vld [vmem:[%s4342 + $0x170] sm:$0xff]
        %v4390 = vld [vmem:[%s4342 + $0x178] sm:$0xff]
        %v4391 = vld [vmem:[%s4342 + $0x180] sm:$0xff]
        %v4392 = vld [vmem:[%s4342 + $0x188] sm:$0xff]
        %v4393 = vld [vmem:[%s4342 + $0x190] sm:$0xff]
        %v4394 = vld [vmem:[%s4342 + $0x198] sm:$0xff]
        %v4395 = vld [vmem:[%s4342 + $0x1a0] sm:$0xff]
        %v4396 = vld [vmem:[%s4342 + $0x1a8] sm:$0xff]
        %v4397 = vld [vmem:[%s4342 + $0x1b0] sm:$0xff]
        %v4398 = vld [vmem:[%s4342 + $0x1b8] sm:$0xff]
        %v4399 = vld [vmem:[%s4342 + $0x1c0] sm:$0xff]
        %v4400 = vld [vmem:[%s4342 + $0x1c8] sm:$0xff]
        %v4401 = vld [vmem:[%s4342 + $0x1d0] sm:$0xff]
        %v4402 = vld [vmem:[%s4342 + $0x1d8] sm:$0xff]
        %v4403 = vld [vmem:[%s4342 + $0x1e0] sm:$0xff]
        %v4404 = vld [vmem:[%s4342 + $0x1e8] sm:$0xff]
        %v4405 = vld [vmem:[%s4342 + $0x1f0] sm:$0xff]
        %v4406 = vld [vmem:[%s4342 + $0x1f8] sm:$0xff]
        %v4411 = vrot.slane %v2920, 4
        %v4412 = vrot.slane %v2921, 4
        %v4413 = vrot.slane %v2922, 4
        %v4414 = vrot.slane %v2923, 4
        %v4483 = vunpack.c.l.b16 %v4343
        %v4484 = vunpack.c.h.b16 %v4343
        %v4485 = vunpack.c.l.b16 %v4344
        %v4486 = vunpack.c.h.b16 %v4344
        %v4487 = vunpack.c.l.b16 %v4345
        %v4488 = vunpack.c.h.b16 %v4345
        %v4489 = vunpack.c.l.b16 %v4346
        %v4490 = vunpack.c.h.b16 %v4346
        %v4491 = vunpack.c.l.b16 %v4347
        %v4492 = vunpack.c.h.b16 %v4347
        %v4493 = vunpack.c.l.b16 %v4348
        %v4494 = vunpack.c.h.b16 %v4348
        %v4495 = vunpack.c.l.b16 %v4349
        %v4496 = vunpack.c.h.b16 %v4349
        %v4497 = vunpack.c.l.b16 %v4350
        %v4498 = vunpack.c.h.b16 %v4350
        %v4499 = vunpack.c.l.b16 %v4351
        %v4500 = vunpack.c.h.b16 %v4351
        %v4501 = vunpack.c.l.b16 %v4352
        %v4502 = vunpack.c.h.b16 %v4352
        %v4503 = vunpack.c.l.b16 %v4353
        %v4504 = vunpack.c.h.b16 %v4353
        %v4505 = vunpack.c.l.b16 %v4354
        %v4506 = vunpack.c.h.b16 %v4354
        %v4507 = vunpack.c.l.b16 %v4355
        %v4508 = vunpack.c.h.b16 %v4355
        %v4509 = vunpack.c.l.b16 %v4356
        %v4510 = vunpack.c.h.b16 %v4356
        %v4511 = vunpack.c.l.b16 %v4357
        %v4512 = vunpack.c.h.b16 %v4357
        %v4513 = vunpack.c.l.b16 %v4358
        %v4514 = vunpack.c.h.b16 %v4358
        %v4515 = vunpack.c.l.b16 %v4359
        %v4516 = vunpack.c.h.b16 %v4359
        %v4517 = vunpack.c.l.b16 %v4360
        %v4518 = vunpack.c.h.b16 %v4360
        %v4519 = vunpack.c.l.b16 %v4361
        %v4520 = vunpack.c.h.b16 %v4361
        %v4521 = vunpack.c.l.b16 %v4362
        %v4522 = vunpack.c.h.b16 %v4362
        %v4523 = vunpack.c.l.b16 %v4363
        %v4524 = vunpack.c.h.b16 %v4363
        %v4525 = vunpack.c.l.b16 %v4364
        %v4526 = vunpack.c.h.b16 %v4364
        %v4527 = vunpack.c.l.b16 %v4365
        %v4528 = vunpack.c.h.b16 %v4365
        %v4529 = vunpack.c.l.b16 %v4366
        %v4530 = vunpack.c.h.b16 %v4366
        %v4531 = vunpack.c.l.b16 %v4367
        %v4532 = vunpack.c.h.b16 %v4367
        %v4533 = vunpack.c.l.b16 %v4368
        %v4534 = vunpack.c.h.b16 %v4368
        %v4535 = vunpack.c.l.b16 %v4369
        %v4536 = vunpack.c.h.b16 %v4369
        %v4537 = vunpack.c.l.b16 %v4370
        %v4538 = vunpack.c.h.b16 %v4370
        %v4539 = vunpack.c.l.b16 %v4371
        %v4540 = vunpack.c.h.b16 %v4371
        %v4541 = vunpack.c.l.b16 %v4372
        %v4542 = vunpack.c.h.b16 %v4372
        %v4543 = vunpack.c.l.b16 %v4373
        %v4544 = vunpack.c.h.b16 %v4373
        %v4545 = vunpack.c.l.b16 %v4374
        %v4546 = vunpack.c.h.b16 %v4374
        %v4547 = vunpack.c.l.b16 %v4375
        %v4548 = vunpack.c.h.b16 %v4375
        %v4549 = vunpack.c.l.b16 %v4376
        %v4550 = vunpack.c.h.b16 %v4376
        %v4551 = vunpack.c.l.b16 %v4377
        %v4552 = vunpack.c.h.b16 %v4377
        %v4553 = vunpack.c.l.b16 %v4378
        %v4554 = vunpack.c.h.b16 %v4378
        %v4555 = vunpack.c.l.b16 %v4379
        %v4556 = vunpack.c.h.b16 %v4379
        %v4557 = vunpack.c.l.b16 %v4380
        %v4558 = vunpack.c.h.b16 %v4380
        %v4559 = vunpack.c.l.b16 %v4381
        %v4560 = vunpack.c.h.b16 %v4381
        %v4561 = vunpack.c.l.b16 %v4382
        %v4562 = vunpack.c.h.b16 %v4382
        %v4563 = vunpack.c.l.b16 %v4383
        %v4564 = vunpack.c.h.b16 %v4383
        %v4565 = vunpack.c.l.b16 %v4384
        %v4566 = vunpack.c.h.b16 %v4384
        %v4567 = vunpack.c.l.b16 %v4385
        %v4568 = vunpack.c.h.b16 %v4385
        %v4569 = vunpack.c.l.b16 %v4386
        %v4570 = vunpack.c.h.b16 %v4386
        %v4571 = vunpack.c.l.b16 %v4387
        %v4572 = vunpack.c.h.b16 %v4387
        %v4573 = vunpack.c.l.b16 %v4388
        %v4574 = vunpack.c.h.b16 %v4388
        %v4575 = vunpack.c.l.b16 %v4389
        %v4576 = vunpack.c.h.b16 %v4389
        %v4577 = vunpack.c.l.b16 %v4390
        %v4578 = vunpack.c.h.b16 %v4390
        %v4579 = vunpack.c.l.b16 %v4391
        %v4580 = vunpack.c.h.b16 %v4391
        %v4581 = vunpack.c.l.b16 %v4392
        %v4582 = vunpack.c.h.b16 %v4392
        %v4583 = vunpack.c.l.b16 %v4393
        %v4584 = vunpack.c.h.b16 %v4393
        %v4585 = vunpack.c.l.b16 %v4394
        %v4586 = vunpack.c.h.b16 %v4394
        %v4587 = vunpack.c.l.b16 %v4395
        %v4588 = vunpack.c.h.b16 %v4395
        %v4589 = vunpack.c.l.b16 %v4396
        %v4590 = vunpack.c.h.b16 %v4396
        %v4591 = vunpack.c.l.b16 %v4397
        %v4592 = vunpack.c.h.b16 %v4397
        %v4593 = vunpack.c.l.b16 %v4398
        %v4594 = vunpack.c.h.b16 %v4398
        %v4595 = vunpack.c.l.b16 %v4399
        %v4596 = vunpack.c.h.b16 %v4399
        %v4597 = vunpack.c.l.b16 %v4400
        %v4598 = vunpack.c.h.b16 %v4400
        %v4599 = vunpack.c.l.b16 %v4401
        %v4600 = vunpack.c.h.b16 %v4401
        %v4601 = vunpack.c.l.b16 %v4402
        %v4602 = vunpack.c.h.b16 %v4402
        %v4603 = vunpack.c.l.b16 %v4403
        %v4604 = vunpack.c.h.b16 %v4403
        %v4605 = vunpack.c.l.b16 %v4404
        %v4606 = vunpack.c.h.b16 %v4404
        %v4607 = vunpack.c.l.b16 %v4405
        %v4608 = vunpack.c.h.b16 %v4405
        %v4609 = vunpack.c.l.b16 %v4406
        %v4610 = vunpack.c.h.b16 %v4406
        %v4611 = vpack.c.b16 %v4485, %v4483
        %v4612 = vpack.c.b16 %v4486, %v4484
        %v4613 = vpack.c.b16 %v4489, %v4487
        %v4614 = vpack.c.b16 %v4490, %v4488
        %v4615 = vpack.c.b16 %v4493, %v4491
        %v4616 = vpack.c.b16 %v4494, %v4492
        %v4617 = vpack.c.b16 %v4497, %v4495
        %v4618 = vpack.c.b16 %v4498, %v4496
        %v4619 = vpack.c.b16 %v4501, %v4499
        %v4620 = vpack.c.b16 %v4502, %v4500
        %v4621 = vpack.c.b16 %v4505, %v4503
        %v4622 = vpack.c.b16 %v4506, %v4504
        %v4623 = vpack.c.b16 %v4509, %v4507
        %v4624 = vpack.c.b16 %v4510, %v4508
        %v4625 = vpack.c.b16 %v4513, %v4511
        %v4626 = vpack.c.b16 %v4514, %v4512
        %v4627 = vpack.c.b16 %v4517, %v4515
        %v4628 = vpack.c.b16 %v4518, %v4516
        %v4629 = vpack.c.b16 %v4521, %v4519
        %v4630 = vpack.c.b16 %v4522, %v4520
        %v4631 = vpack.c.b16 %v4525, %v4523
        %v4632 = vpack.c.b16 %v4526, %v4524
        %v4633 = vpack.c.b16 %v4529, %v4527
        %v4634 = vpack.c.b16 %v4530, %v4528
        %v4635 = vpack.c.b16 %v4533, %v4531
        %v4636 = vpack.c.b16 %v4534, %v4532
        %v4637 = vpack.c.b16 %v4537, %v4535
        %v4638 = vpack.c.b16 %v4538, %v4536
        %v4639 = vpack.c.b16 %v4541, %v4539
        %v4640 = vpack.c.b16 %v4542, %v4540
        %v4641 = vpack.c.b16 %v4545, %v4543
        %v4642 = vpack.c.b16 %v4546, %v4544
        %v4643 = vpack.c.b16 %v4549, %v4547
        %v4644 = vpack.c.b16 %v4550, %v4548
        %v4645 = vpack.c.b16 %v4553, %v4551
        %v4646 = vpack.c.b16 %v4554, %v4552
        %v4647 = vpack.c.b16 %v4557, %v4555
        %v4648 = vpack.c.b16 %v4558, %v4556
        %v4649 = vpack.c.b16 %v4561, %v4559
        %v4650 = vpack.c.b16 %v4562, %v4560
        %v4651 = vpack.c.b16 %v4565, %v4563
        %v4652 = vpack.c.b16 %v4566, %v4564
        %v4653 = vpack.c.b16 %v4569, %v4567
        %v4654 = vpack.c.b16 %v4570, %v4568
        %v4655 = vpack.c.b16 %v4573, %v4571
        %v4656 = vpack.c.b16 %v4574, %v4572
        %v4657 = vpack.c.b16 %v4577, %v4575
        %v4658 = vpack.c.b16 %v4578, %v4576
        %v4659 = vpack.c.b16 %v4581, %v4579
        %v4660 = vpack.c.b16 %v4582, %v4580
        %v4661 = vpack.c.b16 %v4585, %v4583
        %v4662 = vpack.c.b16 %v4586, %v4584
        %v4663 = vpack.c.b16 %v4589, %v4587
        %v4664 = vpack.c.b16 %v4590, %v4588
        %v4665 = vpack.c.b16 %v4593, %v4591
        %v4666 = vpack.c.b16 %v4594, %v4592
        %v4667 = vpack.c.b16 %v4597, %v4595
        %v4668 = vpack.c.b16 %v4598, %v4596
        %v4669 = vpack.c.b16 %v4601, %v4599
        %v4670 = vpack.c.b16 %v4602, %v4600
        %v4671 = vpack.c.b16 %v4605, %v4603
        %v4672 = vpack.c.b16 %v4606, %v4604
        %v4673 = vpack.c.b16 %v4609, %v4607
        %v4674 = vpack.c.b16 %v4610, %v4608
        %4739 = vmatprep.subr.bf16.mxu0 %v4612
        %4740 = vmatpush1.bf16.msra.mxu0 %v4611
        %4741 = vmatprep.subr.bf16.mxu0 %v4614
        %4742 = vmatpush1.bf16.msra.mxu0 %v4613
        %4743 = vmatprep.subr.bf16.mxu0 %v4616
        %4744 = vmatpush1.bf16.msra.mxu0 %v4615
        %4745 = vmatprep.subr.bf16.mxu0 %v4618
        %4746 = vmatpush1.bf16.msra.mxu0 %v4617
        %4747 = vmatprep.subr.bf16.mxu0 %v4620
        %4748 = vmatpush1.bf16.msra.mxu0 %v4619
        %4749 = vmatprep.subr.bf16.mxu0 %v4622
        %4750 = vmatpush1.bf16.msra.mxu0 %v4621
        %4751 = vmatprep.subr.bf16.mxu0 %v4624
        %4752 = vmatpush1.bf16.msra.mxu0 %v4623
        %4753 = vmatprep.subr.bf16.mxu0 %v4626
        %4754 = vmatpush1.bf16.msra.mxu0 %v4625
        %4755 = vmatprep.subr.bf16.mxu0 %v4628
        %4756 = vmatpush1.bf16.msra.mxu0 %v4627
        %4757 = vmatprep.subr.bf16.mxu0 %v4630
        %4758 = vmatpush1.bf16.msra.mxu0 %v4629
        %4759 = vmatprep.subr.bf16.mxu0 %v4632
        %4760 = vmatpush1.bf16.msra.mxu0 %v4631
        %4761 = vmatprep.subr.bf16.mxu0 %v4634
        %4762 = vmatpush1.bf16.msra.mxu0 %v4633
        %4763 = vmatprep.subr.bf16.mxu0 %v4636
        %4764 = vmatpush1.bf16.msra.mxu0 %v4635
        %4765 = vmatprep.subr.bf16.mxu0 %v4638
        %4766 = vmatpush1.bf16.msra.mxu0 %v4637
        %4767 = vmatprep.subr.bf16.mxu0 %v4640
        %4768 = vmatpush1.bf16.msra.mxu0 %v4639
        %4769 = vmatprep.subr.bf16.mxu0 %v4642
        %4770 = vmatpush1.bf16.msra.mxu0 %v4641
        %4771 = vmatprep.mubr.bf16.mxu0 %v4412
        %4772 = vmatmul.mubr.bf16.gmra.mrb[0].mxu0 %v4411
        %v4773 = vpop.f32.mrb[0].mxu0
        %v4774 = vadd.f32 0.0, %v4773
        %v4775 = vpop.f32.mrb[0].mxu0
        %v4776 = vadd.f32 0.0, %v4775
        %v4777 = vpop.f32.mrb[0].mxu0
        %v4778 = vpop.f32.mrb[0].mxu0
        %4779 = vdwg.mxu0
        %4780 = vmatprep.subr.bf16.mxu0 %v4644
        %4781 = vmatpush1.bf16.msra.mxu0 %v4643
        %4782 = vmatprep.subr.bf16.mxu0 %v4646
        %4783 = vmatpush1.bf16.msra.mxu0 %v4645
        %4784 = vmatprep.subr.bf16.mxu0 %v4648
        %4785 = vmatpush1.bf16.msra.mxu0 %v4647
        %4786 = vmatprep.subr.bf16.mxu0 %v4650
        %4787 = vmatpush1.bf16.msra.mxu0 %v4649
        %4788 = vmatprep.subr.bf16.mxu0 %v4652
        %4789 = vmatpush1.bf16.msra.mxu0 %v4651
        %4790 = vmatprep.subr.bf16.mxu0 %v4654
        %4791 = vmatpush1.bf16.msra.mxu0 %v4653
        %4792 = vmatprep.subr.bf16.mxu0 %v4656
        %4793 = vmatpush1.bf16.msra.mxu0 %v4655
        %4794 = vmatprep.subr.bf16.mxu0 %v4658
        %4795 = vmatpush1.bf16.msra.mxu0 %v4657
        %4796 = vmatprep.subr.bf16.mxu0 %v4660
        %4797 = vmatpush1.bf16.msra.mxu0 %v4659
        %4798 = vmatprep.subr.bf16.mxu0 %v4662
        %4799 = vmatpush1.bf16.msra.mxu0 %v4661
        %4800 = vmatprep.subr.bf16.mxu0 %v4664
        %4801 = vmatpush1.bf16.msra.mxu0 %v4663
        %4802 = vmatprep.subr.bf16.mxu0 %v4666
        %4803 = vmatpush1.bf16.msra.mxu0 %v4665
        %4804 = vmatprep.subr.bf16.mxu0 %v4668
        %4805 = vmatpush1.bf16.msra.mxu0 %v4667
        %4806 = vmatprep.subr.bf16.mxu0 %v4670
        %4807 = vmatpush1.bf16.msra.mxu0 %v4669
        %4808 = vmatprep.subr.bf16.mxu0 %v4672
        %4809 = vmatpush1.bf16.msra.mxu0 %v4671
        %4810 = vmatprep.subr.bf16.mxu0 %v4674
        %4811 = vmatpush1.bf16.msra.mxu0 %v4673
        %4812 = vmatprep.mubr.bf16.mxu0 %v4414
        %4813 = vmatmul.mubr.bf16.gmra.mrb[0].mxu0 %v4413
        %v4814 = vpop.f32.mrb[0].mxu0
        %v4815 = vadd.f32 %v4774, %v4814
        %v4816 = vpop.f32.mrb[0].mxu0
        %v4817 = vadd.f32 %v4776, %v4816
        %v4818 = vpop.f32.mrb[0].mxu0
        %v4819 = vpop.f32.mrb[0].mxu0
        %4820 = vdwg.mxu0
        %v4821 = vadd.f32 %v4340, %v4815
        %v4822 = vadd.f32 %v4341, %v4817
        %s4823 = scalar_lea.vmem [#allocation6], 2048
        %v4824 = vld [vmem:[%s4823] sm:$0xff]
        %v4825 = vld [vmem:[%s4823 + $0x8] sm:$0xff]
        %v4826 = vld [vmem:[%s4823 + $0x10] sm:$0xff]
        %v4827 = vld [vmem:[%s4823 + $0x18] sm:$0xff]
        %v4828 = vld [vmem:[%s4823 + $0x20] sm:$0xff]
        %v4829 = vld [vmem:[%s4823 + $0x28] sm:$0xff]
        %v4830 = vld [vmem:[%s4823 + $0x30] sm:$0xff]
        %v4831 = vld [vmem:[%s4823 + $0x38] sm:$0xff]
        %v4832 = vld [vmem:[%s4823 + $0x40] sm:$0xff]
        %v4833 = vld [vmem:[%s4823 + $0x48] sm:$0xff]
        %v4834 = vld [vmem:[%s4823 + $0x50] sm:$0xff]
        %v4835 = vld [vmem:[%s4823 + $0x58] sm:$0xff]
        %v4836 = vld [vmem:[%s4823 + $0x60] sm:$0xff]
        %v4837 = vld [vmem:[%s4823 + $0x68] sm:$0xff]
        %v4838 = vld [vmem:[%s4823 + $0x70] sm:$0xff]
        %v4839 = vld [vmem:[%s4823 + $0x78] sm:$0xff]
        %v4840 = vld [vmem:[%s4823 + $0x80] sm:$0xff]
        %v4841 = vld [vmem:[%s4823 + $0x88] sm:$0xff]
        %v4842 = vld [vmem:[%s4823 + $0x90] sm:$0xff]
        %v4843 = vld [vmem:[%s4823 + $0x98] sm:$0xff]
        %v4844 = vld [vmem:[%s4823 + $0xa0] sm:$0xff]
        %v4845 = vld [vmem:[%s4823 + $0xa8] sm:$0xff]
        %v4846 = vld [vmem:[%s4823 + $0xb0] sm:$0xff]
        %v4847 = vld [vmem:[%s4823 + $0xb8] sm:$0xff]
        %v4848 = vld [vmem:[%s4823 + $0xc0] sm:$0xff]
        %v4849 = vld [vmem:[%s4823 + $0xc8] sm:$0xff]
        %v4850 = vld [vmem:[%s4823 + $0xd0] sm:$0xff]
        %v4851 = vld [vmem:[%s4823 + $0xd8] sm:$0xff]
        %v4852 = vld [vmem:[%s4823 + $0xe0] sm:$0xff]
        %v4853 = vld [vmem:[%s4823 + $0xe8] sm:$0xff]
        %v4854 = vld [vmem:[%s4823 + $0xf0] sm:$0xff]
        %v4855 = vld [vmem:[%s4823 + $0xf8] sm:$0xff]
        %v4856 = vld [vmem:[%s4823 + $0x100] sm:$0xff]
        %v4857 = vld [vmem:[%s4823 + $0x108] sm:$0xff]
        %v4858 = vld [vmem:[%s4823 + $0x110] sm:$0xff]
        %v4859 = vld [vmem:[%s4823 + $0x118] sm:$0xff]
        %v4860 = vld [vmem:[%s4823 + $0x120] sm:$0xff]
        %v4861 = vld [vmem:[%s4823 + $0x128] sm:$0xff]
        %v4862 = vld [vmem:[%s4823 + $0x130] sm:$0xff]
        %v4863 = vld [vmem:[%s4823 + $0x138] sm:$0xff]
        %v4864 = vld [vmem:[%s4823 + $0x140] sm:$0xff]
        %v4865 = vld [vmem:[%s4823 + $0x148] sm:$0xff]
        %v4866 = vld [vmem:[%s4823 + $0x150] sm:$0xff]
        %v4867 = vld [vmem:[%s4823 + $0x158] sm:$0xff]
        %v4868 = vld [vmem:[%s4823 + $0x160] sm:$0xff]
        %v4869 = vld [vmem:[%s4823 + $0x168] sm:$0xff]
        %v4870 = vld [vmem:[%s4823 + $0x170] sm:$0xff]
        %v4871 = vld [vmem:[%s4823 + $0x178] sm:$0xff]
        %v4872 = vld [vmem:[%s4823 + $0x180] sm:$0xff]
        %v4873 = vld [vmem:[%s4823 + $0x188] sm:$0xff]
        %v4874 = vld [vmem:[%s4823 + $0x190] sm:$0xff]
        %v4875 = vld [vmem:[%s4823 + $0x198] sm:$0xff]
        %v4876 = vld [vmem:[%s4823 + $0x1a0] sm:$0xff]
        %v4877 = vld [vmem:[%s4823 + $0x1a8] sm:$0xff]
        %v4878 = vld [vmem:[%s4823 + $0x1b0] sm:$0xff]
        %v4879 = vld [vmem:[%s4823 + $0x1b8] sm:$0xff]
        %v4880 = vld [vmem:[%s4823 + $0x1c0] sm:$0xff]
        %v4881 = vld [vmem:[%s4823 + $0x1c8] sm:$0xff]
        %v4882 = vld [vmem:[%s4823 + $0x1d0] sm:$0xff]
        %v4883 = vld [vmem:[%s4823 + $0x1d8] sm:$0xff]
        %v4884 = vld [vmem:[%s4823 + $0x1e0] sm:$0xff]
        %v4885 = vld [vmem:[%s4823 + $0x1e8] sm:$0xff]
        %v4886 = vld [vmem:[%s4823 + $0x1f0] sm:$0xff]
        %v4887 = vld [vmem:[%s4823 + $0x1f8] sm:$0xff]
        %v4952 = vunpack.c.l.b16 %v4824
        %v4953 = vunpack.c.h.b16 %v4824
        %v4954 = vunpack.c.l.b16 %v4825
        %v4955 = vunpack.c.h.b16 %v4825
        %v4956 = vunpack.c.l.b16 %v4826
        %v4957 = vunpack.c.h.b16 %v4826
        %v4958 = vunpack.c.l.b16 %v4827
        %v4959 = vunpack.c.h.b16 %v4827
        %v4960 = vunpack.c.l.b16 %v4828
        %v4961 = vunpack.c.h.b16 %v4828
        %v4962 = vunpack.c.l.b16 %v4829
        %v4963 = vunpack.c.h.b16 %v4829
        %v4964 = vunpack.c.l.b16 %v4830
        %v4965 = vunpack.c.h.b16 %v4830
        %v4966 = vunpack.c.l.b16 %v4831
        %v4967 = vunpack.c.h.b16 %v4831
        %v4968 = vunpack.c.l.b16 %v4832
        %v4969 = vunpack.c.h.b16 %v4832
        %v4970 = vunpack.c.l.b16 %v4833
        %v4971 = vunpack.c.h.b16 %v4833
        %v4972 = vunpack.c.l.b16 %v4834
        %v4973 = vunpack.c.h.b16 %v4834
        %v4974 = vunpack.c.l.b16 %v4835
        %v4975 = vunpack.c.h.b16 %v4835
        %v4976 = vunpack.c.l.b16 %v4836
        %v4977 = vunpack.c.h.b16 %v4836
        %v4978 = vunpack.c.l.b16 %v4837
        %v4979 = vunpack.c.h.b16 %v4837
        %v4980 = vunpack.c.l.b16 %v4838
        %v4981 = vunpack.c.h.b16 %v4838
        %v4982 = vunpack.c.l.b16 %v4839
        %v4983 = vunpack.c.h.b16 %v4839
        %v4984 = vunpack.c.l.b16 %v4840
        %v4985 = vunpack.c.h.b16 %v4840
        %v4986 = vunpack.c.l.b16 %v4841
        %v4987 = vunpack.c.h.b16 %v4841
        %v4988 = vunpack.c.l.b16 %v4842
        %v4989 = vunpack.c.h.b16 %v4842
        %v4990 = vunpack.c.l.b16 %v4843
        %v4991 = vunpack.c.h.b16 %v4843
        %v4992 = vunpack.c.l.b16 %v4844
        %v4993 = vunpack.c.h.b16 %v4844
        %v4994 = vunpack.c.l.b16 %v4845
        %v4995 = vunpack.c.h.b16 %v4845
        %v4996 = vunpack.c.l.b16 %v4846
        %v4997 = vunpack.c.h.b16 %v4846
        %v4998 = vunpack.c.l.b16 %v4847
        %v4999 = vunpack.c.h.b16 %v4847
        %v5000 = vunpack.c.l.b16 %v4848
        %v5001 = vunpack.c.h.b16 %v4848
        %v5002 = vunpack.c.l.b16 %v4849
        %v5003 = vunpack.c.h.b16 %v4849
        %v5004 = vunpack.c.l.b16 %v4850
        %v5005 = vunpack.c.h.b16 %v4850
        %v5006 = vunpack.c.l.b16 %v4851
        %v5007 = vunpack.c.h.b16 %v4851
        %v5008 = vunpack.c.l.b16 %v4852
        %v5009 = vunpack.c.h.b16 %v4852
        %v5010 = vunpack.c.l.b16 %v4853
        %v5011 = vunpack.c.h.b16 %v4853
        %v5012 = vunpack.c.l.b16 %v4854
        %v5013 = vunpack.c.h.b16 %v4854
        %v5014 = vunpack.c.l.b16 %v4855
        %v5015 = vunpack.c.h.b16 %v4855
        %v5016 = vunpack.c.l.b16 %v4856
        %v5017 = vunpack.c.h.b16 %v4856
        %v5018 = vunpack.c.l.b16 %v4857
        %v5019 = vunpack.c.h.b16 %v4857
        %v5020 = vunpack.c.l.b16 %v4858
        %v5021 = vunpack.c.h.b16 %v4858
        %v5022 = vunpack.c.l.b16 %v4859
        %v5023 = vunpack.c.h.b16 %v4859
        %v5024 = vunpack.c.l.b16 %v4860
        %v5025 = vunpack.c.h.b16 %v4860
        %v5026 = vunpack.c.l.b16 %v4861
        %v5027 = vunpack.c.h.b16 %v4861
        %v5028 = vunpack.c.l.b16 %v4862
        %v5029 = vunpack.c.h.b16 %v4862
        %v5030 = vunpack.c.l.b16 %v4863
        %v5031 = vunpack.c.h.b16 %v4863
        %v5032 = vunpack.c.l.b16 %v4864
        %v5033 = vunpack.c.h.b16 %v4864
        %v5034 = vunpack.c.l.b16 %v4865
        %v5035 = vunpack.c.h.b16 %v4865
        %v5036 = vunpack.c.l.b16 %v4866
        %v5037 = vunpack.c.h.b16 %v4866
        %v5038 = vunpack.c.l.b16 %v4867
        %v5039 = vunpack.c.h.b16 %v4867
        %v5040 = vunpack.c.l.b16 %v4868
        %v5041 = vunpack.c.h.b16 %v4868
        %v5042 = vunpack.c.l.b16 %v4869
        %v5043 = vunpack.c.h.b16 %v4869
        %v5044 = vunpack.c.l.b16 %v4870
        %v5045 = vunpack.c.h.b16 %v4870
        %v5046 = vunpack.c.l.b16 %v4871
        %v5047 = vunpack.c.h.b16 %v4871
        %v5048 = vunpack.c.l.b16 %v4872
        %v5049 = vunpack.c.h.b16 %v4872
        %v5050 = vunpack.c.l.b16 %v4873
        %v5051 = vunpack.c.h.b16 %v4873
        %v5052 = vunpack.c.l.b16 %v4874
        %v5053 = vunpack.c.h.b16 %v4874
        %v5054 = vunpack.c.l.b16 %v4875
        %v5055 = vunpack.c.h.b16 %v4875
        %v5056 = vunpack.c.l.b16 %v4876
        %v5057 = vunpack.c.h.b16 %v4876
        %v5058 = vunpack.c.l.b16 %v4877
        %v5059 = vunpack.c.h.b16 %v4877
        %v5060 = vunpack.c.l.b16 %v4878
        %v5061 = vunpack.c.h.b16 %v4878
        %v5062 = vunpack.c.l.b16 %v4879
        %v5063 = vunpack.c.h.b16 %v4879
        %v5064 = vunpack.c.l.b16 %v4880
        %v5065 = vunpack.c.h.b16 %v4880
        %v5066 = vunpack.c.l.b16 %v4881
        %v5067 = vunpack.c.h.b16 %v4881
        %v5068 = vunpack.c.l.b16 %v4882
        %v5069 = vunpack.c.h.b16 %v4882
        %v5070 = vunpack.c.l.b16 %v4883
        %v5071 = vunpack.c.h.b16 %v4883
        %v5072 = vunpack.c.l.b16 %v4884
        %v5073 = vunpack.c.h.b16 %v4884
        %v5074 = vunpack.c.l.b16 %v4885
        %v5075 = vunpack.c.h.b16 %v4885
        %v5076 = vunpack.c.l.b16 %v4886
        %v5077 = vunpack.c.h.b16 %v4886
        %v5078 = vunpack.c.l.b16 %v4887
        %v5079 = vunpack.c.h.b16 %v4887
        %v5080 = vpack.c.b16 %v4954, %v4952
        %v5081 = vpack.c.b16 %v4955, %v4953
        %v5082 = vpack.c.b16 %v4958, %v4956
        %v5083 = vpack.c.b16 %v4959, %v4957
        %v5084 = vpack.c.b16 %v4962, %v4960
        %v5085 = vpack.c.b16 %v4963, %v4961
        %v5086 = vpack.c.b16 %v4966, %v4964
        %v5087 = vpack.c.b16 %v4967, %v4965
        %v5088 = vpack.c.b16 %v4970, %v4968
        %v5089 = vpack.c.b16 %v4971, %v4969
        %v5090 = vpack.c.b16 %v4974, %v4972
        %v5091 = vpack.c.b16 %v4975, %v4973
        %v5092 = vpack.c.b16 %v4978, %v4976
        %v5093 = vpack.c.b16 %v4979, %v4977
        %v5094 = vpack.c.b16 %v4982, %v4980
        %v5095 = vpack.c.b16 %v4983, %v4981
        %v5096 = vpack.c.b16 %v4986, %v4984
        %v5097 = vpack.c.b16 %v4987, %v4985
        %v5098 = vpack.c.b16 %v4990, %v4988
        %v5099 = vpack.c.b16 %v4991, %v4989
        %v5100 = vpack.c.b16 %v4994, %v4992
        %v5101 = vpack.c.b16 %v4995, %v4993
        %v5102 = vpack.c.b16 %v4998, %v4996
        %v5103 = vpack.c.b16 %v4999, %v4997
        %v5104 = vpack.c.b16 %v5002, %v5000
        %v5105 = vpack.c.b16 %v5003, %v5001
        %v5106 = vpack.c.b16 %v5006, %v5004
        %v5107 = vpack.c.b16 %v5007, %v5005
        %v5108 = vpack.c.b16 %v5010, %v5008
        %v5109 = vpack.c.b16 %v5011, %v5009
        %v5110 = vpack.c.b16 %v5014, %v5012
        %v5111 = vpack.c.b16 %v5015, %v5013
        %v5112 = vpack.c.b16 %v5018, %v5016
        %v5113 = vpack.c.b16 %v5019, %v5017
        %v5114 = vpack.c.b16 %v5022, %v5020
        %v5115 = vpack.c.b16 %v5023, %v5021
        %v5116 = vpack.c.b16 %v5026, %v5024
        %v5117 = vpack.c.b16 %v5027, %v5025
        %v5118 = vpack.c.b16 %v5030, %v5028
        %v5119 = vpack.c.b16 %v5031, %v5029
        %v5120 = vpack.c.b16 %v5034, %v5032
        %v5121 = vpack.c.b16 %v5035, %v5033
        %v5122 = vpack.c.b16 %v5038, %v5036
        %v5123 = vpack.c.b16 %v5039, %v5037
        %v5124 = vpack.c.b16 %v5042, %v5040
        %v5125 = vpack.c.b16 %v5043, %v5041
        %v5126 = vpack.c.b16 %v5046, %v5044
        %v5127 = vpack.c.b16 %v5047, %v5045
        %v5128 = vpack.c.b16 %v5050, %v5048
        %v5129 = vpack.c.b16 %v5051, %v5049
        %v5130 = vpack.c.b16 %v5054, %v5052
        %v5131 = vpack.c.b16 %v5055, %v5053
        %v5132 = vpack.c.b16 %v5058, %v5056
        %v5133 = vpack.c.b16 %v5059, %v5057
        %v5134 = vpack.c.b16 %v5062, %v5060
        %v5135 = vpack.c.b16 %v5063, %v5061
        %v5136 = vpack.c.b16 %v5066, %v5064
        %v5137 = vpack.c.b16 %v5067, %v5065
        %v5138 = vpack.c.b16 %v5070, %v5068
        %v5139 = vpack.c.b16 %v5071, %v5069
        %v5140 = vpack.c.b16 %v5074, %v5072
        %v5141 = vpack.c.b16 %v5075, %v5073
        %v5142 = vpack.c.b16 %v5078, %v5076
        %v5143 = vpack.c.b16 %v5079, %v5077
        %5208 = vmatprep.subr.bf16.mxu0 %v5081
        %5209 = vmatpush1.bf16.msra.mxu0 %v5080
        %5210 = vmatprep.subr.bf16.mxu0 %v5083
        %5211 = vmatpush1.bf16.msra.mxu0 %v5082
        %5212 = vmatprep.subr.bf16.mxu0 %v5085
        %5213 = vmatpush1.bf16.msra.mxu0 %v5084
        %5214 = vmatprep.subr.bf16.mxu0 %v5087
        %5215 = vmatpush1.bf16.msra.mxu0 %v5086
        %5216 = vmatprep.subr.bf16.mxu0 %v5089
        %5217 = vmatpush1.bf16.msra.mxu0 %v5088
        %5218 = vmatprep.subr.bf16.mxu0 %v5091
        %5219 = vmatpush1.bf16.msra.mxu0 %v5090
        %5220 = vmatprep.subr.bf16.mxu0 %v5093
        %5221 = vmatpush1.bf16.msra.mxu0 %v5092
        %5222 = vmatprep.subr.bf16.mxu0 %v5095
        %5223 = vmatpush1.bf16.msra.mxu0 %v5094
        %5224 = vmatprep.subr.bf16.mxu0 %v5097
        %5225 = vmatpush1.bf16.msra.mxu0 %v5096
        %5226 = vmatprep.subr.bf16.mxu0 %v5099
        %5227 = vmatpush1.bf16.msra.mxu0 %v5098
        %5228 = vmatprep.subr.bf16.mxu0 %v5101
        %5229 = vmatpush1.bf16.msra.mxu0 %v5100
        %5230 = vmatprep.subr.bf16.mxu0 %v5103
        %5231 = vmatpush1.bf16.msra.mxu0 %v5102
        %5232 = vmatprep.subr.bf16.mxu0 %v5105
        %5233 = vmatpush1.bf16.msra.mxu0 %v5104
        %5234 = vmatprep.subr.bf16.mxu0 %v5107
        %5235 = vmatpush1.bf16.msra.mxu0 %v5106
        %5236 = vmatprep.subr.bf16.mxu0 %v5109
        %5237 = vmatpush1.bf16.msra.mxu0 %v5108
        %5238 = vmatprep.subr.bf16.mxu0 %v5111
        %5239 = vmatpush1.bf16.msra.mxu0 %v5110
        %5240 = vmatprep.mubr.bf16.mxu0 %v2925
        %5241 = vmatmul.mubr.bf16.gmra.mrb[0].mxu0 %v2924
        %v5242 = vpop.f32.mrb[0].mxu0
        %v5243 = vadd.f32 0.0, %v5242
        %v5244 = vpop.f32.mrb[0].mxu0
        %v5245 = vadd.f32 0.0, %v5244
        %v5246 = vpop.f32.mrb[0].mxu0
        %v5247 = vpop.f32.mrb[0].mxu0
        %5248 = vdwg.mxu0
        %5249 = vmatprep.subr.bf16.mxu0 %v5113
        %5250 = vmatpush1.bf16.msra.mxu0 %v5112
        %5251 = vmatprep.subr.bf16.mxu0 %v5115
        %5252 = vmatpush1.bf16.msra.mxu0 %v5114
        %5253 = vmatprep.subr.bf16.mxu0 %v5117
        %5254 = vmatpush1.bf16.msra.mxu0 %v5116
        %5255 = vmatprep.subr.bf16.mxu0 %v5119
        %5256 = vmatpush1.bf16.msra.mxu0 %v5118
        %5257 = vmatprep.subr.bf16.mxu0 %v5121
        %5258 = vmatpush1.bf16.msra.mxu0 %v5120
        %5259 = vmatprep.subr.bf16.mxu0 %v5123
        %5260 = vmatpush1.bf16.msra.mxu0 %v5122
        %5261 = vmatprep.subr.bf16.mxu0 %v5125
        %5262 = vmatpush1.bf16.msra.mxu0 %v5124
        %5263 = vmatprep.subr.bf16.mxu0 %v5127
        %5264 = vmatpush1.bf16.msra.mxu0 %v5126
        %5265 = vmatprep.subr.bf16.mxu0 %v5129
        %5266 = vmatpush1.bf16.msra.mxu0 %v5128
        %5267 = vmatprep.subr.bf16.mxu0 %v5131
        %5268 = vmatpush1.bf16.msra.mxu0 %v5130
        %5269 = vmatprep.subr.bf16.mxu0 %v5133
        %5270 = vmatpush1.bf16.msra.mxu0 %v5132
        %5271 = vmatprep.subr.bf16.mxu0 %v5135
        %5272 = vmatpush1.bf16.msra.mxu0 %v5134
        %5273 = vmatprep.subr.bf16.mxu0 %v5137
        %5274 = vmatpush1.bf16.msra.mxu0 %v5136
        %5275 = vmatprep.subr.bf16.mxu0 %v5139
        %5276 = vmatpush1.bf16.msra.mxu0 %v5138
        %5277 = vmatprep.subr.bf16.mxu0 %v5141
        %5278 = vmatpush1.bf16.msra.mxu0 %v5140
        %5279 = vmatprep.subr.bf16.mxu0 %v5143
        %5280 = vmatpush1.bf16.msra.mxu0 %v5142
        %5281 = vmatprep.mubr.bf16.mxu0 %v2927
        %5282 = vmatmul.mubr.bf16.gmra.mrb[0].mxu0 %v2926
        %v5283 = vpop.f32.mrb[0].mxu0
        %v5284 = vadd.f32 %v5243, %v5283
        %v5285 = vpop.f32.mrb[0].mxu0
        %v5286 = vadd.f32 %v5245, %v5285
        %v5287 = vpop.f32.mrb[0].mxu0
        %v5288 = vpop.f32.mrb[0].mxu0
        %5289 = vdwg.mxu0
        %v5290 = vadd.f32 %v4821, %v5284
        %v5291 = vadd.f32 %v4822, %v5286
        %v5292 = vld [vmem:[#allocation7] sm:$0x3]
        %v5294 = vlaneseq
        %v5295 = vshrl.u32 %v5294, 7
        %v5296 = vsub.s32 0, %v5295
        %v5297 = vrot.slane %v5292, %v5296
        %v5298 = vlaneseq
        %v5299 = vshrl.u32 %v5298, 7
        %v5300 = vsub.s32 1, %v5299
        %v5301 = vrot.slane %v5292, %v5300
        %v5304 = vadd.f32 %v5290, %v5297
        %v5305 = vadd.f32 %v5291, %v5301
        %v5306 = vmax.f32 %v5304, 0.0
        %v5307 = vmax.f32 %v5305, 0.0
        %v5308 = vpack.c.bf16 %v5306, %v5306
        %v5309 = vpack.c.bf16 %v5307, %v5307
        %v5310 = vld [vmem:[%s7] sm:$0xf]
        %v5311 = vld [vmem:[%s7 + $0x4] sm:$0xf]
        %v5312 = vld [vmem:[%s7 + $0x8] sm:$0x3]
        %v5316 = vunpack.c.l.b16 %v5310
        %v5317 = vunpack.c.l.b16 %v5311
        %v5318 = vunpack.c.l.b16 %v5312
        %v5319 = vpack.c.b16 %v5317, %v5316
        %v5320 = vpack.c.b16 %v5318, %v5318
        %vm5321 = vcmask 64512
        %v5323 = vsel %vm5321, %v5319, 0
        %v5326 = vsel %vm5321, %v5320, 0
        %vm5328 = vcmask 1043456
        %v5330 = vsel %vm5328, %v5308, 0
        %v5333 = vsel %vm5328, %v5309, 0
        %5335 = vmatprep.subr.bf16.mxu0 %v5333
        %5336 = vmatpush1.bf16.msra.mxu0 %v5330
        %5337 = vmatprep.subr.bf16.mxu0 0
        %5338 = vmatpush1.bf16.msra.mxu0 0
        %5339 = vmatprep.subr.bf16.mxu0 0
        %5340 = vmatpush1.bf16.msra.mxu0 0
        %5341 = vmatprep.subr.bf16.mxu0 0
        %5342 = vmatpush1.bf16.msra.mxu0 0
        %5343 = vmatprep.subr.bf16.mxu0 0
        %5344 = vmatpush1.bf16.msra.mxu0 0
        %5345 = vmatprep.subr.bf16.mxu0 0
        %5346 = vmatpush1.bf16.msra.mxu0 0
        %5347 = vmatprep.subr.bf16.mxu0 0
        %5348 = vmatpush1.bf16.msra.mxu0 0
        %5349 = vmatprep.subr.bf16.mxu0 0
        %5350 = vmatpush1.bf16.msra.mxu0 0
        %5351 = vmatprep.subr.bf16.mxu0 0
        %5352 = vmatpush1.bf16.msra.mxu0 0
        %5353 = vmatprep.subr.bf16.mxu0 0
        %5354 = vmatpush1.bf16.msra.mxu0 0
        %5355 = vmatprep.subr.bf16.mxu0 0
        %5356 = vmatpush1.bf16.msra.mxu0 0
        %5357 = vmatprep.subr.bf16.mxu0 0
        %5358 = vmatpush1.bf16.msra.mxu0 0
        %5359 = vmatprep.subr.bf16.mxu0 0
        %5360 = vmatpush1.bf16.msra.mxu0 0
        %5361 = vmatprep.subr.bf16.mxu0 0
        %5362 = vmatpush1.bf16.msra.mxu0 0
        %5363 = vmatprep.subr.bf16.mxu0 0
        %5364 = vmatpush1.bf16.msra.mxu0 0
        %5365 = vmatprep.subr.bf16.mxu0 0
        %5366 = vmatpush1.bf16.msra.mxu0 0
        %5367 = vmatprep.mubr.bf16.mxu0 0
        %5368 = vmatmul.mubr.bf16.gmra.mrb[0].mxu0 %v5323
        %v5369 = vpop.f32.mrb[0].mxu0
        %v5370 = vadd.f32 0.0, %v5369
        %v5371 = vpop.f32.mrb[0].mxu0
        %v5372 = vadd.f32 0.0, %v5371
        %v5373 = vpop.f32.mrb[0].mxu0
        %v5374 = vadd.f32 0.0, %v5373
        %v5375 = vpop.f32.mrb[0].mxu0
        %v5376 = vadd.f32 0.0, %v5375
        %5377 = vmatprep.mubr.bf16.mxu0 0
        %5378 = vmatmul.mubr.bf16.gmra.mrb[0].mxu0 %v5326
        %v5379 = vpop.f32.mrb[0].mxu0
        %v5380 = vadd.f32 0.0, %v5379
        %v5381 = vpop.f32.mrb[0].mxu0
        %v5382 = vadd.f32 0.0, %v5381
        %v5383 = vpop.f32.mrb[0].mxu0
        %v5384 = vpop.f32.mrb[0].mxu0
        %5385 = vdwg.mxu0
        %v5386 = vpack.c.bf16 %v5374, %v5370
        %v5387 = vpack.c.bf16 %v5376, %v5372
        %v5388 = vpack.c.bf16 %v5380, %v5380
        %v5389 = vpack.c.bf16 %v5382, %v5382
        %v5390 = vld [vmem:[#allocation9] sm:$0xf]
        %v5391 = vld [vmem:[#allocation9 + $0x4] sm:$0xf]
        %v5392 = vld [vmem:[#allocation9 + $0x8] sm:$0xf]
        %v5393 = vld [vmem:[#allocation9 + $0xc] sm:$0xf]
        %v5394 = vld [vmem:[#allocation9 + $0x10] sm:$0xf]
        %v5395 = vld [vmem:[#allocation9 + $0x14] sm:$0xf]
        %v5396 = vld [vmem:[#allocation9 + $0x18] sm:$0xf]
        %v5397 = vld [vmem:[#allocation9 + $0x1c] sm:$0xf]
        %v5398 = vld [vmem:[#allocation9 + $0x20] sm:$0xf]
        %v5399 = vld [vmem:[#allocation9 + $0x24] sm:$0xf]
        %v5400 = vld [vmem:[#allocation9 + $0x28] sm:$0xf]
        %v5401 = vld [vmem:[#allocation9 + $0x2c] sm:$0xf]
        %v5402 = vld [vmem:[#allocation9 + $0x30] sm:$0xf]
        %v5403 = vld [vmem:[#allocation9 + $0x34] sm:$0xf]
        %v5404 = vld [vmem:[#allocation9 + $0x38] sm:$0xf]
        %v5405 = vld [vmem:[#allocation9 + $0x3c] sm:$0xf]
        %v5406 = vld [vmem:[#allocation9 + $0x40] sm:$0xf]
        %v5407 = vld [vmem:[#allocation9 + $0x44] sm:$0xf]
        %v5408 = vld [vmem:[#allocation9 + $0x48] sm:$0xf]
        %v5409 = vld [vmem:[#allocation9 + $0x4c] sm:$0xf]
        %v5410 = vld [vmem:[#allocation9 + $0x50] sm:$0xf]
        %v5411 = vld [vmem:[#allocation9 + $0x54] sm:$0xf]
        %v5412 = vld [vmem:[#allocation9 + $0x58] sm:$0xf]
        %v5413 = vld [vmem:[#allocation9 + $0x5c] sm:$0xf]
        %v5414 = vld [vmem:[#allocation9 + $0x60] sm:$0xf]
        %v5415 = vld [vmem:[#allocation9 + $0x64] sm:$0xf]
        %v5416 = vld [vmem:[#allocation9 + $0x68] sm:$0xf]
        %v5417 = vld [vmem:[#allocation9 + $0x6c] sm:$0xf]
        %v5418 = vld [vmem:[#allocation9 + $0x70] sm:$0xf]
        %v5419 = vld [vmem:[#allocation9 + $0x74] sm:$0xf]
        %v5420 = vld [vmem:[#allocation9 + $0x78] sm:$0xf]
        %v5421 = vld [vmem:[#allocation9 + $0x7c] sm:$0xf]
        %s5422 = scalar_lea.vmem [#allocation9], 128
        %v5423 = vld [vmem:[%s5422] sm:$0xf]
        %v5424 = vld [vmem:[%s5422 + $0x4] sm:$0xf]
        %v5425 = vld [vmem:[%s5422 + $0x8] sm:$0xf]
        %v5426 = vld [vmem:[%s5422 + $0xc] sm:$0xf]
        %v5427 = vld [vmem:[%s5422 + $0x10] sm:$0xf]
        %v5428 = vld [vmem:[%s5422 + $0x14] sm:$0xf]
        %v5429 = vld [vmem:[%s5422 + $0x18] sm:$0xf]
        %v5430 = vld [vmem:[%s5422 + $0x1c] sm:$0xf]
        %v5431 = vld [vmem:[%s5422 + $0x20] sm:$0xf]
        %v5432 = vld [vmem:[%s5422 + $0x24] sm:$0xf]
        %v5433 = vld [vmem:[%s5422 + $0x28] sm:$0xf]
        %v5434 = vld [vmem:[%s5422 + $0x2c] sm:$0xf]
        %v5435 = vld [vmem:[%s5422 + $0x30] sm:$0xf]
        %v5436 = vld [vmem:[%s5422 + $0x34] sm:$0xf]
        %v5437 = vld [vmem:[%s5422 + $0x38] sm:$0xf]
        %v5438 = vld [vmem:[%s5422 + $0x3c] sm:$0xf]
        %v5439 = vld [vmem:[%s5422 + $0x40] sm:$0xf]
        %v5440 = vld [vmem:[%s5422 + $0x44] sm:$0xf]
        %v5441 = vld [vmem:[%s5422 + $0x48] sm:$0xf]
        %v5442 = vld [vmem:[%s5422 + $0x4c] sm:$0xf]
        %v5443 = vld [vmem:[%s5422 + $0x50] sm:$0xf]
        %v5444 = vld [vmem:[%s5422 + $0x54] sm:$0xf]
        %v5445 = vld [vmem:[%s5422 + $0x58] sm:$0xf]
        %v5446 = vld [vmem:[%s5422 + $0x5c] sm:$0xf]
        %v5447 = vld [vmem:[%s5422 + $0x60] sm:$0xf]
        %v5448 = vld [vmem:[%s5422 + $0x64] sm:$0xf]
        %v5449 = vld [vmem:[%s5422 + $0x68] sm:$0xf]
        %v5450 = vld [vmem:[%s5422 + $0x6c] sm:$0xf]
        %v5451 = vld [vmem:[%s5422 + $0x70] sm:$0xf]
        %v5452 = vld [vmem:[%s5422 + $0x74] sm:$0xf]
        %v5453 = vld [vmem:[%s5422 + $0x78] sm:$0xf]
        %v5454 = vld [vmem:[%s5422 + $0x7c] sm:$0xf]
        %v5457 = vrot.slane %v5386, 2
        %v5458 = vrot.slane %v5387, 2
        %v5493 = vunpack.c.l.b16 %v5423
        %v5494 = vunpack.c.l.b16 %v5424
        %v5495 = vunpack.c.l.b16 %v5425
        %v5496 = vunpack.c.l.b16 %v5426
        %v5497 = vunpack.c.l.b16 %v5427
        %v5498 = vunpack.c.l.b16 %v5428
        %v5499 = vunpack.c.l.b16 %v5429
        %v5500 = vunpack.c.l.b16 %v5430
        %v5501 = vunpack.c.l.b16 %v5431
        %v5502 = vunpack.c.l.b16 %v5432
        %v5503 = vunpack.c.l.b16 %v5433
        %v5504 = vunpack.c.l.b16 %v5434
        %v5505 = vunpack.c.l.b16 %v5435
        %v5506 = vunpack.c.l.b16 %v5436
        %v5507 = vunpack.c.l.b16 %v5437
        %v5508 = vunpack.c.l.b16 %v5438
        %v5509 = vunpack.c.l.b16 %v5439
        %v5510 = vunpack.c.l.b16 %v5440
        %v5511 = vunpack.c.l.b16 %v5441
        %v5512 = vunpack.c.l.b16 %v5442
        %v5513 = vunpack.c.l.b16 %v5443
        %v5514 = vunpack.c.l.b16 %v5444
        %v5515 = vunpack.c.l.b16 %v5445
        %v5516 = vunpack.c.l.b16 %v5446
        %v5517 = vunpack.c.l.b16 %v5447
        %v5518 = vunpack.c.l.b16 %v5448
        %v5519 = vunpack.c.l.b16 %v5449
        %v5520 = vunpack.c.l.b16 %v5450
        %v5521 = vunpack.c.l.b16 %v5451
        %v5522 = vunpack.c.l.b16 %v5452
        %v5523 = vunpack.c.l.b16 %v5453
        %v5524 = vunpack.c.l.b16 %v5454
        %v5525 = vpack.c.b16 %v5494, %v5493
        %v5526 = vpack.c.b16 %v5496, %v5495
        %v5527 = vpack.c.b16 %v5498, %v5497
        %v5528 = vpack.c.b16 %v5500, %v5499
        %v5529 = vpack.c.b16 %v5502, %v5501
        %v5530 = vpack.c.b16 %v5504, %v5503
        %v5531 = vpack.c.b16 %v5506, %v5505
        %v5532 = vpack.c.b16 %v5508, %v5507
        %v5533 = vpack.c.b16 %v5510, %v5509
        %v5534 = vpack.c.b16 %v5512, %v5511
        %v5535 = vpack.c.b16 %v5514, %v5513
        %v5536 = vpack.c.b16 %v5516, %v5515
        %v5537 = vpack.c.b16 %v5518, %v5517
        %v5538 = vpack.c.b16 %v5520, %v5519
        %v5539 = vpack.c.b16 %v5522, %v5521
        %v5540 = vpack.c.b16 %v5524, %v5523
        %5557 = vmatprep.subr.bf16.mxu0 0
        %5558 = vmatpush1.bf16.msra.mxu0 %v5525
        %5559 = vmatprep.subr.bf16.mxu0 0
        %5560 = vmatpush1.bf16.msra.mxu0 %v5526
        %5561 = vmatprep.subr.bf16.mxu0 0
        %5562 = vmatpush1.bf16.msra.mxu0 %v5527
        %5563 = vmatprep.subr.bf16.mxu0 0
        %5564 = vmatpush1.bf16.msra.mxu0 %v5528
        %5565 = vmatprep.subr.bf16.mxu0 0
        %5566 = vmatpush1.bf16.msra.mxu0 %v5529
        %5567 = vmatprep.subr.bf16.mxu0 0
        %5568 = vmatpush1.bf16.msra.mxu0 %v5530
        %5569 = vmatprep.subr.bf16.mxu0 0
        %5570 = vmatpush1.bf16.msra.mxu0 %v5531
        %5571 = vmatprep.subr.bf16.mxu0 0
        %5572 = vmatpush1.bf16.msra.mxu0 %v5532
        %5573 = vmatprep.subr.bf16.mxu0 0
        %5574 = vmatpush1.bf16.msra.mxu0 %v5533
        %5575 = vmatprep.subr.bf16.mxu0 0
        %5576 = vmatpush1.bf16.msra.mxu0 %v5534
        %5577 = vmatprep.subr.bf16.mxu0 0
        %5578 = vmatpush1.bf16.msra.mxu0 %v5535
        %5579 = vmatprep.subr.bf16.mxu0 0
        %5580 = vmatpush1.bf16.msra.mxu0 %v5536
        %5581 = vmatprep.subr.bf16.mxu0 0
        %5582 = vmatpush1.bf16.msra.mxu0 %v5537
        %5583 = vmatprep.subr.bf16.mxu0 0
        %5584 = vmatpush1.bf16.msra.mxu0 %v5538
        %5585 = vmatprep.subr.bf16.mxu0 0
        %5586 = vmatpush1.bf16.msra.mxu0 %v5539
        %5587 = vmatprep.subr.bf16.mxu0 0
        %5588 = vmatpush1.bf16.msra.mxu0 %v5540
        %5589 = vmatprep.mubr.bf16.mxu0 %v5458
        %5590 = vmatmul.mubr.bf16.gmra.mrb[0].mxu0 %v5457
        %v5591 = vpop.f32.mrb[0].mxu0
        %v5592 = vadd.f32 0.0, %v5591
        %v5593 = vpop.f32.mrb[0].mxu0
        %v5594 = vpop.f32.mrb[0].mxu0
        %v5595 = vpop.f32.mrb[0].mxu0
        %5596 = vdwg.mxu0
        %v5629 = vunpack.c.l.b16 %v5390
        %v5630 = vunpack.c.l.b16 %v5391
        %v5631 = vunpack.c.l.b16 %v5392
        %v5632 = vunpack.c.l.b16 %v5393
        %v5633 = vunpack.c.l.b16 %v5394
        %v5634 = vunpack.c.l.b16 %v5395
        %v5635 = vunpack.c.l.b16 %v5396
        %v5636 = vunpack.c.l.b16 %v5397
        %v5637 = vunpack.c.l.b16 %v5398
        %v5638 = vunpack.c.l.b16 %v5399
        %v5639 = vunpack.c.l.b16 %v5400
        %v5640 = vunpack.c.l.b16 %v5401
        %v5641 = vunpack.c.l.b16 %v5402
        %v5642 = vunpack.c.l.b16 %v5403
        %v5643 = vunpack.c.l.b16 %v5404
        %v5644 = vunpack.c.l.b16 %v5405
        %v5645 = vunpack.c.l.b16 %v5406
        %v5646 = vunpack.c.l.b16 %v5407
        %v5647 = vunpack.c.l.b16 %v5408
        %v5648 = vunpack.c.l.b16 %v5409
        %v5649 = vunpack.c.l.b16 %v5410
        %v5650 = vunpack.c.l.b16 %v5411
        %v5651 = vunpack.c.l.b16 %v5412
        %v5652 = vunpack.c.l.b16 %v5413
        %v5653 = vunpack.c.l.b16 %v5414
        %v5654 = vunpack.c.l.b16 %v5415
        %v5655 = vunpack.c.l.b16 %v5416
        %v5656 = vunpack.c.l.b16 %v5417
        %v5657 = vunpack.c.l.b16 %v5418
        %v5658 = vunpack.c.l.b16 %v5419
        %v5659 = vunpack.c.l.b16 %v5420
        %v5660 = vunpack.c.l.b16 %v5421
        %v5661 = vpack.c.b16 %v5630, %v5629
        %v5662 = vpack.c.b16 %v5632, %v5631
        %v5663 = vpack.c.b16 %v5634, %v5633
        %v5664 = vpack.c.b16 %v5636, %v5635
        %v5665 = vpack.c.b16 %v5638, %v5637
        %v5666 = vpack.c.b16 %v5640, %v5639
        %v5667 = vpack.c.b16 %v5642, %v5641
        %v5668 = vpack.c.b16 %v5644, %v5643
        %v5669 = vpack.c.b16 %v5646, %v5645
        %v5670 = vpack.c.b16 %v5648, %v5647
        %v5671 = vpack.c.b16 %v5650, %v5649
        %v5672 = vpack.c.b16 %v5652, %v5651
        %v5673 = vpack.c.b16 %v5654, %v5653
        %v5674 = vpack.c.b16 %v5656, %v5655
        %v5675 = vpack.c.b16 %v5658, %v5657
        %v5676 = vpack.c.b16 %v5660, %v5659
        %5693 = vmatprep.subr.bf16.mxu0 0
        %5694 = vmatpush1.bf16.msra.mxu0 %v5661
        %5695 = vmatprep.subr.bf16.mxu0 0
        %5696 = vmatpush1.bf16.msra.mxu0 %v5662
        %5697 = vmatprep.subr.bf16.mxu0 0
        %5698 = vmatpush1.bf16.msra.mxu0 %v5663
        %5699 = vmatprep.subr.bf16.mxu0 0
        %5700 = vmatpush1.bf16.msra.mxu0 %v5664
        %5701 = vmatprep.subr.bf16.mxu0 0
        %5702 = vmatpush1.bf16.msra.mxu0 %v5665
        %5703 = vmatprep.subr.bf16.mxu0 0
        %5704 = vmatpush1.bf16.msra.mxu0 %v5666
        %5705 = vmatprep.subr.bf16.mxu0 0
        %5706 = vmatpush1.bf16.msra.mxu0 %v5667
        %5707 = vmatprep.subr.bf16.mxu0 0
        %5708 = vmatpush1.bf16.msra.mxu0 %v5668
        %5709 = vmatprep.subr.bf16.mxu0 0
        %5710 = vmatpush1.bf16.msra.mxu0 %v5669
        %5711 = vmatprep.subr.bf16.mxu0 0
        %5712 = vmatpush1.bf16.msra.mxu0 %v5670
        %5713 = vmatprep.subr.bf16.mxu0 0
        %5714 = vmatpush1.bf16.msra.mxu0 %v5671
        %5715 = vmatprep.subr.bf16.mxu0 0
        %5716 = vmatpush1.bf16.msra.mxu0 %v5672
        %5717 = vmatprep.subr.bf16.mxu0 0
        %5718 = vmatpush1.bf16.msra.mxu0 %v5673
        %5719 = vmatprep.subr.bf16.mxu0 0
        %5720 = vmatpush1.bf16.msra.mxu0 %v5674
        %5721 = vmatprep.subr.bf16.mxu0 0
        %5722 = vmatpush1.bf16.msra.mxu0 %v5675
        %5723 = vmatprep.subr.bf16.mxu0 0
        %5724 = vmatpush1.bf16.msra.mxu0 %v5676
        %5725 = vmatprep.mubr.bf16.mxu0 %v5387
        %5726 = vmatmul.mubr.bf16.gmra.mrb[0].mxu0 %v5386
        %v5727 = vpop.f32.mrb[0].mxu0
        %v5728 = vadd.f32 %v5592, %v5727
        %v5729 = vpop.f32.mrb[0].mxu0
        %v5730 = vpop.f32.mrb[0].mxu0
        %v5731 = vpop.f32.mrb[0].mxu0
        %5732 = vdwg.mxu0
        %s5733 = scalar_lea.vmem [#allocation9], 256
        %v5734 = vld [vmem:[%s5733] sm:$0xf]
        %v5735 = vld [vmem:[%s5733 + $0x4] sm:$0xf]
        %v5736 = vld [vmem:[%s5733 + $0x8] sm:$0xf]
        %v5737 = vld [vmem:[%s5733 + $0xc] sm:$0xf]
        %v5738 = vld [vmem:[%s5733 + $0x10] sm:$0xf]
        %v5739 = vld [vmem:[%s5733 + $0x14] sm:$0xf]
        %v5740 = vld [vmem:[%s5733 + $0x18] sm:$0xf]
        %v5741 = vld [vmem:[%s5733 + $0x1c] sm:$0xf]
        %v5742 = vld [vmem:[%s5733 + $0x20] sm:$0xf]
        %v5743 = vld [vmem:[%s5733 + $0x24] sm:$0xf]
        %v5744 = vld [vmem:[%s5733 + $0x28] sm:$0xf]
        %v5745 = vld [vmem:[%s5733 + $0x2c] sm:$0xf]
        %v5746 = vld [vmem:[%s5733 + $0x30] sm:$0xf]
        %v5747 = vld [vmem:[%s5733 + $0x34] sm:$0xf]
        %v5748 = vld [vmem:[%s5733 + $0x38] sm:$0xf]
        %v5749 = vld [vmem:[%s5733 + $0x3c] sm:$0xf]
        %v5750 = vld [vmem:[%s5733 + $0x40] sm:$0xf]
        %v5751 = vld [vmem:[%s5733 + $0x44] sm:$0xf]
        %v5752 = vld [vmem:[%s5733 + $0x48] sm:$0xf]
        %v5753 = vld [vmem:[%s5733 + $0x4c] sm:$0xf]
        %v5754 = vld [vmem:[%s5733 + $0x50] sm:$0xf]
        %v5755 = vld [vmem:[%s5733 + $0x54] sm:$0xf]
        %v5756 = vld [vmem:[%s5733 + $0x58] sm:$0xf]
        %v5757 = vld [vmem:[%s5733 + $0x5c] sm:$0xf]
        %v5758 = vld [vmem:[%s5733 + $0x60] sm:$0xf]
        %v5759 = vld [vmem:[%s5733 + $0x64] sm:$0xf]
        %v5760 = vld [vmem:[%s5733 + $0x68] sm:$0xf]
        %v5761 = vld [vmem:[%s5733 + $0x6c] sm:$0xf]
        %v5762 = vld [vmem:[%s5733 + $0x70] sm:$0xf]
        %v5763 = vld [vmem:[%s5733 + $0x74] sm:$0xf]
        %v5764 = vld [vmem:[%s5733 + $0x78] sm:$0xf]
        %v5765 = vld [vmem:[%s5733 + $0x7c] sm:$0xf]
        %v5766 = vrot.slane %v5386, 4
        %v5767 = vrot.slane %v5387, 4
        %v5802 = vunpack.c.l.b16 %v5734
        %v5803 = vunpack.c.l.b16 %v5735
        %v5804 = vunpack.c.l.b16 %v5736
        %v5805 = vunpack.c.l.b16 %v5737
        %v5806 = vunpack.c.l.b16 %v5738
        %v5807 = vunpack.c.l.b16 %v5739
        %v5808 = vunpack.c.l.b16 %v5740
        %v5809 = vunpack.c.l.b16 %v5741
        %v5810 = vunpack.c.l.b16 %v5742
        %v5811 = vunpack.c.l.b16 %v5743
        %v5812 = vunpack.c.l.b16 %v5744
        %v5813 = vunpack.c.l.b16 %v5745
        %v5814 = vunpack.c.l.b16 %v5746
        %v5815 = vunpack.c.l.b16 %v5747
        %v5816 = vunpack.c.l.b16 %v5748
        %v5817 = vunpack.c.l.b16 %v5749
        %v5818 = vunpack.c.l.b16 %v5750
        %v5819 = vunpack.c.l.b16 %v5751
        %v5820 = vunpack.c.l.b16 %v5752
        %v5821 = vunpack.c.l.b16 %v5753
        %v5822 = vunpack.c.l.b16 %v5754
        %v5823 = vunpack.c.l.b16 %v5755
        %v5824 = vunpack.c.l.b16 %v5756
        %v5825 = vunpack.c.l.b16 %v5757
        %v5826 = vunpack.c.l.b16 %v5758
        %v5827 = vunpack.c.l.b16 %v5759
        %v5828 = vunpack.c.l.b16 %v5760
        %v5829 = vunpack.c.l.b16 %v5761
        %v5830 = vunpack.c.l.b16 %v5762
        %v5831 = vunpack.c.l.b16 %v5763
        %v5832 = vunpack.c.l.b16 %v5764
        %v5833 = vunpack.c.l.b16 %v5765
        %v5834 = vpack.c.b16 %v5803, %v5802
        %v5835 = vpack.c.b16 %v5805, %v5804
        %v5836 = vpack.c.b16 %v5807, %v5806
        %v5837 = vpack.c.b16 %v5809, %v5808
        %v5838 = vpack.c.b16 %v5811, %v5810
        %v5839 = vpack.c.b16 %v5813, %v5812
        %v5840 = vpack.c.b16 %v5815, %v5814
        %v5841 = vpack.c.b16 %v5817, %v5816
        %v5842 = vpack.c.b16 %v5819, %v5818
        %v5843 = vpack.c.b16 %v5821, %v5820
        %v5844 = vpack.c.b16 %v5823, %v5822
        %v5845 = vpack.c.b16 %v5825, %v5824
        %v5846 = vpack.c.b16 %v5827, %v5826
        %v5847 = vpack.c.b16 %v5829, %v5828
        %v5848 = vpack.c.b16 %v5831, %v5830
        %v5849 = vpack.c.b16 %v5833, %v5832
        %5866 = vmatprep.subr.bf16.mxu0 0
        %5867 = vmatpush1.bf16.msra.mxu0 %v5834
        %5868 = vmatprep.subr.bf16.mxu0 0
        %5869 = vmatpush1.bf16.msra.mxu0 %v5835
        %5870 = vmatprep.subr.bf16.mxu0 0
        %5871 = vmatpush1.bf16.msra.mxu0 %v5836
        %5872 = vmatprep.subr.bf16.mxu0 0
        %5873 = vmatpush1.bf16.msra.mxu0 %v5837
        %5874 = vmatprep.subr.bf16.mxu0 0
        %5875 = vmatpush1.bf16.msra.mxu0 %v5838
        %5876 = vmatprep.subr.bf16.mxu0 0
        %5877 = vmatpush1.bf16.msra.mxu0 %v5839
        %5878 = vmatprep.subr.bf16.mxu0 0
        %5879 = vmatpush1.bf16.msra.mxu0 %v5840
        %5880 = vmatprep.subr.bf16.mxu0 0
        %5881 = vmatpush1.bf16.msra.mxu0 %v5841
        %5882 = vmatprep.subr.bf16.mxu0 0
        %5883 = vmatpush1.bf16.msra.mxu0 %v5842
        %5884 = vmatprep.subr.bf16.mxu0 0
        %5885 = vmatpush1.bf16.msra.mxu0 %v5843
        %5886 = vmatprep.subr.bf16.mxu0 0
        %5887 = vmatpush1.bf16.msra.mxu0 %v5844
        %5888 = vmatprep.subr.bf16.mxu0 0
        %5889 = vmatpush1.bf16.msra.mxu0 %v5845
        %5890 = vmatprep.subr.bf16.mxu0 0
        %5891 = vmatpush1.bf16.msra.mxu0 %v5846
        %5892 = vmatprep.subr.bf16.mxu0 0
        %5893 = vmatpush1.bf16.msra.mxu0 %v5847
        %5894 = vmatprep.subr.bf16.mxu0 0
        %5895 = vmatpush1.bf16.msra.mxu0 %v5848
        %5896 = vmatprep.subr.bf16.mxu0 0
        %5897 = vmatpush1.bf16.msra.mxu0 %v5849
        %5898 = vmatprep.mubr.bf16.mxu0 %v5767
        %5899 = vmatmul.mubr.bf16.gmra.mrb[0].mxu0 %v5766
        %v5900 = vpop.f32.mrb[0].mxu0
        %v5901 = vadd.f32 0.0, %v5900
        %v5902 = vpop.f32.mrb[0].mxu0
        %v5903 = vpop.f32.mrb[0].mxu0
        %v5904 = vpop.f32.mrb[0].mxu0
        %5905 = vdwg.mxu0
        %v5906 = vadd.f32 %v5728, %v5901
        %s5907 = scalar_lea.vmem [#allocation9], 384
        %v5908 = vld [vmem:[%s5907] sm:$0xf]
        %v5909 = vld [vmem:[%s5907 + $0x4] sm:$0xf]
        %v5910 = vld [vmem:[%s5907 + $0x8] sm:$0xf]
        %v5911 = vld [vmem:[%s5907 + $0xc] sm:$0xf]
        %v5912 = vld [vmem:[%s5907 + $0x10] sm:$0xf]
        %v5913 = vld [vmem:[%s5907 + $0x14] sm:$0xf]
        %v5914 = vld [vmem:[%s5907 + $0x18] sm:$0xf]
        %v5915 = vld [vmem:[%s5907 + $0x1c] sm:$0xf]
        %v5916 = vld [vmem:[%s5907 + $0x20] sm:$0xf]
        %v5917 = vld [vmem:[%s5907 + $0x24] sm:$0xf]
        %v5918 = vld [vmem:[%s5907 + $0x28] sm:$0xf]
        %v5919 = vld [vmem:[%s5907 + $0x2c] sm:$0xf]
        %v5920 = vld [vmem:[%s5907 + $0x30] sm:$0xf]
        %v5921 = vld [vmem:[%s5907 + $0x34] sm:$0xf]
        %v5922 = vld [vmem:[%s5907 + $0x38] sm:$0xf]
        %v5923 = vld [vmem:[%s5907 + $0x3c] sm:$0xf]
        %v5924 = vld [vmem:[%s5907 + $0x40] sm:$0xf]
        %v5925 = vld [vmem:[%s5907 + $0x44] sm:$0xf]
        %v5926 = vld [vmem:[%s5907 + $0x48] sm:$0xf]
        %v5927 = vld [vmem:[%s5907 + $0x4c] sm:$0xf]
        %v5928 = vld [vmem:[%s5907 + $0x50] sm:$0xf]
        %v5929 = vld [vmem:[%s5907 + $0x54] sm:$0xf]
        %v5930 = vld [vmem:[%s5907 + $0x58] sm:$0xf]
        %v5931 = vld [vmem:[%s5907 + $0x5c] sm:$0xf]
        %v5932 = vld [vmem:[%s5907 + $0x60] sm:$0xf]
        %v5933 = vld [vmem:[%s5907 + $0x64] sm:$0xf]
        %v5934 = vld [vmem:[%s5907 + $0x68] sm:$0xf]
        %v5935 = vld [vmem:[%s5907 + $0x6c] sm:$0xf]
        %v5936 = vld [vmem:[%s5907 + $0x70] sm:$0xf]
        %v5937 = vld [vmem:[%s5907 + $0x74] sm:$0xf]
        %v5938 = vld [vmem:[%s5907 + $0x78] sm:$0xf]
        %v5939 = vld [vmem:[%s5907 + $0x7c] sm:$0xf]
        %v5940 = vrot.slane %v5386, 6
        %v5941 = vrot.slane %v5387, 6
        %v5976 = vunpack.c.l.b16 %v5908
        %v5977 = vunpack.c.l.b16 %v5909
        %v5978 = vunpack.c.l.b16 %v5910
        %v5979 = vunpack.c.l.b16 %v5911
        %v5980 = vunpack.c.l.b16 %v5912
        %v5981 = vunpack.c.l.b16 %v5913
        %v5982 = vunpack.c.l.b16 %v5914
        %v5983 = vunpack.c.l.b16 %v5915
        %v5984 = vunpack.c.l.b16 %v5916
        %v5985 = vunpack.c.l.b16 %v5917
        %v5986 = vunpack.c.l.b16 %v5918
        %v5987 = vunpack.c.l.b16 %v5919
        %v5988 = vunpack.c.l.b16 %v5920
        %v5989 = vunpack.c.l.b16 %v5921
        %v5990 = vunpack.c.l.b16 %v5922
        %v5991 = vunpack.c.l.b16 %v5923
        %v5992 = vunpack.c.l.b16 %v5924
        %v5993 = vunpack.c.l.b16 %v5925
        %v5994 = vunpack.c.l.b16 %v5926
        %v5995 = vunpack.c.l.b16 %v5927
        %v5996 = vunpack.c.l.b16 %v5928
        %v5997 = vunpack.c.l.b16 %v5929
        %v5998 = vunpack.c.l.b16 %v5930
        %v5999 = vunpack.c.l.b16 %v5931
        %v6000 = vunpack.c.l.b16 %v5932
        %v6001 = vunpack.c.l.b16 %v5933
        %v6002 = vunpack.c.l.b16 %v5934
        %v6003 = vunpack.c.l.b16 %v5935
        %v6004 = vunpack.c.l.b16 %v5936
        %v6005 = vunpack.c.l.b16 %v5937
        %v6006 = vunpack.c.l.b16 %v5938
        %v6007 = vunpack.c.l.b16 %v5939
        %v6008 = vpack.c.b16 %v5977, %v5976
        %v6009 = vpack.c.b16 %v5979, %v5978
        %v6010 = vpack.c.b16 %v5981, %v5980
        %v6011 = vpack.c.b16 %v5983, %v5982
        %v6012 = vpack.c.b16 %v5985, %v5984
        %v6013 = vpack.c.b16 %v5987, %v5986
        %v6014 = vpack.c.b16 %v5989, %v5988
        %v6015 = vpack.c.b16 %v5991, %v5990
        %v6016 = vpack.c.b16 %v5993, %v5992
        %v6017 = vpack.c.b16 %v5995, %v5994
        %v6018 = vpack.c.b16 %v5997, %v5996
        %v6019 = vpack.c.b16 %v5999, %v5998
        %v6020 = vpack.c.b16 %v6001, %v6000
        %v6021 = vpack.c.b16 %v6003, %v6002
        %v6022 = vpack.c.b16 %v6005, %v6004
        %v6023 = vpack.c.b16 %v6007, %v6006
        %6040 = vmatprep.subr.bf16.mxu0 0
        %6041 = vmatpush1.bf16.msra.mxu0 %v6008
        %6042 = vmatprep.subr.bf16.mxu0 0
        %6043 = vmatpush1.bf16.msra.mxu0 %v6009
        %6044 = vmatprep.subr.bf16.mxu0 0
        %6045 = vmatpush1.bf16.msra.mxu0 %v6010
        %6046 = vmatprep.subr.bf16.mxu0 0
        %6047 = vmatpush1.bf16.msra.mxu0 %v6011
        %6048 = vmatprep.subr.bf16.mxu0 0
        %6049 = vmatpush1.bf16.msra.mxu0 %v6012
        %6050 = vmatprep.subr.bf16.mxu0 0
        %6051 = vmatpush1.bf16.msra.mxu0 %v6013
        %6052 = vmatprep.subr.bf16.mxu0 0
        %6053 = vmatpush1.bf16.msra.mxu0 %v6014
        %6054 = vmatprep.subr.bf16.mxu0 0
        %6055 = vmatpush1.bf16.msra.mxu0 %v6015
        %6056 = vmatprep.subr.bf16.mxu0 0
        %6057 = vmatpush1.bf16.msra.mxu0 %v6016
        %6058 = vmatprep.subr.bf16.mxu0 0
        %6059 = vmatpush1.bf16.msra.mxu0 %v6017
        %6060 = vmatprep.subr.bf16.mxu0 0
        %6061 = vmatpush1.bf16.msra.mxu0 %v6018
        %6062 = vmatprep.subr.bf16.mxu0 0
        %6063 = vmatpush1.bf16.msra.mxu0 %v6019
        %6064 = vmatprep.subr.bf16.mxu0 0
        %6065 = vmatpush1.bf16.msra.mxu0 %v6020
        %6066 = vmatprep.subr.bf16.mxu0 0
        %6067 = vmatpush1.bf16.msra.mxu0 %v6021
        %6068 = vmatprep.subr.bf16.mxu0 0
        %6069 = vmatpush1.bf16.msra.mxu0 %v6022
        %6070 = vmatprep.subr.bf16.mxu0 0
        %6071 = vmatpush1.bf16.msra.mxu0 %v6023
        %6072 = vmatprep.mubr.bf16.mxu0 %v5941
        %6073 = vmatmul.mubr.bf16.gmra.mrb[0].mxu0 %v5940
        %v6074 = vpop.f32.mrb[0].mxu0
        %v6075 = vadd.f32 0.0, %v6074
        %v6076 = vpop.f32.mrb[0].mxu0
        %v6077 = vpop.f32.mrb[0].mxu0
        %v6078 = vpop.f32.mrb[0].mxu0
        %6079 = vdwg.mxu0
        %v6080 = vadd.f32 %v5906, %v6075
        %s6081 = scalar_lea.vmem [#allocation9], 512
        %v6082 = vld [vmem:[%s6081] sm:$0xf]
        %v6083 = vld [vmem:[%s6081 + $0x4] sm:$0xf]
        %v6084 = vld [vmem:[%s6081 + $0x8] sm:$0xf]
        %v6085 = vld [vmem:[%s6081 + $0xc] sm:$0xf]
        %v6086 = vld [vmem:[%s6081 + $0x10] sm:$0xf]
        %v6087 = vld [vmem:[%s6081 + $0x14] sm:$0xf]
        %v6088 = vld [vmem:[%s6081 + $0x18] sm:$0xf]
        %v6089 = vld [vmem:[%s6081 + $0x1c] sm:$0xf]
        %v6090 = vld [vmem:[%s6081 + $0x20] sm:$0xf]
        %v6091 = vld [vmem:[%s6081 + $0x24] sm:$0xf]
        %v6092 = vld [vmem:[%s6081 + $0x28] sm:$0xf]
        %v6093 = vld [vmem:[%s6081 + $0x2c] sm:$0xf]
        %v6094 = vld [vmem:[%s6081 + $0x30] sm:$0xf]
        %v6095 = vld [vmem:[%s6081 + $0x34] sm:$0xf]
        %v6096 = vld [vmem:[%s6081 + $0x38] sm:$0xf]
        %v6097 = vld [vmem:[%s6081 + $0x3c] sm:$0xf]
        %v6098 = vld [vmem:[%s6081 + $0x40] sm:$0xf]
        %v6099 = vld [vmem:[%s6081 + $0x44] sm:$0xf]
        %v6100 = vld [vmem:[%s6081 + $0x48] sm:$0xf]
        %v6101 = vld [vmem:[%s6081 + $0x4c] sm:$0xf]
        %v6102 = vld [vmem:[%s6081 + $0x50] sm:$0xf]
        %v6103 = vld [vmem:[%s6081 + $0x54] sm:$0xf]
        %v6104 = vld [vmem:[%s6081 + $0x58] sm:$0xf]
        %v6105 = vld [vmem:[%s6081 + $0x5c] sm:$0xf]
        %v6106 = vld [vmem:[%s6081 + $0x60] sm:$0xf]
        %v6107 = vld [vmem:[%s6081 + $0x64] sm:$0xf]
        %v6108 = vld [vmem:[%s6081 + $0x68] sm:$0xf]
        %v6109 = vld [vmem:[%s6081 + $0x6c] sm:$0xf]
        %v6110 = vld [vmem:[%s6081 + $0x70] sm:$0xf]
        %v6111 = vld [vmem:[%s6081 + $0x74] sm:$0xf]
        %v6112 = vld [vmem:[%s6081 + $0x78] sm:$0xf]
        %v6113 = vld [vmem:[%s6081 + $0x7c] sm:$0xf]
        %v6146 = vunpack.c.l.b16 %v6082
        %v6147 = vunpack.c.l.b16 %v6083
        %v6148 = vunpack.c.l.b16 %v6084
        %v6149 = vunpack.c.l.b16 %v6085
        %v6150 = vunpack.c.l.b16 %v6086
        %v6151 = vunpack.c.l.b16 %v6087
        %v6152 = vunpack.c.l.b16 %v6088
        %v6153 = vunpack.c.l.b16 %v6089
        %v6154 = vunpack.c.l.b16 %v6090
        %v6155 = vunpack.c.l.b16 %v6091
        %v6156 = vunpack.c.l.b16 %v6092
        %v6157 = vunpack.c.l.b16 %v6093
        %v6158 = vunpack.c.l.b16 %v6094
        %v6159 = vunpack.c.l.b16 %v6095
        %v6160 = vunpack.c.l.b16 %v6096
        %v6161 = vunpack.c.l.b16 %v6097
        %v6162 = vunpack.c.l.b16 %v6098
        %v6163 = vunpack.c.l.b16 %v6099
        %v6164 = vunpack.c.l.b16 %v6100
        %v6165 = vunpack.c.l.b16 %v6101
        %v6166 = vunpack.c.l.b16 %v6102
        %v6167 = vunpack.c.l.b16 %v6103
        %v6168 = vunpack.c.l.b16 %v6104
        %v6169 = vunpack.c.l.b16 %v6105
        %v6170 = vunpack.c.l.b16 %v6106
        %v6171 = vunpack.c.l.b16 %v6107
        %v6172 = vunpack.c.l.b16 %v6108
        %v6173 = vunpack.c.l.b16 %v6109
        %v6174 = vunpack.c.l.b16 %v6110
        %v6175 = vunpack.c.l.b16 %v6111
        %v6176 = vunpack.c.l.b16 %v6112
        %v6177 = vunpack.c.l.b16 %v6113
        %v6178 = vpack.c.b16 %v6147, %v6146
        %v6179 = vpack.c.b16 %v6149, %v6148
        %v6180 = vpack.c.b16 %v6151, %v6150
        %v6181 = vpack.c.b16 %v6153, %v6152
        %v6182 = vpack.c.b16 %v6155, %v6154
        %v6183 = vpack.c.b16 %v6157, %v6156
        %v6184 = vpack.c.b16 %v6159, %v6158
        %v6185 = vpack.c.b16 %v6161, %v6160
        %v6186 = vpack.c.b16 %v6163, %v6162
        %v6187 = vpack.c.b16 %v6165, %v6164
        %v6188 = vpack.c.b16 %v6167, %v6166
        %v6189 = vpack.c.b16 %v6169, %v6168
        %v6190 = vpack.c.b16 %v6171, %v6170
        %v6191 = vpack.c.b16 %v6173, %v6172
        %v6192 = vpack.c.b16 %v6175, %v6174
        %v6193 = vpack.c.b16 %v6177, %v6176
        %6210 = vmatprep.subr.bf16.mxu0 0
        %6211 = vmatpush1.bf16.msra.mxu0 %v6178
        %6212 = vmatprep.subr.bf16.mxu0 0
        %6213 = vmatpush1.bf16.msra.mxu0 %v6179
        %6214 = vmatprep.subr.bf16.mxu0 0
        %6215 = vmatpush1.bf16.msra.mxu0 %v6180
        %6216 = vmatprep.subr.bf16.mxu0 0
        %6217 = vmatpush1.bf16.msra.mxu0 %v6181
        %6218 = vmatprep.subr.bf16.mxu0 0
        %6219 = vmatpush1.bf16.msra.mxu0 %v6182
        %6220 = vmatprep.subr.bf16.mxu0 0
        %6221 = vmatpush1.bf16.msra.mxu0 %v6183
        %6222 = vmatprep.subr.bf16.mxu0 0
        %6223 = vmatpush1.bf16.msra.mxu0 %v6184
        %6224 = vmatprep.subr.bf16.mxu0 0
        %6225 = vmatpush1.bf16.msra.mxu0 %v6185
        %6226 = vmatprep.subr.bf16.mxu0 0
        %6227 = vmatpush1.bf16.msra.mxu0 %v6186
        %6228 = vmatprep.subr.bf16.mxu0 0
        %6229 = vmatpush1.bf16.msra.mxu0 %v6187
        %6230 = vmatprep.subr.bf16.mxu0 0
        %6231 = vmatpush1.bf16.msra.mxu0 %v6188
        %6232 = vmatprep.subr.bf16.mxu0 0
        %6233 = vmatpush1.bf16.msra.mxu0 %v6189
        %6234 = vmatprep.subr.bf16.mxu0 0
        %6235 = vmatpush1.bf16.msra.mxu0 %v6190
        %6236 = vmatprep.subr.bf16.mxu0 0
        %6237 = vmatpush1.bf16.msra.mxu0 %v6191
        %6238 = vmatprep.subr.bf16.mxu0 0
        %6239 = vmatpush1.bf16.msra.mxu0 %v6192
        %6240 = vmatprep.subr.bf16.mxu0 0
        %6241 = vmatpush1.bf16.msra.mxu0 %v6193
        %6242 = vmatprep.mubr.bf16.mxu0 %v5389
        %6243 = vmatmul.mubr.bf16.gmra.mrb[0].mxu0 %v5388
        %v6244 = vpop.f32.mrb[0].mxu0
        %v6245 = vadd.f32 0.0, %v6244
        %v6246 = vpop.f32.mrb[0].mxu0
        %v6247 = vpop.f32.mrb[0].mxu0
        %v6248 = vpop.f32.mrb[0].mxu0
        %6249 = vdwg.mxu0
        %v6250 = vadd.f32 %v6080, %v6245
        %v6251 = vld [vmem:[#allocation10] sm:$0x1]
        %v6253 = vlaneseq
        %v6254 = vshrl.u32 %v6253, 7
        %v6255 = vsub.s32 0, %v6254
        %v6256 = vrot.slane %v6251, %v6255
        %v6258 = vadd.f32 %v6250, %v6256
        %v6259 = vmax.f32 %v6258, 0.0
        %v6260 = vpack.c.bf16 %v6259, %v6259
        %v6261 = vld [vmem:[%s10] sm:$0xf]
        %v6262 = vld [vmem:[%s10 + $0x4] sm:$0x1]
        %v6265 = vunpack.c.l.b16 %v6261
        %v6266 = vunpack.c.l.b16 %v6262
        %v6267 = vpack.c.b16 %v6266, %v6265
        %vm6268 = vcmask 31744
        %v6270 = vsel %vm6268, %v6267, 0
        %vm6272 = vcmask 1041408
        %v6274 = vsel %vm6272, %v6260, 0
        %6276 = vmatprep.subr.bf16.mxu0 0
        %6277 = vmatpush1.bf16.msra.mxu0 %v6274
        %6278 = vmatprep.subr.bf16.mxu0 0
        %6279 = vmatpush1.bf16.msra.mxu0 0
        %6280 = vmatprep.subr.bf16.mxu0 0
        %6281 = vmatpush1.bf16.msra.mxu0 0
        %6282 = vmatprep.subr.bf16.mxu0 0
        %6283 = vmatpush1.bf16.msra.mxu0 0
        %6284 = vmatprep.subr.bf16.mxu0 0
        %6285 = vmatpush1.bf16.msra.mxu0 0
        %6286 = vmatprep.subr.bf16.mxu0 0
        %6287 = vmatpush1.bf16.msra.mxu0 0
        %6288 = vmatprep.subr.bf16.mxu0 0
        %6289 = vmatpush1.bf16.msra.mxu0 0
        %6290 = vmatprep.subr.bf16.mxu0 0
        %6291 = vmatpush1.bf16.msra.mxu0 0
        %6292 = vmatprep.subr.bf16.mxu0 0
        %6293 = vmatpush1.bf16.msra.mxu0 0
        %6294 = vmatprep.subr.bf16.mxu0 0
        %6295 = vmatpush1.bf16.msra.mxu0 0
        %6296 = vmatprep.subr.bf16.mxu0 0
        %6297 = vmatpush1.bf16.msra.mxu0 0
        %6298 = vmatprep.subr.bf16.mxu0 0
        %6299 = vmatpush1.bf16.msra.mxu0 0
        %6300 = vmatprep.subr.bf16.mxu0 0
        %6301 = vmatpush1.bf16.msra.mxu0 0
        %6302 = vmatprep.subr.bf16.mxu0 0
        %6303 = vmatpush1.bf16.msra.mxu0 0
        %6304 = vmatprep.subr.bf16.mxu0 0
        %6305 = vmatpush1.bf16.msra.mxu0 0
        %6306 = vmatprep.subr.bf16.mxu0 0
        %6307 = vmatpush1.bf16.msra.mxu0 0
        %6308 = vmatprep.mubr.bf16.mxu0 0
        %6309 = vmatmul.mubr.bf16.gmra.mrb[0].mxu0 %v6270
        %v6310 = vpop.f32.mrb[0].mxu0
        %v6311 = vadd.f32 0.0, %v6310
        %v6312 = vpop.f32.mrb[0].mxu0
        %v6313 = vpop.f32.mrb[0].mxu0
        %v6314 = vadd.f32 0.0, %v6313
        %v6315 = vpop.f32.mrb[0].mxu0
        %6316 = vdwg.mxu0
        %v6317 = vpack.c.bf16 %v6314, %v6311
        %v6318 = vld [vmem:[#allocation12] sm:$0xf]
        %v6319 = vld [vmem:[#allocation12 + $0x4] sm:$0xf]
        %v6320 = vld [vmem:[#allocation12 + $0x8] sm:$0xf]
        %v6321 = vld [vmem:[#allocation12 + $0xc] sm:$0xf]
        %v6322 = vld [vmem:[#allocation12 + $0x10] sm:$0xf]
        %v6323 = vld [vmem:[#allocation12 + $0x14] sm:$0xf]
        %v6324 = vld [vmem:[#allocation12 + $0x18] sm:$0xf]
        %v6325 = vld [vmem:[#allocation12 + $0x1c] sm:$0xf]
        %v6326 = vld [vmem:[#allocation12 + $0x20] sm:$0xf]
        %v6327 = vld [vmem:[#allocation12 + $0x24] sm:$0xf]
        %v6328 = vld [vmem:[#allocation12 + $0x28] sm:$0xf]
        %v6329 = vld [vmem:[#allocation12 + $0x2c] sm:$0xf]
        %v6330 = vld [vmem:[#allocation12 + $0x30] sm:$0xf]
        %v6331 = vld [vmem:[#allocation12 + $0x34] sm:$0xf]
        %v6332 = vld [vmem:[#allocation12 + $0x38] sm:$0xf]
        %v6333 = vld [vmem:[#allocation12 + $0x3c] sm:$0xf]
        %s6334 = scalar_lea.vmem [#allocation12], 64
        %v6335 = vld [vmem:[%s6334] sm:$0xf]
        %v6336 = vld [vmem:[%s6334 + $0x4] sm:$0xf]
        %v6337 = vld [vmem:[%s6334 + $0x8] sm:$0xf]
        %v6338 = vld [vmem:[%s6334 + $0xc] sm:$0xf]
        %v6339 = vld [vmem:[%s6334 + $0x10] sm:$0xf]
        %v6340 = vld [vmem:[%s6334 + $0x14] sm:$0xf]
        %v6341 = vld [vmem:[%s6334 + $0x18] sm:$0xf]
        %v6342 = vld [vmem:[%s6334 + $0x1c] sm:$0xf]
        %v6343 = vld [vmem:[%s6334 + $0x20] sm:$0xf]
        %v6344 = vld [vmem:[%s6334 + $0x24] sm:$0xf]
        %v6345 = vld [vmem:[%s6334 + $0x28] sm:$0xf]
        %v6346 = vld [vmem:[%s6334 + $0x2c] sm:$0xf]
        %v6347 = vld [vmem:[%s6334 + $0x30] sm:$0xf]
        %v6348 = vld [vmem:[%s6334 + $0x34] sm:$0xf]
        %v6349 = vld [vmem:[%s6334 + $0x38] sm:$0xf]
        %v6350 = vld [vmem:[%s6334 + $0x3c] sm:$0xf]
        %v6352 = vrot.slane %v6317, 1
        %v6370 = vunpack.c.l.b16 %v6335
        %v6371 = vunpack.c.l.b16 %v6336
        %v6372 = vunpack.c.l.b16 %v6337
        %v6373 = vunpack.c.l.b16 %v6338
        %v6374 = vunpack.c.l.b16 %v6339
        %v6375 = vunpack.c.l.b16 %v6340
        %v6376 = vunpack.c.l.b16 %v6341
        %v6377 = vunpack.c.l.b16 %v6342
        %v6378 = vunpack.c.l.b16 %v6343
        %v6379 = vunpack.c.l.b16 %v6344
        %v6380 = vunpack.c.l.b16 %v6345
        %v6381 = vunpack.c.l.b16 %v6346
        %v6382 = vunpack.c.l.b16 %v6347
        %v6383 = vunpack.c.l.b16 %v6348
        %v6384 = vunpack.c.l.b16 %v6349
        %v6385 = vunpack.c.l.b16 %v6350
        %v6386 = vpack.c.b16 %v6371, %v6370
        %v6387 = vpack.c.b16 %v6373, %v6372
        %v6388 = vpack.c.b16 %v6375, %v6374
        %v6389 = vpack.c.b16 %v6377, %v6376
        %v6390 = vpack.c.b16 %v6379, %v6378
        %v6391 = vpack.c.b16 %v6381, %v6380
        %v6392 = vpack.c.b16 %v6383, %v6382
        %v6393 = vpack.c.b16 %v6385, %v6384
        %6402 = vmatprep.subr.bf16.mxu0 0
        %6403 = vmatpush1.bf16.msra.mxu0 %v6386
        %6404 = vmatprep.subr.bf16.mxu0 0
        %6405 = vmatpush1.bf16.msra.mxu0 %v6387
        %6406 = vmatprep.subr.bf16.mxu0 0
        %6407 = vmatpush1.bf16.msra.mxu0 %v6388
        %6408 = vmatprep.subr.bf16.mxu0 0
        %6409 = vmatpush1.bf16.msra.mxu0 %v6389
        %6410 = vmatprep.subr.bf16.mxu0 0
        %6411 = vmatpush1.bf16.msra.mxu0 %v6390
        %6412 = vmatprep.subr.bf16.mxu0 0
        %6413 = vmatpush1.bf16.msra.mxu0 %v6391
        %6414 = vmatprep.subr.bf16.mxu0 0
        %6415 = vmatpush1.bf16.msra.mxu0 %v6392
        %6416 = vmatprep.subr.bf16.mxu0 0
        %6417 = vmatpush1.bf16.msra.mxu0 %v6393
        %6418 = vmatprep.subr.bf16.mxu0 0
        %6419 = vmatpush1.bf16.msra.mxu0 0
        %6420 = vmatprep.subr.bf16.mxu0 0
        %6421 = vmatpush1.bf16.msra.mxu0 0
        %6422 = vmatprep.subr.bf16.mxu0 0
        %6423 = vmatpush1.bf16.msra.mxu0 0
        %6424 = vmatprep.subr.bf16.mxu0 0
        %6425 = vmatpush1.bf16.msra.mxu0 0
        %6426 = vmatprep.subr.bf16.mxu0 0
        %6427 = vmatpush1.bf16.msra.mxu0 0
        %6428 = vmatprep.subr.bf16.mxu0 0
        %6429 = vmatpush1.bf16.msra.mxu0 0
        %6430 = vmatprep.subr.bf16.mxu0 0
        %6431 = vmatpush1.bf16.msra.mxu0 0
        %6432 = vmatprep.subr.bf16.mxu0 0
        %6433 = vmatpush1.bf16.msra.mxu0 0
        %6434 = vmatprep.mubr.bf16.mxu0 0
        %6435 = vmatmul.mubr.bf16.gmra.mrb[0].mxu0 %v6352
        %v6436 = vpop.f32.mrb[0].mxu0
        %v6437 = vadd.f32 0.0, %v6436
        %v6438 = vpop.f32.mrb[0].mxu0
        %v6439 = vpop.f32.mrb[0].mxu0
        %v6440 = vpop.f32.mrb[0].mxu0
        %6441 = vdwg.mxu0
        %v6458 = vunpack.c.l.b16 %v6318
        %v6459 = vunpack.c.l.b16 %v6319
        %v6460 = vunpack.c.l.b16 %v6320
        %v6461 = vunpack.c.l.b16 %v6321
        %v6462 = vunpack.c.l.b16 %v6322
        %v6463 = vunpack.c.l.b16 %v6323
        %v6464 = vunpack.c.l.b16 %v6324
        %v6465 = vunpack.c.l.b16 %v6325
        %v6466 = vunpack.c.l.b16 %v6326
        %v6467 = vunpack.c.l.b16 %v6327
        %v6468 = vunpack.c.l.b16 %v6328
        %v6469 = vunpack.c.l.b16 %v6329
        %v6470 = vunpack.c.l.b16 %v6330
        %v6471 = vunpack.c.l.b16 %v6331
        %v6472 = vunpack.c.l.b16 %v6332
        %v6473 = vunpack.c.l.b16 %v6333
        %v6474 = vpack.c.b16 %v6459, %v6458
        %v6475 = vpack.c.b16 %v6461, %v6460
        %v6476 = vpack.c.b16 %v6463, %v6462
        %v6477 = vpack.c.b16 %v6465, %v6464
        %v6478 = vpack.c.b16 %v6467, %v6466
        %v6479 = vpack.c.b16 %v6469, %v6468
        %v6480 = vpack.c.b16 %v6471, %v6470
        %v6481 = vpack.c.b16 %v6473, %v6472
        %6490 = vmatprep.subr.bf16.mxu0 0
        %6491 = vmatpush1.bf16.msra.mxu0 %v6474
        %6492 = vmatprep.subr.bf16.mxu0 0
        %6493 = vmatpush1.bf16.msra.mxu0 %v6475
        %6494 = vmatprep.subr.bf16.mxu0 0
        %6495 = vmatpush1.bf16.msra.mxu0 %v6476
        %6496 = vmatprep.subr.bf16.mxu0 0
        %6497 = vmatpush1.bf16.msra.mxu0 %v6477
        %6498 = vmatprep.subr.bf16.mxu0 0
        %6499 = vmatpush1.bf16.msra.mxu0 %v6478
        %6500 = vmatprep.subr.bf16.mxu0 0
        %6501 = vmatpush1.bf16.msra.mxu0 %v6479
        %6502 = vmatprep.subr.bf16.mxu0 0
        %6503 = vmatpush1.bf16.msra.mxu0 %v6480
        %6504 = vmatprep.subr.bf16.mxu0 0
        %6505 = vmatpush1.bf16.msra.mxu0 %v6481
        %6506 = vmatprep.subr.bf16.mxu0 0
        %6507 = vmatpush1.bf16.msra.mxu0 0
        %6508 = vmatprep.subr.bf16.mxu0 0
        %6509 = vmatpush1.bf16.msra.mxu0 0
        %6510 = vmatprep.subr.bf16.mxu0 0
        %6511 = vmatpush1.bf16.msra.mxu0 0
        %6512 = vmatprep.subr.bf16.mxu0 0
        %6513 = vmatpush1.bf16.msra.mxu0 0
        %6514 = vmatprep.subr.bf16.mxu0 0
        %6515 = vmatpush1.bf16.msra.mxu0 0
        %6516 = vmatprep.subr.bf16.mxu0 0
        %6517 = vmatpush1.bf16.msra.mxu0 0
        %6518 = vmatprep.subr.bf16.mxu0 0
        %6519 = vmatpush1.bf16.msra.mxu0 0
        %6520 = vmatprep.subr.bf16.mxu0 0
        %6521 = vmatpush1.bf16.msra.mxu0 0
        %6522 = vmatprep.mubr.bf16.mxu0 0
        %6523 = vmatmul.mubr.bf16.gmra.mrb[0].mxu0 %v6317
        %v6524 = vpop.f32.mrb[0].mxu0
        %v6525 = vadd.f32 %v6437, %v6524
        %v6526 = vpop.f32.mrb[0].mxu0
        %v6527 = vpop.f32.mrb[0].mxu0
        %v6528 = vpop.f32.mrb[0].mxu0
        %6529 = vdwg.mxu0
        %s6530 = scalar_lea.vmem [#allocation12], 128
        %v6531 = vld [vmem:[%s6530] sm:$0xf]
        %v6532 = vld [vmem:[%s6530 + $0x4] sm:$0xf]
        %v6533 = vld [vmem:[%s6530 + $0x8] sm:$0xf]
        %v6534 = vld [vmem:[%s6530 + $0xc] sm:$0xf]
        %v6535 = vld [vmem:[%s6530 + $0x10] sm:$0xf]
        %v6536 = vld [vmem:[%s6530 + $0x14] sm:$0xf]
        %v6537 = vld [vmem:[%s6530 + $0x18] sm:$0xf]
        %v6538 = vld [vmem:[%s6530 + $0x1c] sm:$0xf]
        %v6539 = vld [vmem:[%s6530 + $0x20] sm:$0xf]
        %v6540 = vld [vmem:[%s6530 + $0x24] sm:$0xf]
        %v6541 = vld [vmem:[%s6530 + $0x28] sm:$0xf]
        %v6542 = vld [vmem:[%s6530 + $0x2c] sm:$0xf]
        %v6543 = vld [vmem:[%s6530 + $0x30] sm:$0xf]
        %v6544 = vld [vmem:[%s6530 + $0x34] sm:$0xf]
        %v6545 = vld [vmem:[%s6530 + $0x38] sm:$0xf]
        %v6546 = vld [vmem:[%s6530 + $0x3c] sm:$0xf]
        %v6547 = vrot.slane %v6317, 2
        %v6565 = vunpack.c.l.b16 %v6531
        %v6566 = vunpack.c.l.b16 %v6532
        %v6567 = vunpack.c.l.b16 %v6533
        %v6568 = vunpack.c.l.b16 %v6534
        %v6569 = vunpack.c.l.b16 %v6535
        %v6570 = vunpack.c.l.b16 %v6536
        %v6571 = vunpack.c.l.b16 %v6537
        %v6572 = vunpack.c.l.b16 %v6538
        %v6573 = vunpack.c.l.b16 %v6539
        %v6574 = vunpack.c.l.b16 %v6540
        %v6575 = vunpack.c.l.b16 %v6541
        %v6576 = vunpack.c.l.b16 %v6542
        %v6577 = vunpack.c.l.b16 %v6543
        %v6578 = vunpack.c.l.b16 %v6544
        %v6579 = vunpack.c.l.b16 %v6545
        %v6580 = vunpack.c.l.b16 %v6546
        %v6581 = vpack.c.b16 %v6566, %v6565
        %v6582 = vpack.c.b16 %v6568, %v6567
        %v6583 = vpack.c.b16 %v6570, %v6569
        %v6584 = vpack.c.b16 %v6572, %v6571
        %v6585 = vpack.c.b16 %v6574, %v6573
        %v6586 = vpack.c.b16 %v6576, %v6575
        %v6587 = vpack.c.b16 %v6578, %v6577
        %v6588 = vpack.c.b16 %v6580, %v6579
        %6597 = vmatprep.subr.bf16.mxu0 0
        %6598 = vmatpush1.bf16.msra.mxu0 %v6581
        %6599 = vmatprep.subr.bf16.mxu0 0
        %6600 = vmatpush1.bf16.msra.mxu0 %v6582
        %6601 = vmatprep.subr.bf16.mxu0 0
        %6602 = vmatpush1.bf16.msra.mxu0 %v6583
        %6603 = vmatprep.subr.bf16.mxu0 0
        %6604 = vmatpush1.bf16.msra.mxu0 %v6584
        %6605 = vmatprep.subr.bf16.mxu0 0
        %6606 = vmatpush1.bf16.msra.mxu0 %v6585
        %6607 = vmatprep.subr.bf16.mxu0 0
        %6608 = vmatpush1.bf16.msra.mxu0 %v6586
        %6609 = vmatprep.subr.bf16.mxu0 0
        %6610 = vmatpush1.bf16.msra.mxu0 %v6587
        %6611 = vmatprep.subr.bf16.mxu0 0
        %6612 = vmatpush1.bf16.msra.mxu0 %v6588
        %6613 = vmatprep.subr.bf16.mxu0 0
        %6614 = vmatpush1.bf16.msra.mxu0 0
        %6615 = vmatprep.subr.bf16.mxu0 0
        %6616 = vmatpush1.bf16.msra.mxu0 0
        %6617 = vmatprep.subr.bf16.mxu0 0
        %6618 = vmatpush1.bf16.msra.mxu0 0
        %6619 = vmatprep.subr.bf16.mxu0 0
        %6620 = vmatpush1.bf16.msra.mxu0 0
        %6621 = vmatprep.subr.bf16.mxu0 0
        %6622 = vmatpush1.bf16.msra.mxu0 0
        %6623 = vmatprep.subr.bf16.mxu0 0
        %6624 = vmatpush1.bf16.msra.mxu0 0
        %6625 = vmatprep.subr.bf16.mxu0 0
        %6626 = vmatpush1.bf16.msra.mxu0 0
        %6627 = vmatprep.subr.bf16.mxu0 0
        %6628 = vmatpush1.bf16.msra.mxu0 0
        %6629 = vmatprep.mubr.bf16.mxu0 0
        %6630 = vmatmul.mubr.bf16.gmra.mrb[0].mxu0 %v6547
        %v6631 = vpop.f32.mrb[0].mxu0
        %v6632 = vadd.f32 0.0, %v6631
        %v6633 = vpop.f32.mrb[0].mxu0
        %v6634 = vpop.f32.mrb[0].mxu0
        %v6635 = vpop.f32.mrb[0].mxu0
        %6636 = vdwg.mxu0
        %v6637 = vadd.f32 %v6525, %v6632
        %s6638 = scalar_lea.vmem [#allocation12], 192
        %v6639 = vld [vmem:[%s6638] sm:$0xf]
        %v6640 = vld [vmem:[%s6638 + $0x4] sm:$0xf]
        %v6641 = vld [vmem:[%s6638 + $0x8] sm:$0xf]
        %v6642 = vld [vmem:[%s6638 + $0xc] sm:$0xf]
        %v6643 = vld [vmem:[%s6638 + $0x10] sm:$0xf]
        %v6644 = vld [vmem:[%s6638 + $0x14] sm:$0xf]
        %v6645 = vld [vmem:[%s6638 + $0x18] sm:$0xf]
        %v6646 = vld [vmem:[%s6638 + $0x1c] sm:$0xf]
        %v6647 = vld [vmem:[%s6638 + $0x20] sm:$0xf]
        %v6648 = vld [vmem:[%s6638 + $0x24] sm:$0xf]
        %v6649 = vld [vmem:[%s6638 + $0x28] sm:$0xf]
        %v6650 = vld [vmem:[%s6638 + $0x2c] sm:$0xf]
        %v6651 = vld [vmem:[%s6638 + $0x30] sm:$0xf]
        %v6652 = vld [vmem:[%s6638 + $0x34] sm:$0xf]
        %v6653 = vld [vmem:[%s6638 + $0x38] sm:$0xf]
        %v6654 = vld [vmem:[%s6638 + $0x3c] sm:$0xf]
        %v6655 = vrot.slane %v6317, 3
        %v6673 = vunpack.c.l.b16 %v6639
        %v6674 = vunpack.c.l.b16 %v6640
        %v6675 = vunpack.c.l.b16 %v6641
        %v6676 = vunpack.c.l.b16 %v6642
        %v6677 = vunpack.c.l.b16 %v6643
        %v6678 = vunpack.c.l.b16 %v6644
        %v6679 = vunpack.c.l.b16 %v6645
        %v6680 = vunpack.c.l.b16 %v6646
        %v6681 = vunpack.c.l.b16 %v6647
        %v6682 = vunpack.c.l.b16 %v6648
        %v6683 = vunpack.c.l.b16 %v6649
        %v6684 = vunpack.c.l.b16 %v6650
        %v6685 = vunpack.c.l.b16 %v6651
        %v6686 = vunpack.c.l.b16 %v6652
        %v6687 = vunpack.c.l.b16 %v6653
        %v6688 = vunpack.c.l.b16 %v6654
        %v6689 = vpack.c.b16 %v6674, %v6673
        %v6690 = vpack.c.b16 %v6676, %v6675
        %v6691 = vpack.c.b16 %v6678, %v6677
        %v6692 = vpack.c.b16 %v6680, %v6679
        %v6693 = vpack.c.b16 %v6682, %v6681
        %v6694 = vpack.c.b16 %v6684, %v6683
        %v6695 = vpack.c.b16 %v6686, %v6685
        %v6696 = vpack.c.b16 %v6688, %v6687
        %6705 = vmatprep.subr.bf16.mxu0 0
        %6706 = vmatpush1.bf16.msra.mxu0 %v6689
        %6707 = vmatprep.subr.bf16.mxu0 0
        %6708 = vmatpush1.bf16.msra.mxu0 %v6690
        %6709 = vmatprep.subr.bf16.mxu0 0
        %6710 = vmatpush1.bf16.msra.mxu0 %v6691
        %6711 = vmatprep.subr.bf16.mxu0 0
        %6712 = vmatpush1.bf16.msra.mxu0 %v6692
        %6713 = vmatprep.subr.bf16.mxu0 0
        %6714 = vmatpush1.bf16.msra.mxu0 %v6693
        %6715 = vmatprep.subr.bf16.mxu0 0
        %6716 = vmatpush1.bf16.msra.mxu0 %v6694
        %6717 = vmatprep.subr.bf16.mxu0 0
        %6718 = vmatpush1.bf16.msra.mxu0 %v6695
        %6719 = vmatprep.subr.bf16.mxu0 0
        %6720 = vmatpush1.bf16.msra.mxu0 %v6696
        %6721 = vmatprep.subr.bf16.mxu0 0
        %6722 = vmatpush1.bf16.msra.mxu0 0
        %6723 = vmatprep.subr.bf16.mxu0 0
        %6724 = vmatpush1.bf16.msra.mxu0 0
        %6725 = vmatprep.subr.bf16.mxu0 0
        %6726 = vmatpush1.bf16.msra.mxu0 0
        %6727 = vmatprep.subr.bf16.mxu0 0
        %6728 = vmatpush1.bf16.msra.mxu0 0
        %6729 = vmatprep.subr.bf16.mxu0 0
        %6730 = vmatpush1.bf16.msra.mxu0 0
        %6731 = vmatprep.subr.bf16.mxu0 0
        %6732 = vmatpush1.bf16.msra.mxu0 0
        %6733 = vmatprep.subr.bf16.mxu0 0
        %6734 = vmatpush1.bf16.msra.mxu0 0
        %6735 = vmatprep.subr.bf16.mxu0 0
        %6736 = vmatpush1.bf16.msra.mxu0 0
        %6737 = vmatprep.mubr.bf16.mxu0 0
        %6738 = vmatmul.mubr.bf16.gmra.mrb[0].mxu0 %v6655
        %v6739 = vpop.f32.mrb[0].mxu0
        %v6740 = vadd.f32 0.0, %v6739
        %v6741 = vpop.f32.mrb[0].mxu0
        %v6742 = vpop.f32.mrb[0].mxu0
        %v6743 = vpop.f32.mrb[0].mxu0
        %6744 = vdwg.mxu0
        %v6745 = vadd.f32 %v6637, %v6740
        %s6746 = scalar_lea.vmem [#allocation12], 256
        %v6747 = vld [vmem:[%s6746] sm:$0xf]
        %v6748 = vld [vmem:[%s6746 + $0x4] sm:$0xf]
        %v6749 = vld [vmem:[%s6746 + $0x8] sm:$0xf]
        %v6750 = vld [vmem:[%s6746 + $0xc] sm:$0xf]
        %v6751 = vld [vmem:[%s6746 + $0x10] sm:$0xf]
        %v6752 = vld [vmem:[%s6746 + $0x14] sm:$0xf]
        %v6753 = vld [vmem:[%s6746 + $0x18] sm:$0xf]
        %v6754 = vld [vmem:[%s6746 + $0x1c] sm:$0xf]
        %v6755 = vld [vmem:[%s6746 + $0x20] sm:$0xf]
        %v6756 = vld [vmem:[%s6746 + $0x24] sm:$0xf]
        %v6757 = vld [vmem:[%s6746 + $0x28] sm:$0xf]
        %v6758 = vld [vmem:[%s6746 + $0x2c] sm:$0xf]
        %v6759 = vld [vmem:[%s6746 + $0x30] sm:$0xf]
        %v6760 = vld [vmem:[%s6746 + $0x34] sm:$0xf]
        %v6761 = vld [vmem:[%s6746 + $0x38] sm:$0xf]
        %v6762 = vld [vmem:[%s6746 + $0x3c] sm:$0xf]
        %v6763 = vrot.slane %v6317, 4
        %v6781 = vunpack.c.l.b16 %v6747
        %v6782 = vunpack.c.l.b16 %v6748
        %v6783 = vunpack.c.l.b16 %v6749
        %v6784 = vunpack.c.l.b16 %v6750
        %v6785 = vunpack.c.l.b16 %v6751
        %v6786 = vunpack.c.l.b16 %v6752
        %v6787 = vunpack.c.l.b16 %v6753
        %v6788 = vunpack.c.l.b16 %v6754
        %v6789 = vunpack.c.l.b16 %v6755
        %v6790 = vunpack.c.l.b16 %v6756
        %v6791 = vunpack.c.l.b16 %v6757
        %v6792 = vunpack.c.l.b16 %v6758
        %v6793 = vunpack.c.l.b16 %v6759
        %v6794 = vunpack.c.l.b16 %v6760
        %v6795 = vunpack.c.l.b16 %v6761
        %v6796 = vunpack.c.l.b16 %v6762
        %v6797 = vpack.c.b16 %v6782, %v6781
        %v6798 = vpack.c.b16 %v6784, %v6783
        %v6799 = vpack.c.b16 %v6786, %v6785
        %v6800 = vpack.c.b16 %v6788, %v6787
        %v6801 = vpack.c.b16 %v6790, %v6789
        %v6802 = vpack.c.b16 %v6792, %v6791
        %v6803 = vpack.c.b16 %v6794, %v6793
        %v6804 = vpack.c.b16 %v6796, %v6795
        %6813 = vmatprep.subr.bf16.mxu0 0
        %6814 = vmatpush1.bf16.msra.mxu0 %v6797
        %6815 = vmatprep.subr.bf16.mxu0 0
        %6816 = vmatpush1.bf16.msra.mxu0 %v6798
        %6817 = vmatprep.subr.bf16.mxu0 0
        %6818 = vmatpush1.bf16.msra.mxu0 %v6799
        %6819 = vmatprep.subr.bf16.mxu0 0
        %6820 = vmatpush1.bf16.msra.mxu0 %v6800
        %6821 = vmatprep.subr.bf16.mxu0 0
        %6822 = vmatpush1.bf16.msra.mxu0 %v6801
        %6823 = vmatprep.subr.bf16.mxu0 0
        %6824 = vmatpush1.bf16.msra.mxu0 %v6802
        %6825 = vmatprep.subr.bf16.mxu0 0
        %6826 = vmatpush1.bf16.msra.mxu0 %v6803
        %6827 = vmatprep.subr.bf16.mxu0 0
        %6828 = vmatpush1.bf16.msra.mxu0 %v6804
        %6829 = vmatprep.subr.bf16.mxu0 0
        %6830 = vmatpush1.bf16.msra.mxu0 0
        %6831 = vmatprep.subr.bf16.mxu0 0
        %6832 = vmatpush1.bf16.msra.mxu0 0
        %6833 = vmatprep.subr.bf16.mxu0 0
        %6834 = vmatpush1.bf16.msra.mxu0 0
        %6835 = vmatprep.subr.bf16.mxu0 0
        %6836 = vmatpush1.bf16.msra.mxu0 0
        %6837 = vmatprep.subr.bf16.mxu0 0
        %6838 = vmatpush1.bf16.msra.mxu0 0
        %6839 = vmatprep.subr.bf16.mxu0 0
        %6840 = vmatpush1.bf16.msra.mxu0 0
        %6841 = vmatprep.subr.bf16.mxu0 0
        %6842 = vmatpush1.bf16.msra.mxu0 0
        %6843 = vmatprep.subr.bf16.mxu0 0
        %6844 = vmatpush1.bf16.msra.mxu0 0
        %6845 = vmatprep.mubr.bf16.mxu0 0
        %6846 = vmatmul.mubr.bf16.gmra.mrb[0].mxu0 %v6763
        %v6847 = vpop.f32.mrb[0].mxu0
        %v6848 = vadd.f32 0.0, %v6847
        %v6849 = vpop.f32.mrb[0].mxu0
        %v6850 = vpop.f32.mrb[0].mxu0
        %v6851 = vpop.f32.mrb[0].mxu0
        %6852 = vdwg.mxu0
        %v6853 = vadd.f32 %v6745, %v6848
        %v6854 = vld [vmem:[#allocation13] sm:$0x1]
        %v6856 = vlaneseq
        %v6857 = vshrl.u32 %v6856, 7
        %v6858 = vsub.s32 0, %v6857
        %v6859 = vrot.slane %v6854, %v6858
        %v6861 = vadd.f32 %v6853, %v6859
        %6862 = vst [vmem:[%s547] sm:$0x3] %v6861
        %p6863 = scmp.lt.s32.totalorder %s29, 1
        %s6864 = scalar_select %p6863, %s29, 1
        %s6865 = smul.addr %s6864, 2
        %s6866 = scalar_lea.vmem %s13, %s6865
        // Predicated region
        $region105: #{policynet_forward.1} parent=71 // pred_check
          %p6867 = pneg %p325
        $region106: #{policynet_forward.1} parent=71 // pred_check_branch
          %6869 = sbr.rel (%p6867) target = $region108
        $region107: #{policynet_forward.1} parent=71 // pred_region
          _
        $region108: #{policynet_forward.1} parent=71 // pred_fallthru
          _
      $region72: #{policynet_forward.1} parent=5 // pred_fallthru
        _
      %p6870 = scmp.le.s32.totalorder 2, %s24
      // Predicated region
      $region109: #{policynet_forward.1} parent=5 // pred_check
        %p6871 = pneg %p6870
      $region110: #{policynet_forward.1} parent=5 // pred_check_branch
        %6873 = sbr.rel (%p6871) target = $region112
      $region111: #{policynet_forward.1} parent=5 // pred_region
        %s6874 = ssub.s32 %s24, 2
        // Predicated region
        $region113: #{policynet_forward.1} parent=111 // pred_check
          %p6875 = pneg %p331
        $region114: #{policynet_forward.1} parent=111 // pred_check_branch
          %6877 = sbr.rel (%p6875) target = $region116
        $region115: #{policynet_forward.1} parent=111 // pred_region
          %p6878 = scmp.lt.s32.totalorder %s30, 1
          %s6879 = scalar_select %p6878, %s30, 1
          %s6880 = smul.addr %s6879, 2
          %s6881 = scalar_lea.vmem %s13, %s6880
        $region116: #{policynet_forward.1} parent=111 // pred_fallthru
          _
      $region112: #{policynet_forward.1} parent=5 // pred_fallthru
        _
    $region6: #{policynet_forward.1} parent=1 // loop_footer
      %s28 = sadd.s32 1, %s24
    $region7: #{policynet_forward.1} parent=1 // loop_footer_branch
      %23 = sbr.rel target = $region3
    $region8: #{policynet_forward.1} parent=1 // loop_exit
      _
    %6882 = vsyncpa [#allocation3], 1
    %s6883 = scalar_lea.sflag [#allocation3], 1
    %6884 = vsyncpa %s6883, 1
    %6885 = vsyncpa [#allocation5], 1
    %6886 = vsyncpa [#allocation8], 1
    %6887 = vsyncpa [#allocation11], 1
    %6888 = vsyncpa [#allocation14], 1

</llo_original>
